<compile_context>
chip_gen: v6e
topology: v6e:2x2x1
jax: 0.10.0
libtpu: 0.0.40
codegen_flags: <defaults>
</compile_context>

<pallas_src>
import math

import jax
import jax.numpy as jnp
from jax.experimental import pallas as pl
from jax.experimental.pallas import tpu as pltpu

# ----------------------------- model config (small) -----------------------------
BATCH      = 2
SEQ        = 8
HIDDEN     = 32
NUM_HEADS  = 4
HEAD_DIM   = HIDDEN // NUM_HEADS
INTER      = 4 * HIDDEN          # 128
NUM_LAYERS = 2
VOCAB      = 64
NUM_LABELS = 3
LN_EPS     = 1e-12
LANE_PAD   = 128                 # lane-dense padding for packed vectors / classifier output

# vecs row layout: per layer (8 rows): bqkv, bo, ln1g, ln1b, b1, b2, ln2g, ln2b
# global rows (3): emb_ln_g, emb_ln_b, cls_b
_ROWS_PER_LAYER = 8
_GBASE = NUM_LAYERS * _ROWS_PER_LAYER


# ----------------------------- shared math helpers -------------------------------
def _layernorm(x, g, b):
    mu = jnp.mean(x, axis=-1, keepdims=True)
    var = jnp.mean((x - mu) ** 2, axis=-1, keepdims=True)
    return (x - mu) * jax.lax.rsqrt(var + LN_EPS) * g + b


def _gelu(x):
    # tanh approximation of GELU
    return 0.5 * x * (1.0 + jnp.tanh(0.7978845608028654 * (x + 0.044715 * x * x * x)))


# ----------------------------- fused forward kernel ------------------------------
def fused_bert_kernel(ids_ref, nb_ref, wemb_ref, pt_ref,
                      wqkv_ref, wo_ref, w1_ref, w2_ref,
                      clsw_ref, vecs_ref, out_ref):
    bs = ids_ref.shape[0]                       # B*S
    b, _, s = nb_ref.shape                      # (B, 1, S)
    vocab, hidden = wemb_ref.shape
    n_layers = wqkv_ref.shape[0]
    inter = w1_ref.shape[2]
    n_heads = NUM_HEADS
    dh = hidden // n_heads

    def vrow(r, w):                             # static (1, w) slice of the packed vectors
        return vecs_ref[r:r + 1, :w]

    # ---- embeddings: one-hot word lookup (MXU) + pos/type + LayerNorm ----------
    ids = ids_ref[...]                                          # (BS, 1) int32
    onehot = (jax.lax.broadcasted_iota(jnp.int32, (bs, vocab), 1) == ids
              ).astype(jnp.float32)                             # (BS, VOCAB)
    xf = jnp.dot(onehot, wemb_ref[...], preferred_element_type=jnp.float32)
    xf = xf + pt_ref[...]                                       # pre-summed pos + type0
    xf = _layernorm(xf, vrow(_GBASE + 0, hidden), vrow(_GBASE + 1, hidden))

    nb = nb_ref[...]                                            # additive mask bias, hoisted

    for li in range(n_layers):                                  # static unroll over layers
        base = li * _ROWS_PER_LAYER

        # -------- fused QKV projection (scale folded into Wq/bq) ----------------
        qkv = (jnp.dot(xf, wqkv_ref[li], preferred_element_type=jnp.float32)
               + vrow(base + 0, 3 * hidden))                    # (BS, 3H)

        # -------- per-head attention on static lane slices -----------------------
        ctxs = []
        for h in range(n_heads):                                # static unroll over heads
            qh = qkv[:, h * dh:(h + 1) * dh].reshape(b, s, dh)
            kh = qkv[:, hidden + h * dh: hidden + (h + 1) * dh].reshape(b, s, dh)
            vh = qkv[:, 2 * hidden + h * dh: 2 * hidden + (h + 1) * dh].reshape(b, s, dh)
            sc = jnp.einsum('bqd,bkd->bqk', qh, kh,
                            preferred_element_type=jnp.float32) + nb
            sc = sc - jnp.max(sc, axis=-1, keepdims=True)       # keeps fully-masked rows finite
            p = jnp.exp(sc)
            p = p / jnp.sum(p, axis=-1, keepdims=True)
            ctxs.append(jnp.einsum('bqk,bkd->bqd', p, vh,
                                   preferred_element_type=jnp.float32))

        # single lane-concat + ONE output-projection matmul per layer
        ctx = jnp.concatenate(ctxs, axis=-1).reshape(bs, hidden)
        attn = (jnp.dot(ctx, wo_ref[li], preferred_element_type=jnp.float32)
                + vrow(base + 1, hidden))
        h1 = _layernorm(xf + attn, vrow(base + 2, hidden), vrow(base + 3, hidden))

        # -------- feed-forward ----------------------------------------------------
        ff = jnp.dot(h1, w1_ref[li], preferred_element_type=jnp.float32) + vrow(base + 4, inter)
        ff = _gelu(ff)
        ff = jnp.dot(ff, w2_ref[li], preferred_element_type=jnp.float32) + vrow(base + 5, hidden)
        xf = _layernorm(h1 + ff, vrow(base + 6, hidden), vrow(base + 7, hidden))

    # ---- classifier head on the B CLS rows only, lane-dense (B, 128) store -----
    cls = jnp.concatenate([xf[bb * s: bb * s + 1, :] for bb in range(b)], axis=0)  # (B, H)
    out_ref[...] = (jnp.dot(cls, clsw_ref[...], preferred_element_type=jnp.float32)
                    + vrow(_GBASE + 2, out_ref.shape[1])).astype(out_ref.dtype)


# ----------------------------- parameter construction ----------------------------
def init_params(key):
    std = 0.02

    def nrm(k, shape):
        return jax.random.normal(k, shape, jnp.float32) * std

    def pad_row(v):
        row = jnp.zeros((LANE_PAD,), jnp.float32)
        return row.at[: v.shape[0]].set(v)

    keys = jax.random.split(key, 4 + NUM_LAYERS)
    p = {}
    p["word_emb"] = nrm(keys[0], (VOCAB, HIDDEN))
    pos_emb = nrm(keys[1], (SEQ, HIDDEN))
    type_emb = nrm(keys[2], (2, HIDDEN))
    # pos + type(0) pre-summed and pre-tiled over the (static) batch
    p["pt"] = jnp.tile(pos_emb + type_emb[0][None, :], (BATCH, 1))       # (B*S, H)

    scale = 1.0 / math.sqrt(HEAD_DIM)
    wqkv, wo, w1, w2, vec_rows = [], [], [], [], []
    for li in range(NUM_LAYERS):
        lk = jax.random.split(keys[3 + li], 6)
        Wq = nrm(lk[0], (HIDDEN, HIDDEN))
        Wk = nrm(lk[1], (HIDDEN, HIDDEN))
        Wv = nrm(lk[2], (HIDDEN, HIDDEN))
        Wo = nrm(lk[3], (HIDDEN, HIDDEN))
        bq = jnp.zeros((HIDDEN,), jnp.float32)
        bk = jnp.zeros((HIDDEN,), jnp.float32)
        bv = jnp.zeros((HIDDEN,), jnp.float32)
        # fused QKV weight, 1/sqrt(dh) folded into the Q columns and Q bias
        wqkv.append(jnp.concatenate([Wq * scale, Wk, Wv], axis=1))       # (H, 3H)
        bqkv = jnp.concatenate([bq * scale, bk, bv], axis=0)             # (3H,)
        wo.append(Wo)
        w1.append(nrm(lk[4], (HIDDEN, INTER)))
        w2.append(nrm(lk[5], (INTER, HIDDEN)))

        vec_rows += [
            pad_row(bqkv),
            pad_row(jnp.zeros((HIDDEN,), jnp.float32)),   # bo
            pad_row(jnp.ones((HIDDEN,), jnp.float32)),    # ln1g
            pad_row(jnp.zeros((HIDDEN,), jnp.float32)),   # ln1b
            pad_row(jnp.zeros((INTER,), jnp.float32)),    # b1
            pad_row(jnp.zeros((HIDDEN,), jnp.float32)),   # b2
            pad_row(jnp.ones((HIDDEN,), jnp.float32)),    # ln2g
            pad_row(jnp.zeros((HIDDEN,), jnp.float32)),   # ln2b
        ]

    # global rows: embedding LN gamma/beta + classifier bias (lane-padded)
    vec_rows += [
        pad_row(jnp.ones((HIDDEN,), jnp.float32)),        # emb_ln_g
        pad_row(jnp.zeros((HIDDEN,), jnp.float32)),       # emb_ln_b
        pad_row(jnp.zeros((NUM_LABELS,), jnp.float32)),   # cls_b
    ]

    p["wqkv"] = jnp.stack(wqkv)                                          # (L, H, 3H)
    p["wo"] = jnp.stack(wo)                                              # (L, H, H)
    p["w1"] = jnp.stack(w1)                                              # (L, H, INTER)
    p["w2"] = jnp.stack(w2)                                              # (L, INTER, H)
    p["vecs"] = jnp.stack(vec_rows)                                      # (L*8+3, 128)

    cls_w = nrm(keys[3 + NUM_LAYERS], (HIDDEN, NUM_LABELS))
    p["cls_w"] = jnp.zeros((HIDDEN, LANE_PAD), jnp.float32).at[:, :NUM_LABELS].set(cls_w)
    return p


# ----------------------------- forward pass (wrapper) ----------------------------
@jax.jit
def bert_difficulty_classifier(params, input_ids, attention_mask):
    B, S = input_ids.shape
    ids = input_ids.reshape(B * S, 1).astype(jnp.int32)
    # additive attention-mask bias, computed once (hoisted out of all layers)
    nb = ((1.0 - attention_mask.astype(jnp.float32)) * (-1e9)).reshape(B, 1, S)

    vmem = pl.BlockSpec(memory_space=pltpu.MemorySpace.VMEM)
    out = pl.pallas_call(
        fused_bert_kernel,
        out_shape=jax.ShapeDtypeStruct((B, LANE_PAD), jnp.float32),
        in_specs=[vmem] * 10,
        out_specs=vmem,
    )(ids, nb, params["word_emb"], params["pt"],
      params["wqkv"], params["wo"], params["w1"], params["w2"],
      params["cls_w"], params["vecs"])

    return out[:, :NUM_LABELS]


# ----------------------------- pure-JAX reference --------------------------------
def reference_forward(params, input_ids, attention_mask):
    B, S = input_ids.shape
    vecs = params["vecs"]
    x = params["word_emb"][input_ids.reshape(B * S)] + params["pt"]
    x = _layernorm(x, vecs[_GBASE:_GBASE + 1, :HIDDEN], vecs[_GBASE + 1:_GBASE + 2, :HIDDEN])
    nb = ((1.0 - attention_mask.astype(jnp.float32)) * (-1e9)).reshape(B, 1, S)

    for li in range(NUM_LAYERS):
        base = li * _ROWS_PER_LAYER
        qkv = x @ params["wqkv"][li] + vecs[base:base + 1, :3 * HIDDEN]
        ctxs = []
        for h in range(NUM_HEADS):
            qh = qkv[:, h * HEAD_DIM:(h + 1) * HEAD_DIM].reshape(B, S, HEAD_DIM)
            kh = qkv[:, HIDDEN + h * HEAD_DIM: HIDDEN + (h + 1) * HEAD_DIM].reshape(B, S, HEAD_DIM)
            vh = qkv[:, 2 * HIDDEN + h * HEAD_DIM: 2 * HIDDEN + (h + 1) * HEAD_DIM].reshape(B, S, HEAD_DIM)
            sc = jnp.einsum('bqd,bkd->bqk', qh, kh) + nb
            p = jax.nn.softmax(sc, axis=-1)
            ctxs.append(jnp.einsum('bqk,bkd->bqd', p, vh))
        ctx = jnp.concatenate(ctxs, axis=-1).reshape(B * S, HIDDEN)
        attn = ctx @ params["wo"][li] + vecs[base + 1:base + 2, :HIDDEN]
        h1 = _layernorm(x + attn, vecs[base + 2:base + 3, :HIDDEN], vecs[base + 3:base + 4, :HIDDEN])
        ff = _gelu(h1 @ params["w1"][li] + vecs[base + 4:base + 5, :INTER])
        ff = ff @ params["w2"][li] + vecs[base + 5:base + 6, :HIDDEN]
        x = _layernorm(h1 + ff, vecs[base + 6:base + 7, :HIDDEN], vecs[base + 7:base + 8, :HIDDEN])

    cls = x.reshape(B, S, HIDDEN)[:, 0, :]
    return cls @ params["cls_w"][:, :NUM_LABELS] + vecs[_GBASE + 2:_GBASE + 3, :NUM_LABELS]


# ----------------------------------- main -----------------------------------------
if __name__ == "__main__":
    key = jax.random.PRNGKey(0)
    pkey, ikey = jax.random.split(key)

    params = init_params(pkey)

    input_ids = jax.random.randint(ikey, (BATCH, SEQ), 0, VOCAB, dtype=jnp.int32)
    # batch 0 fully valid, batch 1 has 3 padded positions at the end
    attention_mask = jnp.array(
        [[1, 1, 1, 1, 1, 1, 1, 1],
         [1, 1, 1, 1, 1, 0, 0, 0]], dtype=jnp.int32)

    logits = bert_difficulty_classifier(params, input_ids, attention_mask)
    jax.block_until_ready(logits)

    assert logits.shape == (BATCH, NUM_LABELS)
    assert bool(jnp.all(jnp.isfinite(logits)))

    # correctness check against a pure-JAX reference of the same model
    with jax.default_matmul_precision("highest"):
        ref = reference_forward(params, input_ids, attention_mask)
    assert bool(jnp.allclose(logits, ref, atol=1e-3, rtol=1e-3)), (logits, ref)

    print("KERNEL_OK")
</pallas_src>

<mosaic_0001>
module attributes {stable_mosaic.version = 11 : i64} {
  func.func @fused_bert_kernel(%arg0: memref<16x1xi32, #tpu.memory_space<vmem>>, %arg1: memref<2x1x8xf32, #tpu.memory_space<vmem>>, %arg2: memref<64x32xf32, #tpu.memory_space<vmem>>, %arg3: memref<16x32xf32, #tpu.memory_space<vmem>>, %arg4: memref<2x32x96xf32, #tpu.memory_space<vmem>>, %arg5: memref<2x32x32xf32, #tpu.memory_space<vmem>>, %arg6: memref<2x32x128xf32, #tpu.memory_space<vmem>>, %arg7: memref<2x128x32xf32, #tpu.memory_space<vmem>>, %arg8: memref<32x128xf32, #tpu.memory_space<vmem>>, %arg9: memref<19x128xf32, #tpu.memory_space<vmem>>, %arg10: memref<2x128xf32, #tpu.memory_space<vmem>>) attributes {dimension_semantics = [], scalar_prefetch = 0 : i64, scratch_operands = 0 : i64, tpu.core_type = #tpu.core_type<tc>} {
    %c0 = arith.constant 0 : index
    %c0_0 = arith.constant 0 : index
    %0 = vector.load %arg0[%c0, %c0_0] : memref<16x1xi32, #tpu.memory_space<vmem>>, vector<16x1xi32>
    %1 = tpu.iota {dimensions = array<i32: 1>} : vector<16x64xi32>
    %2 = vector.broadcast %0 : vector<16x1xi32> to vector<16x64xi32>
    %3 = arith.cmpi eq, %1, %2 : vector<16x64xi32>
    %4 = arith.extui %3 : vector<16x64xi1> to vector<16x64xi32>
    %5 = arith.sitofp %4 : vector<16x64xi32> to vector<16x64xf32>
    %c0_1 = arith.constant 0 : index
    %c0_2 = arith.constant 0 : index
    %6 = vector.load %arg2[%c0_1, %c0_2] : memref<64x32xf32, #tpu.memory_space<vmem>>, vector<64x32xf32>
    %cst = arith.constant dense<0.000000e+00> : vector<16x32xf32>
    %7 = tpu.matmul %5, %6, %cst {dimension_numbers = #tpu.dot_dimension_numbers<[1], [0], [0], [1], [0, 0, 1, 1], [], []>} : vector<16x64xf32>, vector<64x32xf32>, vector<16x32xf32> -> vector<16x32xf32>
    %c0_3 = arith.constant 0 : index
    %c0_4 = arith.constant 0 : index
    %8 = vector.load %arg3[%c0_3, %c0_4] : memref<16x32xf32, #tpu.memory_space<vmem>>, vector<16x32xf32>
    %9 = arith.addf %7, %8 : vector<16x32xf32>
    %c16 = arith.constant 16 : index
    %c0_5 = arith.constant 0 : index
    %10 = vector.load %arg9[%c16, %c0_5] : memref<19x128xf32, #tpu.memory_space<vmem>>, vector<1x32xf32>
    %c17 = arith.constant 17 : index
    %c0_6 = arith.constant 0 : index
    %11 = vector.load %arg9[%c17, %c0_6] : memref<19x128xf32, #tpu.memory_space<vmem>>, vector<1x32xf32>
    %cst_7 = arith.constant dense<0.000000e+00> : vector<16xf32>
    %12 = vector.multi_reduction <add>, %9, %cst_7 [1] : vector<16x32xf32> to vector<16xf32>
    %13 = vector.shape_cast %12 : vector<16xf32> to vector<16x1xf32>
    %cst_8 = arith.constant 3.200000e+01 : f32
    %14 = vector.broadcast %cst_8 : f32 to vector<16x1xf32>
    %15 = arith.divf %13, %14 : vector<16x1xf32>
    %16 = vector.broadcast %15 : vector<16x1xf32> to vector<16x32xf32>
    %17 = arith.subf %9, %16 : vector<16x32xf32>
    %18 = arith.mulf %17, %17 : vector<16x32xf32>
    %cst_9 = arith.constant dense<0.000000e+00> : vector<16xf32>
    %19 = vector.multi_reduction <add>, %18, %cst_9 [1] : vector<16x32xf32> to vector<16xf32>
    %20 = vector.shape_cast %19 : vector<16xf32> to vector<16x1xf32>
    %cst_10 = arith.constant 3.200000e+01 : f32
    %21 = vector.broadcast %cst_10 : f32 to vector<16x1xf32>
    %22 = arith.divf %20, %21 : vector<16x1xf32>
    %23 = vector.broadcast %15 : vector<16x1xf32> to vector<16x32xf32>
    %24 = arith.subf %9, %23 : vector<16x32xf32>
    %cst_11 = arith.constant 9.99999996E-13 : f32
    %25 = vector.broadcast %cst_11 : f32 to vector<16x1xf32>
    %26 = arith.addf %22, %25 : vector<16x1xf32>
    %27 = math.rsqrt %26 : vector<16x1xf32>
    %28 = vector.broadcast %27 : vector<16x1xf32> to vector<16x32xf32>
    %29 = arith.mulf %24, %28 : vector<16x32xf32>
    %30 = vector.broadcast %10 : vector<1x32xf32> to vector<16x32xf32>
    %31 = arith.mulf %29, %30 : vector<16x32xf32>
    %32 = vector.broadcast %11 : vector<1x32xf32> to vector<16x32xf32>
    %33 = arith.addf %31, %32 : vector<16x32xf32>
    %c0_12 = arith.constant 0 : index
    %c0_13 = arith.constant 0 : index
    %c0_14 = arith.constant 0 : index
    %34 = vector.load %arg1[%c0_12, %c0_13, %c0_14] : memref<2x1x8xf32, #tpu.memory_space<vmem>>, vector<2x1x8xf32>
    %c0_15 = arith.constant 0 : index
    %c0_16 = arith.constant 0 : index
    %c0_17 = arith.constant 0 : index
    %35 = vector.load %arg4[%c0_15, %c0_16, %c0_17] : memref<2x32x96xf32, #tpu.memory_space<vmem>>, vector<1x32x96xf32>
    %36 = vector.shape_cast %35 : vector<1x32x96xf32> to vector<32x96xf32>
    %cst_18 = arith.constant dense<0.000000e+00> : vector<16x96xf32>
    %37 = tpu.matmul %33, %36, %cst_18 {dimension_numbers = #tpu.dot_dimension_numbers<[1], [0], [0], [1], [0, 0, 1, 1], [], []>} : vector<16x32xf32>, vector<32x96xf32>, vector<16x96xf32> -> vector<16x96xf32>
    %c0_19 = arith.constant 0 : index
    %c0_20 = arith.constant 0 : index
    %38 = vector.load %arg9[%c0_19, %c0_20] : memref<19x128xf32, #tpu.memory_space<vmem>>, vector<1x96xf32>
    %39 = vector.broadcast %38 : vector<1x96xf32> to vector<16x96xf32>
    %40 = arith.addf %37, %39 : vector<16x96xf32>
    %41 = vector.extract_strided_slice %40 {offsets = [0, 0], sizes = [16, 8], strides = [1, 1]} : vector<16x96xf32> to vector<16x8xf32>
    %42 = vector.shape_cast %41 : vector<16x8xf32> to vector<2x8x8xf32>
    %43 = vector.extract_strided_slice %40 {offsets = [0, 32], sizes = [16, 8], strides = [1, 1]} : vector<16x96xf32> to vector<16x8xf32>
    %44 = vector.shape_cast %43 : vector<16x8xf32> to vector<2x8x8xf32>
    %45 = vector.extract_strided_slice %40 {offsets = [0, 64], sizes = [16, 8], strides = [1, 1]} : vector<16x96xf32> to vector<16x8xf32>
    %46 = vector.shape_cast %45 : vector<16x8xf32> to vector<2x8x8xf32>
    "tpu.trace_start"() <{level = 10 : i32, message = "bqd,bkd->bqk"}> : () -> ()
    %cst_21 = arith.constant dense<0.000000e+00> : vector<2x8x8xf32>
    %47 = tpu.matmul %42, %44, %cst_21 {dimension_numbers = #tpu.dot_dimension_numbers<[2], [2], [1], [1], [0, 0, 0, 1, 1, 1], [0], [0]>} : vector<2x8x8xf32>, vector<2x8x8xf32>, vector<2x8x8xf32> -> vector<2x8x8xf32>
    "tpu.trace_stop"() : () -> ()
    %48 = vector.broadcast %34 : vector<2x1x8xf32> to vector<2x8x8xf32>
    %49 = arith.addf %47, %48 : vector<2x8x8xf32>
    %cst_22 = arith.constant dense<0xFF800000> : vector<2x8xf32>
    %50 = vector.multi_reduction <maximumf>, %49, %cst_22 [2] : vector<2x8x8xf32> to vector<2x8xf32>
    %51 = vector.shape_cast %50 : vector<2x8xf32> to vector<2x8x1xf32>
    %52 = vector.broadcast %51 : vector<2x8x1xf32> to vector<2x8x8xf32>
    %53 = arith.subf %49, %52 : vector<2x8x8xf32>
    %54 = math.exp %53 : vector<2x8x8xf32>
    %cst_23 = arith.constant dense<0.000000e+00> : vector<2x8xf32>
    %55 = vector.multi_reduction <add>, %54, %cst_23 [2] : vector<2x8x8xf32> to vector<2x8xf32>
    %56 = vector.shape_cast %55 : vector<2x8xf32> to vector<2x8x1xf32>
    %57 = vector.broadcast %56 : vector<2x8x1xf32> to vector<2x8x8xf32>
    %58 = arith.divf %54, %57 : vector<2x8x8xf32>
    "tpu.trace_start"() <{level = 10 : i32, message = "bqk,bkd->bqd"}> : () -> ()
    %cst_24 = arith.constant dense<0.000000e+00> : vector<2x8x8xf32>
    %59 = tpu.matmul %58, %46, %cst_24 {dimension_numbers = #tpu.dot_dimension_numbers<[2], [1], [1], [2], [0, 0, 0, 1, 1, 2], [0], [0]>} : vector<2x8x8xf32>, vector<2x8x8xf32>, vector<2x8x8xf32> -> vector<2x8x8xf32>
    "tpu.trace_stop"() : () -> ()
    %60 = vector.extract_strided_slice %40 {offsets = [0, 8], sizes = [16, 8], strides = [1, 1]} : vector<16x96xf32> to vector<16x8xf32>
    %61 = vector.shape_cast %60 : vector<16x8xf32> to vector<2x8x8xf32>
    %62 = vector.extract_strided_slice %40 {offsets = [0, 40], sizes = [16, 8], strides = [1, 1]} : vector<16x96xf32> to vector<16x8xf32>
    %63 = vector.shape_cast %62 : vector<16x8xf32> to vector<2x8x8xf32>
    %64 = vector.extract_strided_slice %40 {offsets = [0, 72], sizes = [16, 8], strides = [1, 1]} : vector<16x96xf32> to vector<16x8xf32>
    %65 = vector.shape_cast %64 : vector<16x8xf32> to vector<2x8x8xf32>
    "tpu.trace_start"() <{level = 10 : i32, message = "bqd,bkd->bqk"}> : () -> ()
    %cst_25 = arith.constant dense<0.000000e+00> : vector<2x8x8xf32>
    %66 = tpu.matmul %61, %63, %cst_25 {dimension_numbers = #tpu.dot_dimension_numbers<[2], [2], [1], [1], [0, 0, 0, 1, 1, 1], [0], [0]>} : vector<2x8x8xf32>, vector<2x8x8xf32>, vector<2x8x8xf32> -> vector<2x8x8xf32>
    "tpu.trace_stop"() : () -> ()
    %67 = vector.broadcast %34 : vector<2x1x8xf32> to vector<2x8x8xf32>
    %68 = arith.addf %66, %67 : vector<2x8x8xf32>
    %cst_26 = arith.constant dense<0xFF800000> : vector<2x8xf32>
    %69 = vector.multi_reduction <maximumf>, %68, %cst_26 [2] : vector<2x8x8xf32> to vector<2x8xf32>
    %70 = vector.shape_cast %69 : vector<2x8xf32> to vector<2x8x1xf32>
    %71 = vector.broadcast %70 : vector<2x8x1xf32> to vector<2x8x8xf32>
    %72 = arith.subf %68, %71 : vector<2x8x8xf32>
    %73 = math.exp %72 : vector<2x8x8xf32>
    %cst_27 = arith.constant dense<0.000000e+00> : vector<2x8xf32>
    %74 = vector.multi_reduction <add>, %73, %cst_27 [2] : vector<2x8x8xf32> to vector<2x8xf32>
    %75 = vector.shape_cast %74 : vector<2x8xf32> to vector<2x8x1xf32>
    %76 = vector.broadcast %75 : vector<2x8x1xf32> to vector<2x8x8xf32>
    %77 = arith.divf %73, %76 : vector<2x8x8xf32>
    "tpu.trace_start"() <{level = 10 : i32, message = "bqk,bkd->bqd"}> : () -> ()
    %cst_28 = arith.constant dense<0.000000e+00> : vector<2x8x8xf32>
    %78 = tpu.matmul %77, %65, %cst_28 {dimension_numbers = #tpu.dot_dimension_numbers<[2], [1], [1], [2], [0, 0, 0, 1, 1, 2], [0], [0]>} : vector<2x8x8xf32>, vector<2x8x8xf32>, vector<2x8x8xf32> -> vector<2x8x8xf32>
    "tpu.trace_stop"() : () -> ()
    %79 = vector.extract_strided_slice %40 {offsets = [0, 16], sizes = [16, 8], strides = [1, 1]} : vector<16x96xf32> to vector<16x8xf32>
    %80 = vector.shape_cast %79 : vector<16x8xf32> to vector<2x8x8xf32>
    %81 = vector.extract_strided_slice %40 {offsets = [0, 48], sizes = [16, 8], strides = [1, 1]} : vector<16x96xf32> to vector<16x8xf32>
    %82 = vector.shape_cast %81 : vector<16x8xf32> to vector<2x8x8xf32>
    %83 = vector.extract_strided_slice %40 {offsets = [0, 80], sizes = [16, 8], strides = [1, 1]} : vector<16x96xf32> to vector<16x8xf32>
    %84 = vector.shape_cast %83 : vector<16x8xf32> to vector<2x8x8xf32>
    "tpu.trace_start"() <{level = 10 : i32, message = "bqd,bkd->bqk"}> : () -> ()
    %cst_29 = arith.constant dense<0.000000e+00> : vector<2x8x8xf32>
    %85 = tpu.matmul %80, %82, %cst_29 {dimension_numbers = #tpu.dot_dimension_numbers<[2], [2], [1], [1], [0, 0, 0, 1, 1, 1], [0], [0]>} : vector<2x8x8xf32>, vector<2x8x8xf32>, vector<2x8x8xf32> -> vector<2x8x8xf32>
    "tpu.trace_stop"() : () -> ()
    %86 = vector.broadcast %34 : vector<2x1x8xf32> to vector<2x8x8xf32>
    %87 = arith.addf %85, %86 : vector<2x8x8xf32>
    %cst_30 = arith.constant dense<0xFF800000> : vector<2x8xf32>
    %88 = vector.multi_reduction <maximumf>, %87, %cst_30 [2] : vector<2x8x8xf32> to vector<2x8xf32>
    %89 = vector.shape_cast %88 : vector<2x8xf32> to vector<2x8x1xf32>
    %90 = vector.broadcast %89 : vector<2x8x1xf32> to vector<2x8x8xf32>
    %91 = arith.subf %87, %90 : vector<2x8x8xf32>
    %92 = math.exp %91 : vector<2x8x8xf32>
    %cst_31 = arith.constant dense<0.000000e+00> : vector<2x8xf32>
    %93 = vector.multi_reduction <add>, %92, %cst_31 [2] : vector<2x8x8xf32> to vector<2x8xf32>
    %94 = vector.shape_cast %93 : vector<2x8xf32> to vector<2x8x1xf32>
    %95 = vector.broadcast %94 : vector<2x8x1xf32> to vector<2x8x8xf32>
    %96 = arith.divf %92, %95 : vector<2x8x8xf32>
    "tpu.trace_start"() <{level = 10 : i32, message = "bqk,bkd->bqd"}> : () -> ()
    %cst_32 = arith.constant dense<0.000000e+00> : vector<2x8x8xf32>
    %97 = tpu.matmul %96, %84, %cst_32 {dimension_numbers = #tpu.dot_dimension_numbers<[2], [1], [1], [2], [0, 0, 0, 1, 1, 2], [0], [0]>} : vector<2x8x8xf32>, vector<2x8x8xf32>, vector<2x8x8xf32> -> vector<2x8x8xf32>
    "tpu.trace_stop"() : () -> ()
    %98 = vector.extract_strided_slice %40 {offsets = [0, 24], sizes = [16, 8], strides = [1, 1]} : vector<16x96xf32> to vector<16x8xf32>
    %99 = vector.shape_cast %98 : vector<16x8xf32> to vector<2x8x8xf32>
    %100 = vector.extract_strided_slice %40 {offsets = [0, 56], sizes = [16, 8], strides = [1, 1]} : vector<16x96xf32> to vector<16x8xf32>
    %101 = vector.shape_cast %100 : vector<16x8xf32> to vector<2x8x8xf32>
    %102 = vector.extract_strided_slice %40 {offsets = [0, 88], sizes = [16, 8], strides = [1, 1]} : vector<16x96xf32> to vector<16x8xf32>
    %103 = vector.shape_cast %102 : vector<16x8xf32> to vector<2x8x8xf32>
    "tpu.trace_start"() <{level = 10 : i32, message = "bqd,bkd->bqk"}> : () -> ()
    %cst_33 = arith.constant dense<0.000000e+00> : vector<2x8x8xf32>
    %104 = tpu.matmul %99, %101, %cst_33 {dimension_numbers = #tpu.dot_dimension_numbers<[2], [2], [1], [1], [0, 0, 0, 1, 1, 1], [0], [0]>} : vector<2x8x8xf32>, vector<2x8x8xf32>, vector<2x8x8xf32> -> vector<2x8x8xf32>
    "tpu.trace_stop"() : () -> ()
    %105 = vector.broadcast %34 : vector<2x1x8xf32> to vector<2x8x8xf32>
    %106 = arith.addf %104, %105 : vector<2x8x8xf32>
    %cst_34 = arith.constant dense<0xFF800000> : vector<2x8xf32>
    %107 = vector.multi_reduction <maximumf>, %106, %cst_34 [2] : vector<2x8x8xf32> to vector<2x8xf32>
    %108 = vector.shape_cast %107 : vector<2x8xf32> to vector<2x8x1xf32>
    %109 = vector.broadcast %108 : vector<2x8x1xf32> to vector<2x8x8xf32>
    %110 = arith.subf %106, %109 : vector<2x8x8xf32>
    %111 = math.exp %110 : vector<2x8x8xf32>
    %cst_35 = arith.constant dense<0.000000e+00> : vector<2x8xf32>
    %112 = vector.multi_reduction <add>, %111, %cst_35 [2] : vector<2x8x8xf32> to vector<2x8xf32>
    %113 = vector.shape_cast %112 : vector<2x8xf32> to vector<2x8x1xf32>
    %114 = vector.broadcast %113 : vector<2x8x1xf32> to vector<2x8x8xf32>
    %115 = arith.divf %111, %114 : vector<2x8x8xf32>
    "tpu.trace_start"() <{level = 10 : i32, message = "bqk,bkd->bqd"}> : () -> ()
    %cst_36 = arith.constant dense<0.000000e+00> : vector<2x8x8xf32>
    %116 = tpu.matmul %115, %103, %cst_36 {dimension_numbers = #tpu.dot_dimension_numbers<[2], [1], [1], [2], [0, 0, 0, 1, 1, 2], [0], [0]>} : vector<2x8x8xf32>, vector<2x8x8xf32>, vector<2x8x8xf32> -> vector<2x8x8xf32>
    "tpu.trace_stop"() : () -> ()
    %117 = tpu.concatenate %59, %78, %97, %116 in 2 : vector<2x8x8xf32>, vector<2x8x8xf32>, vector<2x8x8xf32>, vector<2x8x8xf32> -> vector<2x8x32xf32>
    %118 = vector.shape_cast %117 : vector<2x8x32xf32> to vector<16x32xf32>
    %c0_37 = arith.constant 0 : index
    %c0_38 = arith.constant 0 : index
    %c0_39 = arith.constant 0 : index
    %119 = vector.load %arg5[%c0_37, %c0_38, %c0_39] : memref<2x32x32xf32, #tpu.memory_space<vmem>>, vector<1x32x32xf32>
    %120 = vector.shape_cast %119 : vector<1x32x32xf32> to vector<32x32xf32>
    %cst_40 = arith.constant dense<0.000000e+00> : vector<16x32xf32>
    %121 = tpu.matmul %118, %120, %cst_40 {dimension_numbers = #tpu.dot_dimension_numbers<[1], [0], [0], [1], [0, 0, 1, 1], [], []>} : vector<16x32xf32>, vector<32x32xf32>, vector<16x32xf32> -> vector<16x32xf32>
    %c1 = arith.constant 1 : index
    %c0_41 = arith.constant 0 : index
    %122 = vector.load %arg9[%c1, %c0_41] : memref<19x128xf32, #tpu.memory_space<vmem>>, vector<1x32xf32>
    %123 = vector.broadcast %122 : vector<1x32xf32> to vector<16x32xf32>
    %124 = arith.addf %121, %123 : vector<16x32xf32>
    %125 = arith.addf %33, %124 : vector<16x32xf32>
    %c2 = arith.constant 2 : index
    %c0_42 = arith.constant 0 : index
    %126 = vector.load %arg9[%c2, %c0_42] : memref<19x128xf32, #tpu.memory_space<vmem>>, vector<1x32xf32>
    %c3 = arith.constant 3 : index
    %c0_43 = arith.constant 0 : index
    %127 = vector.load %arg9[%c3, %c0_43] : memref<19x128xf32, #tpu.memory_space<vmem>>, vector<1x32xf32>
    %cst_44 = arith.constant dense<0.000000e+00> : vector<16xf32>
    %128 = vector.multi_reduction <add>, %125, %cst_44 [1] : vector<16x32xf32> to vector<16xf32>
    %129 = vector.shape_cast %128 : vector<16xf32> to vector<16x1xf32>
    %cst_45 = arith.constant 3.200000e+01 : f32
    %130 = vector.broadcast %cst_45 : f32 to vector<16x1xf32>
    %131 = arith.divf %129, %130 : vector<16x1xf32>
    %132 = vector.broadcast %131 : vector<16x1xf32> to vector<16x32xf32>
    %133 = arith.subf %125, %132 : vector<16x32xf32>
    %134 = arith.mulf %133, %133 : vector<16x32xf32>
    %cst_46 = arith.constant dense<0.000000e+00> : vector<16xf32>
    %135 = vector.multi_reduction <add>, %134, %cst_46 [1] : vector<16x32xf32> to vector<16xf32>
    %136 = vector.shape_cast %135 : vector<16xf32> to vector<16x1xf32>
    %cst_47 = arith.constant 3.200000e+01 : f32
    %137 = vector.broadcast %cst_47 : f32 to vector<16x1xf32>
    %138 = arith.divf %136, %137 : vector<16x1xf32>
    %139 = vector.broadcast %131 : vector<16x1xf32> to vector<16x32xf32>
    %140 = arith.subf %125, %139 : vector<16x32xf32>
    %cst_48 = arith.constant 9.99999996E-13 : f32
    %141 = vector.broadcast %cst_48 : f32 to vector<16x1xf32>
    %142 = arith.addf %138, %141 : vector<16x1xf32>
    %143 = math.rsqrt %142 : vector<16x1xf32>
    %144 = vector.broadcast %143 : vector<16x1xf32> to vector<16x32xf32>
    %145 = arith.mulf %140, %144 : vector<16x32xf32>
    %146 = vector.broadcast %126 : vector<1x32xf32> to vector<16x32xf32>
    %147 = arith.mulf %145, %146 : vector<16x32xf32>
    %148 = vector.broadcast %127 : vector<1x32xf32> to vector<16x32xf32>
    %149 = arith.addf %147, %148 : vector<16x32xf32>
    %c0_49 = arith.constant 0 : index
    %c0_50 = arith.constant 0 : index
    %c0_51 = arith.constant 0 : index
    %150 = vector.load %arg6[%c0_49, %c0_50, %c0_51] : memref<2x32x128xf32, #tpu.memory_space<vmem>>, vector<1x32x128xf32>
    %151 = vector.shape_cast %150 : vector<1x32x128xf32> to vector<32x128xf32>
    %cst_52 = arith.constant dense<0.000000e+00> : vector<16x128xf32>
    %152 = tpu.matmul %149, %151, %cst_52 {dimension_numbers = #tpu.dot_dimension_numbers<[1], [0], [0], [1], [0, 0, 1, 1], [], []>} : vector<16x32xf32>, vector<32x128xf32>, vector<16x128xf32> -> vector<16x128xf32>
    %c4 = arith.constant 4 : index
    %c0_53 = arith.constant 0 : index
    %153 = vector.load %arg9[%c4, %c0_53] : memref<19x128xf32, #tpu.memory_space<vmem>>, vector<1x128xf32>
    %154 = vector.broadcast %153 : vector<1x128xf32> to vector<16x128xf32>
    %155 = arith.addf %152, %154 : vector<16x128xf32>
    %cst_54 = arith.constant 5.000000e-01 : f32
    %156 = vector.broadcast %cst_54 : f32 to vector<16x128xf32>
    %157 = arith.mulf %156, %155 : vector<16x128xf32>
    %cst_55 = arith.constant 4.471500e-02 : f32
    %158 = vector.broadcast %cst_55 : f32 to vector<16x128xf32>
    %159 = arith.mulf %158, %155 : vector<16x128xf32>
    %160 = arith.mulf %159, %155 : vector<16x128xf32>
    %161 = arith.mulf %160, %155 : vector<16x128xf32>
    %162 = arith.addf %155, %161 : vector<16x128xf32>
    %cst_56 = arith.constant 0.797884583 : f32
    %163 = vector.broadcast %cst_56 : f32 to vector<16x128xf32>
    %164 = arith.mulf %163, %162 : vector<16x128xf32>
    %165 = math.tanh %164 : vector<16x128xf32>
    %cst_57 = arith.constant 1.000000e+00 : f32
    %166 = vector.broadcast %cst_57 : f32 to vector<16x128xf32>
    %167 = arith.addf %166, %165 : vector<16x128xf32>
    %168 = arith.mulf %157, %167 : vector<16x128xf32>
    %c0_58 = arith.constant 0 : index
    %c0_59 = arith.constant 0 : index
    %c0_60 = arith.constant 0 : index
    %169 = vector.load %arg7[%c0_58, %c0_59, %c0_60] : memref<2x128x32xf32, #tpu.memory_space<vmem>>, vector<1x128x32xf32>
    %170 = vector.shape_cast %169 : vector<1x128x32xf32> to vector<128x32xf32>
    %cst_61 = arith.constant dense<0.000000e+00> : vector<16x32xf32>
    %171 = tpu.matmul %168, %170, %cst_61 {dimension_numbers = #tpu.dot_dimension_numbers<[1], [0], [0], [1], [0, 0, 1, 1], [], []>} : vector<16x128xf32>, vector<128x32xf32>, vector<16x32xf32> -> vector<16x32xf32>
    %c5 = arith.constant 5 : index
    %c0_62 = arith.constant 0 : index
    %172 = vector.load %arg9[%c5, %c0_62] : memref<19x128xf32, #tpu.memory_space<vmem>>, vector<1x32xf32>
    %173 = vector.broadcast %172 : vector<1x32xf32> to vector<16x32xf32>
    %174 = arith.addf %171, %173 : vector<16x32xf32>
    %175 = arith.addf %149, %174 : vector<16x32xf32>
    %c6 = arith.constant 6 : index
    %c0_63 = arith.constant 0 : index
    %176 = vector.load %arg9[%c6, %c0_63] : memref<19x128xf32, #tpu.memory_space<vmem>>, vector<1x32xf32>
    %c7 = arith.constant 7 : index
    %c0_64 = arith.constant 0 : index
    %177 = vector.load %arg9[%c7, %c0_64] : memref<19x128xf32, #tpu.memory_space<vmem>>, vector<1x32xf32>
    %cst_65 = arith.constant dense<0.000000e+00> : vector<16xf32>
    %178 = vector.multi_reduction <add>, %175, %cst_65 [1] : vector<16x32xf32> to vector<16xf32>
    %179 = vector.shape_cast %178 : vector<16xf32> to vector<16x1xf32>
    %cst_66 = arith.constant 3.200000e+01 : f32
    %180 = vector.broadcast %cst_66 : f32 to vector<16x1xf32>
    %181 = arith.divf %179, %180 : vector<16x1xf32>
    %182 = vector.broadcast %181 : vector<16x1xf32> to vector<16x32xf32>
    %183 = arith.subf %175, %182 : vector<16x32xf32>
    %184 = arith.mulf %183, %183 : vector<16x32xf32>
    %cst_67 = arith.constant dense<0.000000e+00> : vector<16xf32>
    %185 = vector.multi_reduction <add>, %184, %cst_67 [1] : vector<16x32xf32> to vector<16xf32>
    %186 = vector.shape_cast %185 : vector<16xf32> to vector<16x1xf32>
    %cst_68 = arith.constant 3.200000e+01 : f32
    %187 = vector.broadcast %cst_68 : f32 to vector<16x1xf32>
    %188 = arith.divf %186, %187 : vector<16x1xf32>
    %189 = vector.broadcast %181 : vector<16x1xf32> to vector<16x32xf32>
    %190 = arith.subf %175, %189 : vector<16x32xf32>
    %cst_69 = arith.constant 9.99999996E-13 : f32
    %191 = vector.broadcast %cst_69 : f32 to vector<16x1xf32>
    %192 = arith.addf %188, %191 : vector<16x1xf32>
    %193 = math.rsqrt %192 : vector<16x1xf32>
    %194 = vector.broadcast %193 : vector<16x1xf32> to vector<16x32xf32>
    %195 = arith.mulf %190, %194 : vector<16x32xf32>
    %196 = vector.broadcast %176 : vector<1x32xf32> to vector<16x32xf32>
    %197 = arith.mulf %195, %196 : vector<16x32xf32>
    %198 = vector.broadcast %177 : vector<1x32xf32> to vector<16x32xf32>
    %199 = arith.addf %197, %198 : vector<16x32xf32>
    %c1_70 = arith.constant 1 : index
    %c0_71 = arith.constant 0 : index
    %c0_72 = arith.constant 0 : index
    %200 = vector.load %arg4[%c1_70, %c0_71, %c0_72] : memref<2x32x96xf32, #tpu.memory_space<vmem>>, vector<1x32x96xf32>
    %201 = vector.shape_cast %200 : vector<1x32x96xf32> to vector<32x96xf32>
    %cst_73 = arith.constant dense<0.000000e+00> : vector<16x96xf32>
    %202 = tpu.matmul %199, %201, %cst_73 {dimension_numbers = #tpu.dot_dimension_numbers<[1], [0], [0], [1], [0, 0, 1, 1], [], []>} : vector<16x32xf32>, vector<32x96xf32>, vector<16x96xf32> -> vector<16x96xf32>
    %c8 = arith.constant 8 : index
    %c0_74 = arith.constant 0 : index
    %203 = vector.load %arg9[%c8, %c0_74] : memref<19x128xf32, #tpu.memory_space<vmem>>, vector<1x96xf32>
    %204 = vector.broadcast %203 : vector<1x96xf32> to vector<16x96xf32>
    %205 = arith.addf %202, %204 : vector<16x96xf32>
    %206 = vector.extract_strided_slice %205 {offsets = [0, 0], sizes = [16, 8], strides = [1, 1]} : vector<16x96xf32> to vector<16x8xf32>
    %207 = vector.shape_cast %206 : vector<16x8xf32> to vector<2x8x8xf32>
    %208 = vector.extract_strided_slice %205 {offsets = [0, 32], sizes = [16, 8], strides = [1, 1]} : vector<16x96xf32> to vector<16x8xf32>
    %209 = vector.shape_cast %208 : vector<16x8xf32> to vector<2x8x8xf32>
    %210 = vector.extract_strided_slice %205 {offsets = [0, 64], sizes = [16, 8], strides = [1, 1]} : vector<16x96xf32> to vector<16x8xf32>
    %211 = vector.shape_cast %210 : vector<16x8xf32> to vector<2x8x8xf32>
    "tpu.trace_start"() <{level = 10 : i32, message = "bqd,bkd->bqk"}> : () -> ()
    %cst_75 = arith.constant dense<0.000000e+00> : vector<2x8x8xf32>
    %212 = tpu.matmul %207, %209, %cst_75 {dimension_numbers = #tpu.dot_dimension_numbers<[2], [2], [1], [1], [0, 0, 0, 1, 1, 1], [0], [0]>} : vector<2x8x8xf32>, vector<2x8x8xf32>, vector<2x8x8xf32> -> vector<2x8x8xf32>
    "tpu.trace_stop"() : () -> ()
    %213 = vector.broadcast %34 : vector<2x1x8xf32> to vector<2x8x8xf32>
    %214 = arith.addf %212, %213 : vector<2x8x8xf32>
    %cst_76 = arith.constant dense<0xFF800000> : vector<2x8xf32>
    %215 = vector.multi_reduction <maximumf>, %214, %cst_76 [2] : vector<2x8x8xf32> to vector<2x8xf32>
    %216 = vector.shape_cast %215 : vector<2x8xf32> to vector<2x8x1xf32>
    %217 = vector.broadcast %216 : vector<2x8x1xf32> to vector<2x8x8xf32>
    %218 = arith.subf %214, %217 : vector<2x8x8xf32>
    %219 = math.exp %218 : vector<2x8x8xf32>
    %cst_77 = arith.constant dense<0.000000e+00> : vector<2x8xf32>
    %220 = vector.multi_reduction <add>, %219, %cst_77 [2] : vector<2x8x8xf32> to vector<2x8xf32>
    %221 = vector.shape_cast %220 : vector<2x8xf32> to vector<2x8x1xf32>
    %222 = vector.broadcast %221 : vector<2x8x1xf32> to vector<2x8x8xf32>
    %223 = arith.divf %219, %222 : vector<2x8x8xf32>
    "tpu.trace_start"() <{level = 10 : i32, message = "bqk,bkd->bqd"}> : () -> ()
    %cst_78 = arith.constant dense<0.000000e+00> : vector<2x8x8xf32>
    %224 = tpu.matmul %223, %211, %cst_78 {dimension_numbers = #tpu.dot_dimension_numbers<[2], [1], [1], [2], [0, 0, 0, 1, 1, 2], [0], [0]>} : vector<2x8x8xf32>, vector<2x8x8xf32>, vector<2x8x8xf32> -> vector<2x8x8xf32>
    "tpu.trace_stop"() : () -> ()
    %225 = vector.extract_strided_slice %205 {offsets = [0, 8], sizes = [16, 8], strides = [1, 1]} : vector<16x96xf32> to vector<16x8xf32>
    %226 = vector.shape_cast %225 : vector<16x8xf32> to vector<2x8x8xf32>
    %227 = vector.extract_strided_slice %205 {offsets = [0, 40], sizes = [16, 8], strides = [1, 1]} : vector<16x96xf32> to vector<16x8xf32>
    %228 = vector.shape_cast %227 : vector<16x8xf32> to vector<2x8x8xf32>
    %229 = vector.extract_strided_slice %205 {offsets = [0, 72], sizes = [16, 8], strides = [1, 1]} : vector<16x96xf32> to vector<16x8xf32>
    %230 = vector.shape_cast %229 : vector<16x8xf32> to vector<2x8x8xf32>
    "tpu.trace_start"() <{level = 10 : i32, message = "bqd,bkd->bqk"}> : () -> ()
    %cst_79 = arith.constant dense<0.000000e+00> : vector<2x8x8xf32>
    %231 = tpu.matmul %226, %228, %cst_79 {dimension_numbers = #tpu.dot_dimension_numbers<[2], [2], [1], [1], [0, 0, 0, 1, 1, 1], [0], [0]>} : vector<2x8x8xf32>, vector<2x8x8xf32>, vector<2x8x8xf32> -> vector<2x8x8xf32>
    "tpu.trace_stop"() : () -> ()
    %232 = vector.broadcast %34 : vector<2x1x8xf32> to vector<2x8x8xf32>
    %233 = arith.addf %231, %232 : vector<2x8x8xf32>
    %cst_80 = arith.constant dense<0xFF800000> : vector<2x8xf32>
    %234 = vector.multi_reduction <maximumf>, %233, %cst_80 [2] : vector<2x8x8xf32> to vector<2x8xf32>
    %235 = vector.shape_cast %234 : vector<2x8xf32> to vector<2x8x1xf32>
    %236 = vector.broadcast %235 : vector<2x8x1xf32> to vector<2x8x8xf32>
    %237 = arith.subf %233, %236 : vector<2x8x8xf32>
    %238 = math.exp %237 : vector<2x8x8xf32>
    %cst_81 = arith.constant dense<0.000000e+00> : vector<2x8xf32>
    %239 = vector.multi_reduction <add>, %238, %cst_81 [2] : vector<2x8x8xf32> to vector<2x8xf32>
    %240 = vector.shape_cast %239 : vector<2x8xf32> to vector<2x8x1xf32>
    %241 = vector.broadcast %240 : vector<2x8x1xf32> to vector<2x8x8xf32>
    %242 = arith.divf %238, %241 : vector<2x8x8xf32>
    "tpu.trace_start"() <{level = 10 : i32, message = "bqk,bkd->bqd"}> : () -> ()
    %cst_82 = arith.constant dense<0.000000e+00> : vector<2x8x8xf32>
    %243 = tpu.matmul %242, %230, %cst_82 {dimension_numbers = #tpu.dot_dimension_numbers<[2], [1], [1], [2], [0, 0, 0, 1, 1, 2], [0], [0]>} : vector<2x8x8xf32>, vector<2x8x8xf32>, vector<2x8x8xf32> -> vector<2x8x8xf32>
    "tpu.trace_stop"() : () -> ()
    %244 = vector.extract_strided_slice %205 {offsets = [0, 16], sizes = [16, 8], strides = [1, 1]} : vector<16x96xf32> to vector<16x8xf32>
    %245 = vector.shape_cast %244 : vector<16x8xf32> to vector<2x8x8xf32>
    %246 = vector.extract_strided_slice %205 {offsets = [0, 48], sizes = [16, 8], strides = [1, 1]} : vector<16x96xf32> to vector<16x8xf32>
    %247 = vector.shape_cast %246 : vector<16x8xf32> to vector<2x8x8xf32>
    %248 = vector.extract_strided_slice %205 {offsets = [0, 80], sizes = [16, 8], strides = [1, 1]} : vector<16x96xf32> to vector<16x8xf32>
    %249 = vector.shape_cast %248 : vector<16x8xf32> to vector<2x8x8xf32>
    "tpu.trace_start"() <{level = 10 : i32, message = "bqd,bkd->bqk"}> : () -> ()
    %cst_83 = arith.constant dense<0.000000e+00> : vector<2x8x8xf32>
    %250 = tpu.matmul %245, %247, %cst_83 {dimension_numbers = #tpu.dot_dimension_numbers<[2], [2], [1], [1], [0, 0, 0, 1, 1, 1], [0], [0]>} : vector<2x8x8xf32>, vector<2x8x8xf32>, vector<2x8x8xf32> -> vector<2x8x8xf32>
    "tpu.trace_stop"() : () -> ()
    %251 = vector.broadcast %34 : vector<2x1x8xf32> to vector<2x8x8xf32>
    %252 = arith.addf %250, %251 : vector<2x8x8xf32>
    %cst_84 = arith.constant dense<0xFF800000> : vector<2x8xf32>
    %253 = vector.multi_reduction <maximumf>, %252, %cst_84 [2] : vector<2x8x8xf32> to vector<2x8xf32>
    %254 = vector.shape_cast %253 : vector<2x8xf32> to vector<2x8x1xf32>
    %255 = vector.broadcast %254 : vector<2x8x1xf32> to vector<2x8x8xf32>
    %256 = arith.subf %252, %255 : vector<2x8x8xf32>
    %257 = math.exp %256 : vector<2x8x8xf32>
    %cst_85 = arith.constant dense<0.000000e+00> : vector<2x8xf32>
    %258 = vector.multi_reduction <add>, %257, %cst_85 [2] : vector<2x8x8xf32> to vector<2x8xf32>
    %259 = vector.shape_cast %258 : vector<2x8xf32> to vector<2x8x1xf32>
    %260 = vector.broadcast %259 : vector<2x8x1xf32> to vector<2x8x8xf32>
    %261 = arith.divf %257, %260 : vector<2x8x8xf32>
    "tpu.trace_start"() <{level = 10 : i32, message = "bqk,bkd->bqd"}> : () -> ()
    %cst_86 = arith.constant dense<0.000000e+00> : vector<2x8x8xf32>
    %262 = tpu.matmul %261, %249, %cst_86 {dimension_numbers = #tpu.dot_dimension_numbers<[2], [1], [1], [2], [0, 0, 0, 1, 1, 2], [0], [0]>} : vector<2x8x8xf32>, vector<2x8x8xf32>, vector<2x8x8xf32> -> vector<2x8x8xf32>
    "tpu.trace_stop"() : () -> ()
    %263 = vector.extract_strided_slice %205 {offsets = [0, 24], sizes = [16, 8], strides = [1, 1]} : vector<16x96xf32> to vector<16x8xf32>
    %264 = vector.shape_cast %263 : vector<16x8xf32> to vector<2x8x8xf32>
    %265 = vector.extract_strided_slice %205 {offsets = [0, 56], sizes = [16, 8], strides = [1, 1]} : vector<16x96xf32> to vector<16x8xf32>
    %266 = vector.shape_cast %265 : vector<16x8xf32> to vector<2x8x8xf32>
    %267 = vector.extract_strided_slice %205 {offsets = [0, 88], sizes = [16, 8], strides = [1, 1]} : vector<16x96xf32> to vector<16x8xf32>
    %268 = vector.shape_cast %267 : vector<16x8xf32> to vector<2x8x8xf32>
    "tpu.trace_start"() <{level = 10 : i32, message = "bqd,bkd->bqk"}> : () -> ()
    %cst_87 = arith.constant dense<0.000000e+00> : vector<2x8x8xf32>
    %269 = tpu.matmul %264, %266, %cst_87 {dimension_numbers = #tpu.dot_dimension_numbers<[2], [2], [1], [1], [0, 0, 0, 1, 1, 1], [0], [0]>} : vector<2x8x8xf32>, vector<2x8x8xf32>, vector<2x8x8xf32> -> vector<2x8x8xf32>
    "tpu.trace_stop"() : () -> ()
    %270 = vector.broadcast %34 : vector<2x1x8xf32> to vector<2x8x8xf32>
    %271 = arith.addf %269, %270 : vector<2x8x8xf32>
    %cst_88 = arith.constant dense<0xFF800000> : vector<2x8xf32>
    %272 = vector.multi_reduction <maximumf>, %271, %cst_88 [2] : vector<2x8x8xf32> to vector<2x8xf32>
    %273 = vector.shape_cast %272 : vector<2x8xf32> to vector<2x8x1xf32>
    %274 = vector.broadcast %273 : vector<2x8x1xf32> to vector<2x8x8xf32>
    %275 = arith.subf %271, %274 : vector<2x8x8xf32>
    %276 = math.exp %275 : vector<2x8x8xf32>
    %cst_89 = arith.constant dense<0.000000e+00> : vector<2x8xf32>
    %277 = vector.multi_reduction <add>, %276, %cst_89 [2] : vector<2x8x8xf32> to vector<2x8xf32>
    %278 = vector.shape_cast %277 : vector<2x8xf32> to vector<2x8x1xf32>
    %279 = vector.broadcast %278 : vector<2x8x1xf32> to vector<2x8x8xf32>
    %280 = arith.divf %276, %279 : vector<2x8x8xf32>
    "tpu.trace_start"() <{level = 10 : i32, message = "bqk,bkd->bqd"}> : () -> ()
    %cst_90 = arith.constant dense<0.000000e+00> : vector<2x8x8xf32>
    %281 = tpu.matmul %280, %268, %cst_90 {dimension_numbers = #tpu.dot_dimension_numbers<[2], [1], [1], [2], [0, 0, 0, 1, 1, 2], [0], [0]>} : vector<2x8x8xf32>, vector<2x8x8xf32>, vector<2x8x8xf32> -> vector<2x8x8xf32>
    "tpu.trace_stop"() : () -> ()
    %282 = tpu.concatenate %224, %243, %262, %281 in 2 : vector<2x8x8xf32>, vector<2x8x8xf32>, vector<2x8x8xf32>, vector<2x8x8xf32> -> vector<2x8x32xf32>
    %283 = vector.shape_cast %282 : vector<2x8x32xf32> to vector<16x32xf32>
    %c1_91 = arith.constant 1 : index
    %c0_92 = arith.constant 0 : index
    %c0_93 = arith.constant 0 : index
    %284 = vector.load %arg5[%c1_91, %c0_92, %c0_93] : memref<2x32x32xf32, #tpu.memory_space<vmem>>, vector<1x32x32xf32>
    %285 = vector.shape_cast %284 : vector<1x32x32xf32> to vector<32x32xf32>
    %cst_94 = arith.constant dense<0.000000e+00> : vector<16x32xf32>
    %286 = tpu.matmul %283, %285, %cst_94 {dimension_numbers = #tpu.dot_dimension_numbers<[1], [0], [0], [1], [0, 0, 1, 1], [], []>} : vector<16x32xf32>, vector<32x32xf32>, vector<16x32xf32> -> vector<16x32xf32>
    %c9 = arith.constant 9 : index
    %c0_95 = arith.constant 0 : index
    %287 = vector.load %arg9[%c9, %c0_95] : memref<19x128xf32, #tpu.memory_space<vmem>>, vector<1x32xf32>
    %288 = vector.broadcast %287 : vector<1x32xf32> to vector<16x32xf32>
    %289 = arith.addf %286, %288 : vector<16x32xf32>
    %290 = arith.addf %199, %289 : vector<16x32xf32>
    %c10 = arith.constant 10 : index
    %c0_96 = arith.constant 0 : index
    %291 = vector.load %arg9[%c10, %c0_96] : memref<19x128xf32, #tpu.memory_space<vmem>>, vector<1x32xf32>
    %c11 = arith.constant 11 : index
    %c0_97 = arith.constant 0 : index
    %292 = vector.load %arg9[%c11, %c0_97] : memref<19x128xf32, #tpu.memory_space<vmem>>, vector<1x32xf32>
    %cst_98 = arith.constant dense<0.000000e+00> : vector<16xf32>
    %293 = vector.multi_reduction <add>, %290, %cst_98 [1] : vector<16x32xf32> to vector<16xf32>
    %294 = vector.shape_cast %293 : vector<16xf32> to vector<16x1xf32>
    %cst_99 = arith.constant 3.200000e+01 : f32
    %295 = vector.broadcast %cst_99 : f32 to vector<16x1xf32>
    %296 = arith.divf %294, %295 : vector<16x1xf32>
    %297 = vector.broadcast %296 : vector<16x1xf32> to vector<16x32xf32>
    %298 = arith.subf %290, %297 : vector<16x32xf32>
    %299 = arith.mulf %298, %298 : vector<16x32xf32>
    %cst_100 = arith.constant dense<0.000000e+00> : vector<16xf32>
    %300 = vector.multi_reduction <add>, %299, %cst_100 [1] : vector<16x32xf32> to vector<16xf32>
    %301 = vector.shape_cast %300 : vector<16xf32> to vector<16x1xf32>
    %cst_101 = arith.constant 3.200000e+01 : f32
    %302 = vector.broadcast %cst_101 : f32 to vector<16x1xf32>
    %303 = arith.divf %301, %302 : vector<16x1xf32>
    %304 = vector.broadcast %296 : vector<16x1xf32> to vector<16x32xf32>
    %305 = arith.subf %290, %304 : vector<16x32xf32>
    %cst_102 = arith.constant 9.99999996E-13 : f32
    %306 = vector.broadcast %cst_102 : f32 to vector<16x1xf32>
    %307 = arith.addf %303, %306 : vector<16x1xf32>
    %308 = math.rsqrt %307 : vector<16x1xf32>
    %309 = vector.broadcast %308 : vector<16x1xf32> to vector<16x32xf32>
    %310 = arith.mulf %305, %309 : vector<16x32xf32>
    %311 = vector.broadcast %291 : vector<1x32xf32> to vector<16x32xf32>
    %312 = arith.mulf %310, %311 : vector<16x32xf32>
    %313 = vector.broadcast %292 : vector<1x32xf32> to vector<16x32xf32>
    %314 = arith.addf %312, %313 : vector<16x32xf32>
    %c1_103 = arith.constant 1 : index
    %c0_104 = arith.constant 0 : index
    %c0_105 = arith.constant 0 : index
    %315 = vector.load %arg6[%c1_103, %c0_104, %c0_105] : memref<2x32x128xf32, #tpu.memory_space<vmem>>, vector<1x32x128xf32>
    %316 = vector.shape_cast %315 : vector<1x32x128xf32> to vector<32x128xf32>
    %cst_106 = arith.constant dense<0.000000e+00> : vector<16x128xf32>
    %317 = tpu.matmul %314, %316, %cst_106 {dimension_numbers = #tpu.dot_dimension_numbers<[1], [0], [0], [1], [0, 0, 1, 1], [], []>} : vector<16x32xf32>, vector<32x128xf32>, vector<16x128xf32> -> vector<16x128xf32>
    %c12 = arith.constant 12 : index
    %c0_107 = arith.constant 0 : index
    %318 = vector.load %arg9[%c12, %c0_107] : memref<19x128xf32, #tpu.memory_space<vmem>>, vector<1x128xf32>
    %319 = vector.broadcast %318 : vector<1x128xf32> to vector<16x128xf32>
    %320 = arith.addf %317, %319 : vector<16x128xf32>
    %cst_108 = arith.constant 5.000000e-01 : f32
    %321 = vector.broadcast %cst_108 : f32 to vector<16x128xf32>
    %322 = arith.mulf %321, %320 : vector<16x128xf32>
    %cst_109 = arith.constant 4.471500e-02 : f32
    %323 = vector.broadcast %cst_109 : f32 to vector<16x128xf32>
    %324 = arith.mulf %323, %320 : vector<16x128xf32>
    %325 = arith.mulf %324, %320 : vector<16x128xf32>
    %326 = arith.mulf %325, %320 : vector<16x128xf32>
    %327 = arith.addf %320, %326 : vector<16x128xf32>
    %cst_110 = arith.constant 0.797884583 : f32
    %328 = vector.broadcast %cst_110 : f32 to vector<16x128xf32>
    %329 = arith.mulf %328, %327 : vector<16x128xf32>
    %330 = math.tanh %329 : vector<16x128xf32>
    %cst_111 = arith.constant 1.000000e+00 : f32
    %331 = vector.broadcast %cst_111 : f32 to vector<16x128xf32>
    %332 = arith.addf %331, %330 : vector<16x128xf32>
    %333 = arith.mulf %322, %332 : vector<16x128xf32>
    %c1_112 = arith.constant 1 : index
    %c0_113 = arith.constant 0 : index
    %c0_114 = arith.constant 0 : index
    %334 = vector.load %arg7[%c1_112, %c0_113, %c0_114] : memref<2x128x32xf32, #tpu.memory_space<vmem>>, vector<1x128x32xf32>
    %335 = vector.shape_cast %334 : vector<1x128x32xf32> to vector<128x32xf32>
    %cst_115 = arith.constant dense<0.000000e+00> : vector<16x32xf32>
    %336 = tpu.matmul %333, %335, %cst_115 {dimension_numbers = #tpu.dot_dimension_numbers<[1], [0], [0], [1], [0, 0, 1, 1], [], []>} : vector<16x128xf32>, vector<128x32xf32>, vector<16x32xf32> -> vector<16x32xf32>
    %c13 = arith.constant 13 : index
    %c0_116 = arith.constant 0 : index
    %337 = vector.load %arg9[%c13, %c0_116] : memref<19x128xf32, #tpu.memory_space<vmem>>, vector<1x32xf32>
    %338 = vector.broadcast %337 : vector<1x32xf32> to vector<16x32xf32>
    %339 = arith.addf %336, %338 : vector<16x32xf32>
    %340 = arith.addf %314, %339 : vector<16x32xf32>
    %c14 = arith.constant 14 : index
    %c0_117 = arith.constant 0 : index
    %341 = vector.load %arg9[%c14, %c0_117] : memref<19x128xf32, #tpu.memory_space<vmem>>, vector<1x32xf32>
    %c15 = arith.constant 15 : index
    %c0_118 = arith.constant 0 : index
    %342 = vector.load %arg9[%c15, %c0_118] : memref<19x128xf32, #tpu.memory_space<vmem>>, vector<1x32xf32>
    %cst_119 = arith.constant dense<0.000000e+00> : vector<16xf32>
    %343 = vector.multi_reduction <add>, %340, %cst_119 [1] : vector<16x32xf32> to vector<16xf32>
    %344 = vector.shape_cast %343 : vector<16xf32> to vector<16x1xf32>
    %cst_120 = arith.constant 3.200000e+01 : f32
    %345 = vector.broadcast %cst_120 : f32 to vector<16x1xf32>
    %346 = arith.divf %344, %345 : vector<16x1xf32>
    %347 = vector.broadcast %346 : vector<16x1xf32> to vector<16x32xf32>
    %348 = arith.subf %340, %347 : vector<16x32xf32>
    %349 = arith.mulf %348, %348 : vector<16x32xf32>
    %cst_121 = arith.constant dense<0.000000e+00> : vector<16xf32>
    %350 = vector.multi_reduction <add>, %349, %cst_121 [1] : vector<16x32xf32> to vector<16xf32>
    %351 = vector.shape_cast %350 : vector<16xf32> to vector<16x1xf32>
    %cst_122 = arith.constant 3.200000e+01 : f32
    %352 = vector.broadcast %cst_122 : f32 to vector<16x1xf32>
    %353 = arith.divf %351, %352 : vector<16x1xf32>
    %354 = vector.broadcast %346 : vector<16x1xf32> to vector<16x32xf32>
    %355 = arith.subf %340, %354 : vector<16x32xf32>
    %cst_123 = arith.constant 9.99999996E-13 : f32
    %356 = vector.broadcast %cst_123 : f32 to vector<16x1xf32>
    %357 = arith.addf %353, %356 : vector<16x1xf32>
    %358 = math.rsqrt %357 : vector<16x1xf32>
    %359 = vector.broadcast %358 : vector<16x1xf32> to vector<16x32xf32>
    %360 = arith.mulf %355, %359 : vector<16x32xf32>
    %361 = vector.broadcast %341 : vector<1x32xf32> to vector<16x32xf32>
    %362 = arith.mulf %360, %361 : vector<16x32xf32>
    %363 = vector.broadcast %342 : vector<1x32xf32> to vector<16x32xf32>
    %364 = arith.addf %362, %363 : vector<16x32xf32>
    %365 = vector.extract_strided_slice %364 {offsets = [0, 0], sizes = [1, 32], strides = [1, 1]} : vector<16x32xf32> to vector<1x32xf32>
    %366 = vector.extract_strided_slice %364 {offsets = [8, 0], sizes = [1, 32], strides = [1, 1]} : vector<16x32xf32> to vector<1x32xf32>
    %367 = tpu.concatenate %365, %366 in 0 : vector<1x32xf32>, vector<1x32xf32> -> vector<2x32xf32>
    %c0_124 = arith.constant 0 : index
    %c0_125 = arith.constant 0 : index
    %368 = vector.load %arg8[%c0_124, %c0_125] : memref<32x128xf32, #tpu.memory_space<vmem>>, vector<32x128xf32>
    %cst_126 = arith.constant dense<0.000000e+00> : vector<2x128xf32>
    %369 = tpu.matmul %367, %368, %cst_126 {dimension_numbers = #tpu.dot_dimension_numbers<[1], [0], [0], [1], [0, 0, 1, 1], [], []>} : vector<2x32xf32>, vector<32x128xf32>, vector<2x128xf32> -> vector<2x128xf32>
    %c18 = arith.constant 18 : index
    %c0_127 = arith.constant 0 : index
    %370 = vector.load %arg9[%c18, %c0_127] : memref<19x128xf32, #tpu.memory_space<vmem>>, vector<1x128xf32>
    %371 = vector.broadcast %370 : vector<1x128xf32> to vector<2x128xf32>
    %372 = arith.addf %369, %371 : vector<2x128xf32>
    %c0_128 = arith.constant 0 : index
    %c0_129 = arith.constant 0 : index
    %373 = vector.load %arg10[%c0_128, %c0_129] : memref<2x128xf32, #tpu.memory_space<vmem>>, vector<2x128xf32>
    tpu.vector_store %arg10[%c0_128, %c0_129], %372 {strides = array<i32>} : memref<2x128xf32, #tpu.memory_space<vmem>>, vector<2x128xf32>,
    return
  }
}

</mosaic_0001>

<llo_original>
// kernel: bert_difficulty_classifier.1
$region0: #{bert_difficulty_classifier.1}
  #allocation0 [shape = 'u32[]', space=smem, size = 0x4, offset = 0x4, fixed_abs, tag = 'smem constant byte address 0x4 - core index']
  #allocation1 [shape = 'u32[144,128]{1,0:T(1,128)}', space=vmem, size = 0x12000, scoped, tag = 'internal scratch']
  %s0 = inlined_call_operand.vmem [shape: s32[16,1], index: 0, kind: input, shape index: {}]
  %s1 = inlined_call_operand.vmem [shape: f32[2,1,8], index: 1, kind: input, shape index: {}]
  %s2 = inlined_call_operand.vmem [shape: f32[64,32], index: 2, kind: input, shape index: {}]
  %s3 = inlined_call_operand.vmem [shape: f32[16,32], index: 3, kind: input, shape index: {}]
  %s4 = inlined_call_operand.vmem [shape: f32[2,32,96], index: 4, kind: input, shape index: {}]
  %s5 = inlined_call_operand.vmem [shape: f32[2,32,32], index: 5, kind: input, shape index: {}]
  %s6 = inlined_call_operand.vmem [shape: f32[2,32,128], index: 6, kind: input, shape index: {}]
  %s7 = inlined_call_operand.vmem [shape: f32[2,128,32], index: 7, kind: input, shape index: {}]
  %s8 = inlined_call_operand.vmem [shape: f32[32,128], index: 8, kind: input, shape index: {}]
  %s9 = inlined_call_operand.vmem [shape: f32[19,128], index: 9, kind: input, shape index: {}]
  %s10 = inlined_call_operand.hbm [shape: f32[2,128], index: 10, kind: output, shape index: {}]
  %s11 = sld [smem:[#allocation0]]
  $region50: #{bert_difficulty_classifier.1} parent=0
    _
  %s13 = ssub.s32 1, %s11
  %s14 = scalar_select 0, %s13, %s11
  $region1: #{bert_difficulty_classifier.1} parent=0
    #allocation2 [shape = 'u8[1024]{0}', space=vmem, size = 0x400, scoped, tag = 'output window, operand 0, single buffered']
    #allocation3 [shape = 's32[1]{0}', space=sflag, size = 0x4, scoped, tag = 'scoped memory for bert_difficulty_classifier.1']
    %15 = vsyncpa [#allocation3], 0
    // Predicated region
    $region2: #{bert_difficulty_classifier.1} parent=1 // pred_check
      _
    $region3: #{bert_difficulty_classifier.1} parent=1 // pred_check_branch
      %17 = sbr.rel (0) target = $region5
    $region4: #{bert_difficulty_classifier.1} parent=1 // pred_region
      _
    $region5: #{bert_difficulty_classifier.1} parent=1 // pred_fallthru
      _
    // Predicated region
    $region6: #{bert_difficulty_classifier.1} parent=1 // pred_check
      _
    $region7: #{bert_difficulty_classifier.1} parent=1 // pred_check_branch
      %19 = sbr.rel (0) target = $region9
    $region8: #{bert_difficulty_classifier.1} parent=1 // pred_region
      _
    $region9: #{bert_difficulty_classifier.1} parent=1 // pred_fallthru
      _
    // Predicated region
    $region10: #{bert_difficulty_classifier.1} parent=1 // pred_check
      _
    $region11: #{bert_difficulty_classifier.1} parent=1 // pred_check_branch
      %21 = sbr.rel (0) target = $region13
    $region12: #{bert_difficulty_classifier.1} parent=1 // pred_region
      _
    $region13: #{bert_difficulty_classifier.1} parent=1 // pred_fallthru
      _
    // Predicated region
    $region14: #{bert_difficulty_classifier.1} parent=1 // pred_check
      _
    $region15: #{bert_difficulty_classifier.1} parent=1 // pred_check_branch
      %23 = sbr.rel (0) target = $region17
    $region16: #{bert_difficulty_classifier.1} parent=1 // pred_region
      _
    $region17: #{bert_difficulty_classifier.1} parent=1 // pred_fallthru
      _
    // Predicated region
    $region18: #{bert_difficulty_classifier.1} parent=1 // pred_check
      _
    $region19: #{bert_difficulty_classifier.1} parent=1 // pred_check_branch
      %25 = sbr.rel (0) target = $region21
    $region20: #{bert_difficulty_classifier.1} parent=1 // pred_region
      _
    $region21: #{bert_difficulty_classifier.1} parent=1 // pred_fallthru
      _
    // Predicated region
    $region22: #{bert_difficulty_classifier.1} parent=1 // pred_check
      _
    $region23: #{bert_difficulty_classifier.1} parent=1 // pred_check_branch
      %27 = sbr.rel (0) target = $region25
    $region24: #{bert_difficulty_classifier.1} parent=1 // pred_region
      _
    $region25: #{bert_difficulty_classifier.1} parent=1 // pred_fallthru
      _
    // Predicated region
    $region26: #{bert_difficulty_classifier.1} parent=1 // pred_check
      _
    $region27: #{bert_difficulty_classifier.1} parent=1 // pred_check_branch
      %29 = sbr.rel (0) target = $region29
    $region28: #{bert_difficulty_classifier.1} parent=1 // pred_region
      _
    $region29: #{bert_difficulty_classifier.1} parent=1 // pred_fallthru
      _
    // Predicated region
    $region30: #{bert_difficulty_classifier.1} parent=1 // pred_check
      _
    $region31: #{bert_difficulty_classifier.1} parent=1 // pred_check_branch
      %31 = sbr.rel (0) target = $region33
    $region32: #{bert_difficulty_classifier.1} parent=1 // pred_region
      _
    $region33: #{bert_difficulty_classifier.1} parent=1 // pred_fallthru
      _
    // Predicated region
    $region34: #{bert_difficulty_classifier.1} parent=1 // pred_check
      _
    $region35: #{bert_difficulty_classifier.1} parent=1 // pred_check_branch
      %33 = sbr.rel (0) target = $region37
    $region36: #{bert_difficulty_classifier.1} parent=1 // pred_region
      _
    $region37: #{bert_difficulty_classifier.1} parent=1 // pred_fallthru
      _
    // Predicated region
    $region38: #{bert_difficulty_classifier.1} parent=1 // pred_check
      _
    $region39: #{bert_difficulty_classifier.1} parent=1 // pred_check_branch
      %35 = sbr.rel (0) target = $region41
    $region40: #{bert_difficulty_classifier.1} parent=1 // pred_region
      _
    $region41: #{bert_difficulty_classifier.1} parent=1 // pred_fallthru
      _
    %v36 = vld [vmem:[%s0] sm:$0xff]
    %v37 = vld [vmem:[%s0 + $0x8] sm:$0xff]
    %v38 = vlaneseq
    %v39 = vand.u32 %v38, 127
    %40 = vset.pattern.permute.xlu0 0
    %41 = vperm.xlu0 %40, %v36
    %v42 = vpop.permute.xlu0 %41
    %43 = vset.pattern.permute.xlu0 0
    %44 = vperm.xlu0 %43, %v37
    %v45 = vpop.permute.xlu0 %44
    %vm46 = vcmp.eq.s32.totalorder %v39, %v42
    %vm47 = vcmp.eq.s32.totalorder %v39, %v45
    %v48 = vsel %vm46, 1, 0
    %v49 = vsel %vm47, 1, 0
    %v50 = vcvt.s32.f32 %v48
    %v51 = vcvt.s32.f32 %v49
    %v52 = vld [vmem:[%s2] sm:$0xff]
    %v53 = vld [vmem:[%s2 + $0x8] sm:$0xff]
    %v54 = vld [vmem:[%s2 + $0x10] sm:$0xff]
    %v55 = vld [vmem:[%s2 + $0x18] sm:$0xff]
    %v56 = vld [vmem:[%s2 + $0x20] sm:$0xff]
    %v57 = vld [vmem:[%s2 + $0x28] sm:$0xff]
    %v58 = vld [vmem:[%s2 + $0x30] sm:$0xff]
    %v59 = vld [vmem:[%s2 + $0x38] sm:$0xff]
    %v60 = vld [vmem:[%s3] sm:$0xff]
    %v61 = vld [vmem:[%s3 + $0x8] sm:$0xff]
    %vm62 = vcmask 523264
    %v64 = vsel %vm62, %v50, 0
    %v67 = vsel %vm62, %v51, 0
    %69 = vmatprep.subr.mxu0 0.0
    %70 = vmatpush1.msra.mxu0 0.0
    %71 = vmatprep.subr.mxu0 0.0
    %72 = vmatpush1.msra.mxu0 0.0
    %73 = vmatprep.subr.mxu0 0.0
    %74 = vmatpush1.msra.mxu0 0.0
    %75 = vmatprep.subr.mxu0 0.0
    %76 = vmatpush1.msra.mxu0 0.0
    %77 = vmatprep.subr.mxu0 0.0
    %78 = vmatpush1.msra.mxu0 0.0
    %79 = vmatprep.subr.mxu0 0.0
    %80 = vmatpush1.msra.mxu0 0.0
    %81 = vmatprep.subr.mxu0 0.0
    %82 = vmatpush1.msra.mxu0 0.0
    %83 = vmatprep.subr.mxu0 0.0
    %84 = vmatpush1.msra.mxu0 0.0
    %85 = vmatprep.subr.mxu0 0.0
    %86 = vmatpush1.msra.mxu0 %v59
    %87 = vmatprep.subr.mxu0 0.0
    %88 = vmatpush1.msra.mxu0 %v58
    %89 = vmatprep.subr.mxu0 0.0
    %90 = vmatpush1.msra.mxu0 %v57
    %91 = vmatprep.subr.mxu0 0.0
    %92 = vmatpush1.msra.mxu0 %v56
    %93 = vmatprep.subr.mxu0 0.0
    %94 = vmatpush1.msra.mxu0 %v55
    %95 = vmatprep.subr.mxu0 0.0
    %96 = vmatpush1.msra.mxu0 %v54
    %97 = vmatprep.subr.mxu0 0.0
    %98 = vmatpush1.msra.mxu0 %v53
    %99 = vmatprep.subr.mxu0 0.0
    %100 = vmatpush1.msra.mxu0 %v52
    %101 = vmatprep.subr.mxu0 0.0
    %102 = vmatpush2.msra.mxu0 0.0
    %103 = vmatprep.subr.mxu0 0.0
    %104 = vmatpush2.msra.mxu0 0.0
    %105 = vmatprep.subr.mxu0 0.0
    %106 = vmatpush2.msra.mxu0 0.0
    %107 = vmatprep.subr.mxu0 0.0
    %108 = vmatpush2.msra.mxu0 0.0
    %109 = vmatprep.subr.mxu0 0.0
    %110 = vmatpush2.msra.mxu0 0.0
    %111 = vmatprep.subr.mxu0 0.0
    %112 = vmatpush2.msra.mxu0 0.0
    %113 = vmatprep.subr.mxu0 0.0
    %114 = vmatpush2.msra.mxu0 0.0
    %115 = vmatprep.subr.mxu0 0.0
    %116 = vmatpush2.msra.mxu0 0.0
    %117 = vmatprep.subr.mxu0 0.0
    %118 = vmatpush2.msra.mxu0 0.0
    %119 = vmatprep.subr.mxu0 0.0
    %120 = vmatpush2.msra.mxu0 0.0
    %121 = vmatprep.subr.mxu0 0.0
    %122 = vmatpush2.msra.mxu0 0.0
    %123 = vmatprep.subr.mxu0 0.0
    %124 = vmatpush2.msra.mxu0 0.0
    %125 = vmatprep.subr.mxu0 0.0
    %126 = vmatpush2.msra.mxu0 0.0
    %127 = vmatprep.subr.mxu0 0.0
    %128 = vmatpush2.msra.mxu0 0.0
    %129 = vmatprep.subr.mxu0 0.0
    %130 = vmatpush2.msra.mxu0 0.0
    %131 = vmatprep.subr.mxu0 0.0
    %132 = vmatpush2.msra.mxu0 0.0
    %133 = vmatprep.mubr.f32.mxu0 0.0
    %134 = vmatmul.mubr.f32.gmra.mxu0 %v64
    %v135 = vpop.f32.mrf.mxu0
    %v136 = vadd.f32 %v60, %v135
    %v137 = vpop.f32.mrf.mxu0
    %138 = vmatprep.mubr.f32.mxu0 0.0
    %139 = vmatmul.mubr.f32.gmra.mxu0 %v67
    %v140 = vpop.f32.mrf.mxu0
    %v141 = vadd.f32 %v61, %v140
    %v142 = vpop.f32.mrf.mxu0
    %143 = vdwg.mxu0
    %v144 = vld [vmem:[%s9 + $0x10] sm:$0x1]
    %v145 = vld [vmem:[%s9 + $0x11] sm:$0x1]
    %vm146 = vcmask 261120
    %v147 = vsel %vm146, %v136, 0.0
    %148 = vadd.xlane.f32.xlu0 %v147
    %v149 = vpop.xlane.xlu0 %148
    %v150 = vsel %vm146, %v141, 0.0
    %151 = vadd.xlane.f32.xlu0 %v150
    %v152 = vpop.xlane.xlu0 %151
    %v153 = vrcp.pop 32.0
    %v154 = vmul.f32 %v149, %v153
    %v155 = vmul.f32 %v152, %v153
    %v156 = vsub.f32 %v136, %v154
    %v157 = vsub.f32 %v141, %v155
    %v158 = vmul.f32 %v156, %v156
    %v159 = vmul.f32 %v157, %v157
    %v160 = vsel %vm146, %v158, 0.0
    %161 = vadd.xlane.f32.xlu0 %v160
    %v162 = vpop.xlane.xlu0 %161
    %v163 = vsel %vm146, %v159, 0.0
    %164 = vadd.xlane.f32.xlu0 %v163
    %v165 = vpop.xlane.xlu0 %164
    %v166 = vmul.f32 %v162, %v153
    %v167 = vmul.f32 %v165, %v153
    %v168 = vadd.f32 %v166, 1e-12
    %v169 = vadd.f32 %v167, 1e-12
    %v170 = vrsqrt.pop %v168
    %v171 = vrsqrt.pop %v169
    %v172 = vmul.f32 %v156, %v170
    %v173 = vmul.f32 %v157, %v171
    %v174 = vlaneseq
    %v175 = vshrl.u32 %v174, 7
    %v176 = vsub.s32 0, %v175
    %v177 = vrot.slane %v144, %v176
    %v178 = vmul.f32 %v172, %v177
    %v179 = vmul.f32 %v173, %v177
    %v180 = vlaneseq
    %v181 = vshrl.u32 %v180, 7
    %v182 = vsub.s32 0, %v181
    %v183 = vrot.slane %v145, %v182
    %v184 = vadd.f32 %v178, %v183
    %v185 = vadd.f32 %v179, %v183
    %v186 = vld [vmem:[%s1] sm:$0x1]
    %v187 = vld [vmem:[%s1 + $0x1] sm:$0x1]
    %v188 = vld [vmem:[%s4] sm:$0xff]
    %v189 = vld [vmem:[%s4 + $0x8] sm:$0xff]
    %v190 = vld [vmem:[%s4 + $0x10] sm:$0xff]
    %v191 = vld [vmem:[%s4 + $0x18] sm:$0xff]
    %v192 = vld [vmem:[%s9] sm:$0x1]
    %v193 = vlaneseq
    %v194 = vshrl.u32 %v193, 7
    %v195 = vsub.s32 0, %v194
    %v196 = vrot.slane %v192, %v195
    %v198 = vsel %vm146, %v184, 0
    %v201 = vsel %vm146, %v185, 0
    %203 = vmatprep.subr.mxu0 0.0
    %204 = vmatpush1.msra.mxu0 0.0
    %205 = vmatprep.subr.mxu0 0.0
    %206 = vmatpush1.msra.mxu0 0.0
    %207 = vmatprep.subr.mxu0 0.0
    %208 = vmatpush1.msra.mxu0 0.0
    %209 = vmatprep.subr.mxu0 0.0
    %210 = vmatpush1.msra.mxu0 0.0
    %211 = vmatprep.subr.mxu0 0.0
    %212 = vmatpush1.msra.mxu0 0.0
    %213 = vmatprep.subr.mxu0 0.0
    %214 = vmatpush1.msra.mxu0 0.0
    %215 = vmatprep.subr.mxu0 0.0
    %216 = vmatpush1.msra.mxu0 0.0
    %217 = vmatprep.subr.mxu0 0.0
    %218 = vmatpush1.msra.mxu0 0.0
    %219 = vmatprep.subr.mxu0 0.0
    %220 = vmatpush1.msra.mxu0 0.0
    %221 = vmatprep.subr.mxu0 0.0
    %222 = vmatpush1.msra.mxu0 0.0
    %223 = vmatprep.subr.mxu0 0.0
    %224 = vmatpush1.msra.mxu0 0.0
    %225 = vmatprep.subr.mxu0 0.0
    %226 = vmatpush1.msra.mxu0 0.0
    %227 = vmatprep.subr.mxu0 0.0
    %228 = vmatpush1.msra.mxu0 %v191
    %229 = vmatprep.subr.mxu0 0.0
    %230 = vmatpush1.msra.mxu0 %v190
    %231 = vmatprep.subr.mxu0 0.0
    %232 = vmatpush1.msra.mxu0 %v189
    %233 = vmatprep.subr.mxu0 0.0
    %234 = vmatpush1.msra.mxu0 %v188
    %235 = vmatprep.subr.mxu0 0.0
    %236 = vmatpush2.msra.mxu0 0.0
    %237 = vmatprep.subr.mxu0 0.0
    %238 = vmatpush2.msra.mxu0 0.0
    %239 = vmatprep.subr.mxu0 0.0
    %240 = vmatpush2.msra.mxu0 0.0
    %241 = vmatprep.subr.mxu0 0.0
    %242 = vmatpush2.msra.mxu0 0.0
    %243 = vmatprep.subr.mxu0 0.0
    %244 = vmatpush2.msra.mxu0 0.0
    %245 = vmatprep.subr.mxu0 0.0
    %246 = vmatpush2.msra.mxu0 0.0
    %247 = vmatprep.subr.mxu0 0.0
    %248 = vmatpush2.msra.mxu0 0.0
    %249 = vmatprep.subr.mxu0 0.0
    %250 = vmatpush2.msra.mxu0 0.0
    %251 = vmatprep.subr.mxu0 0.0
    %252 = vmatpush2.msra.mxu0 0.0
    %253 = vmatprep.subr.mxu0 0.0
    %254 = vmatpush2.msra.mxu0 0.0
    %255 = vmatprep.subr.mxu0 0.0
    %256 = vmatpush2.msra.mxu0 0.0
    %257 = vmatprep.subr.mxu0 0.0
    %258 = vmatpush2.msra.mxu0 0.0
    %259 = vmatprep.subr.mxu0 0.0
    %260 = vmatpush2.msra.mxu0 0.0
    %261 = vmatprep.subr.mxu0 0.0
    %262 = vmatpush2.msra.mxu0 0.0
    %263 = vmatprep.subr.mxu0 0.0
    %264 = vmatpush2.msra.mxu0 0.0
    %265 = vmatprep.subr.mxu0 0.0
    %266 = vmatpush2.msra.mxu0 0.0
    %267 = vmatprep.mubr.f32.mxu0 0.0
    %268 = vmatmul.mubr.f32.gmra.mxu0 %v198
    %v269 = vpop.f32.mrf.mxu0
    %v270 = vadd.f32 %v196, %v269
    %v271 = vpop.f32.mrf.mxu0
    %272 = vmatprep.mubr.f32.mxu0 0.0
    %273 = vmatmul.mubr.f32.gmra.mxu0 %v201
    %v274 = vpop.f32.mrf.mxu0
    %v275 = vadd.f32 %v196, %v274
    %v276 = vpop.f32.mrf.mxu0
    %277 = vdwg.mxu0
    %v280 = vlaneseq
    %v281 = vshrl.u32 %v280, 7
    %v282 = vsub.s32 0, %v281
    %v283 = vrot.slane %v186, %v282
    %v284 = vlaneseq
    %v285 = vshrl.u32 %v284, 7
    %v286 = vsub.s32 0, %v285
    %v287 = vrot.slane %v187, %v286
    %291 = vrot.lane.b32.xlu0 %v270, 96
    %v292 = vpop.permute.xlu0 %291
    %vm293 = vcmask 64512
    %v294 = vsel %vm293, %v270, 0
    %v296 = vsel %vm293, %v292, 0
    %298 = vmatprep.subr.mxu0 0.0
    %299 = vmatpush1.xpose.msra.mxu0 0.0
    %300 = vmatprep.subr.mxu0 0.0
    %301 = vmatpush1.xpose.msra.mxu0 0.0
    %302 = vmatprep.subr.mxu0 0.0
    %303 = vmatpush1.xpose.msra.mxu0 0.0
    %304 = vmatprep.subr.mxu0 0.0
    %305 = vmatpush1.xpose.msra.mxu0 0.0
    %306 = vmatprep.subr.mxu0 0.0
    %307 = vmatpush1.xpose.msra.mxu0 0.0
    %308 = vmatprep.subr.mxu0 0.0
    %309 = vmatpush1.xpose.msra.mxu0 0.0
    %310 = vmatprep.subr.mxu0 0.0
    %311 = vmatpush1.xpose.msra.mxu0 0.0
    %312 = vmatprep.subr.mxu0 0.0
    %313 = vmatpush1.xpose.msra.mxu0 0.0
    %314 = vmatprep.subr.mxu0 0.0
    %315 = vmatpush1.xpose.msra.mxu0 0.0
    %316 = vmatprep.subr.mxu0 0.0
    %317 = vmatpush1.xpose.msra.mxu0 0.0
    %318 = vmatprep.subr.mxu0 0.0
    %319 = vmatpush1.xpose.msra.mxu0 0.0
    %320 = vmatprep.subr.mxu0 0.0
    %321 = vmatpush1.xpose.msra.mxu0 0.0
    %322 = vmatprep.subr.mxu0 0.0
    %323 = vmatpush1.xpose.msra.mxu0 0.0
    %324 = vmatprep.subr.mxu0 0.0
    %325 = vmatpush1.xpose.msra.mxu0 0.0
    %326 = vmatprep.subr.mxu0 0.0
    %327 = vmatpush1.xpose.msra.mxu0 0.0
    %328 = vmatprep.subr.mxu0 0.0
    %329 = vmatpush1.xpose.msra.mxu0 %v296
    %330 = vmatprep.subr.mxu0 0.0
    %331 = vmatpush2.xpose.msra.mxu0 0.0
    %332 = vmatprep.subr.mxu0 0.0
    %333 = vmatpush2.xpose.msra.mxu0 0.0
    %334 = vmatprep.subr.mxu0 0.0
    %335 = vmatpush2.xpose.msra.mxu0 0.0
    %336 = vmatprep.subr.mxu0 0.0
    %337 = vmatpush2.xpose.msra.mxu0 0.0
    %338 = vmatprep.subr.mxu0 0.0
    %339 = vmatpush2.xpose.msra.mxu0 0.0
    %340 = vmatprep.subr.mxu0 0.0
    %341 = vmatpush2.xpose.msra.mxu0 0.0
    %342 = vmatprep.subr.mxu0 0.0
    %343 = vmatpush2.xpose.msra.mxu0 0.0
    %344 = vmatprep.subr.mxu0 0.0
    %345 = vmatpush2.xpose.msra.mxu0 0.0
    %346 = vmatprep.subr.mxu0 0.0
    %347 = vmatpush2.xpose.msra.mxu0 0.0
    %348 = vmatprep.subr.mxu0 0.0
    %349 = vmatpush2.xpose.msra.mxu0 0.0
    %350 = vmatprep.subr.mxu0 0.0
    %351 = vmatpush2.xpose.msra.mxu0 0.0
    %352 = vmatprep.subr.mxu0 0.0
    %353 = vmatpush2.xpose.msra.mxu0 0.0
    %354 = vmatprep.subr.mxu0 0.0
    %355 = vmatpush2.xpose.msra.mxu0 0.0
    %356 = vmatprep.subr.mxu0 0.0
    %357 = vmatpush2.xpose.msra.mxu0 0.0
    %358 = vmatprep.subr.mxu0 0.0
    %359 = vmatpush2.xpose.msra.mxu0 0.0
    %360 = vmatprep.subr.mxu0 0.0
    %361 = vmatpush2.xpose.msra.mxu0 0.0
    %362 = vmatprep.mubr.f32.mxu0 0.0
    %363 = vmatmul.mubr.f32.gmra.mxu0 %v294
    %v364 = vpop.f32.mrf.mxu0
    %v365 = vadd.f32 %v283, %v364
    %v366 = vpop.f32.mrf.mxu0
    %367 = vdwg.mxu0
    %369 = vrot.lane.b32.xlu0 %v275, 96
    %v370 = vpop.permute.xlu0 %369
    %v371 = vsel %vm293, %v275, 0
    %v373 = vsel %vm293, %v370, 0
    %375 = vmatprep.subr.mxu0 0.0
    %376 = vmatpush1.xpose.msra.mxu0 0.0
    %377 = vmatprep.subr.mxu0 0.0
    %378 = vmatpush1.xpose.msra.mxu0 0.0
    %379 = vmatprep.subr.mxu0 0.0
    %380 = vmatpush1.xpose.msra.mxu0 0.0
    %381 = vmatprep.subr.mxu0 0.0
    %382 = vmatpush1.xpose.msra.mxu0 0.0
    %383 = vmatprep.subr.mxu0 0.0
    %384 = vmatpush1.xpose.msra.mxu0 0.0
    %385 = vmatprep.subr.mxu0 0.0
    %386 = vmatpush1.xpose.msra.mxu0 0.0
    %387 = vmatprep.subr.mxu0 0.0
    %388 = vmatpush1.xpose.msra.mxu0 0.0
    %389 = vmatprep.subr.mxu0 0.0
    %390 = vmatpush1.xpose.msra.mxu0 0.0
    %391 = vmatprep.subr.mxu0 0.0
    %392 = vmatpush1.xpose.msra.mxu0 0.0
    %393 = vmatprep.subr.mxu0 0.0
    %394 = vmatpush1.xpose.msra.mxu0 0.0
    %395 = vmatprep.subr.mxu0 0.0
    %396 = vmatpush1.xpose.msra.mxu0 0.0
    %397 = vmatprep.subr.mxu0 0.0
    %398 = vmatpush1.xpose.msra.mxu0 0.0
    %399 = vmatprep.subr.mxu0 0.0
    %400 = vmatpush1.xpose.msra.mxu0 0.0
    %401 = vmatprep.subr.mxu0 0.0
    %402 = vmatpush1.xpose.msra.mxu0 0.0
    %403 = vmatprep.subr.mxu0 0.0
    %404 = vmatpush1.xpose.msra.mxu0 0.0
    %405 = vmatprep.subr.mxu0 0.0
    %406 = vmatpush1.xpose.msra.mxu0 %v373
    %407 = vmatprep.subr.mxu0 0.0
    %408 = vmatpush2.xpose.msra.mxu0 0.0
    %409 = vmatprep.subr.mxu0 0.0
    %410 = vmatpush2.xpose.msra.mxu0 0.0
    %411 = vmatprep.subr.mxu0 0.0
    %412 = vmatpush2.xpose.msra.mxu0 0.0
    %413 = vmatprep.subr.mxu0 0.0
    %414 = vmatpush2.xpose.msra.mxu0 0.0
    %415 = vmatprep.subr.mxu0 0.0
    %416 = vmatpush2.xpose.msra.mxu0 0.0
    %417 = vmatprep.subr.mxu0 0.0
    %418 = vmatpush2.xpose.msra.mxu0 0.0
    %419 = vmatprep.subr.mxu0 0.0
    %420 = vmatpush2.xpose.msra.mxu0 0.0
    %421 = vmatprep.subr.mxu0 0.0
    %422 = vmatpush2.xpose.msra.mxu0 0.0
    %423 = vmatprep.subr.mxu0 0.0
    %424 = vmatpush2.xpose.msra.mxu0 0.0
    %425 = vmatprep.subr.mxu0 0.0
    %426 = vmatpush2.xpose.msra.mxu0 0.0
    %427 = vmatprep.subr.mxu0 0.0
    %428 = vmatpush2.xpose.msra.mxu0 0.0
    %429 = vmatprep.subr.mxu0 0.0
    %430 = vmatpush2.xpose.msra.mxu0 0.0
    %431 = vmatprep.subr.mxu0 0.0
    %432 = vmatpush2.xpose.msra.mxu0 0.0
    %433 = vmatprep.subr.mxu0 0.0
    %434 = vmatpush2.xpose.msra.mxu0 0.0
    %435 = vmatprep.subr.mxu0 0.0
    %436 = vmatpush2.xpose.msra.mxu0 0.0
    %437 = vmatprep.subr.mxu0 0.0
    %438 = vmatpush2.xpose.msra.mxu0 0.0
    %439 = vmatprep.mubr.f32.mxu0 0.0
    %440 = vmatmul.mubr.f32.gmra.mxu0 %v371
    %v441 = vpop.f32.mrf.mxu0
    %v442 = vadd.f32 %v287, %v441
    %v443 = vpop.f32.mrf.mxu0
    %444 = vdwg.mxu0
    %v445 = vsel %vm293, %v365, -inf
    %446 = vmax.xlane.f32.xlu0 %v445
    %v447 = vpop.xlane.xlu0 %446
    %v448 = vsel %vm293, %v442, -inf
    %449 = vmax.xlane.f32.xlu0 %v448
    %v450 = vpop.xlane.xlu0 %449
    %v451 = vsub.f32 %v365, %v447
    %v452 = vsub.f32 %v442, %v450
    %v453 = vmul.f32 %v451, 1.442695
    %v454 = vpow.pop %v453
    %v455 = vmul.f32 %v452, 1.442695
    %v456 = vpow.pop %v455
    %v457 = vsel %vm293, %v454, 0.0
    %458 = vadd.xlane.f32.xlu0 %v457
    %v459 = vpop.xlane.xlu0 %458
    %v460 = vsel %vm293, %v456, 0.0
    %461 = vadd.xlane.f32.xlu0 %v460
    %v462 = vpop.xlane.xlu0 %461
    %v463 = vrcp.pop %v459
    %v464 = vmul.f32 %v454, %v463
    %v465 = vrcp.pop %v462
    %v466 = vmul.f32 %v456, %v465
    %467 = vrot.lane.b32.xlu0 %v270, 64
    %v468 = vpop.permute.xlu0 %467
    %v471 = vsel %vm293, %v464, 0
    %473 = vmatprep.subr.mxu0 0.0
    %474 = vmatpush1.msra.mxu0 0.0
    %475 = vmatprep.subr.mxu0 0.0
    %476 = vmatpush1.msra.mxu0 0.0
    %477 = vmatprep.subr.mxu0 0.0
    %478 = vmatpush1.msra.mxu0 0.0
    %479 = vmatprep.subr.mxu0 0.0
    %480 = vmatpush1.msra.mxu0 0.0
    %481 = vmatprep.subr.mxu0 0.0
    %482 = vmatpush1.msra.mxu0 0.0
    %483 = vmatprep.subr.mxu0 0.0
    %484 = vmatpush1.msra.mxu0 0.0
    %485 = vmatprep.subr.mxu0 0.0
    %486 = vmatpush1.msra.mxu0 0.0
    %487 = vmatprep.subr.mxu0 0.0
    %488 = vmatpush1.msra.mxu0 0.0
    %489 = vmatprep.subr.mxu0 0.0
    %490 = vmatpush1.msra.mxu0 0.0
    %491 = vmatprep.subr.mxu0 0.0
    %492 = vmatpush1.msra.mxu0 0.0
    %493 = vmatprep.subr.mxu0 0.0
    %494 = vmatpush1.msra.mxu0 0.0
    %495 = vmatprep.subr.mxu0 0.0
    %496 = vmatpush1.msra.mxu0 0.0
    %497 = vmatprep.subr.mxu0 0.0
    %498 = vmatpush1.msra.mxu0 0.0
    %499 = vmatprep.subr.mxu0 0.0
    %500 = vmatpush1.msra.mxu0 0.0
    %501 = vmatprep.subr.mxu0 0.0
    %502 = vmatpush1.msra.mxu0 0.0
    %503 = vmatprep.subr.mxu0 0.0
    %504 = vmatpush1.msra.mxu0 %v468
    %505 = vmatprep.subr.mxu0 0.0
    %506 = vmatpush2.msra.mxu0 0.0
    %507 = vmatprep.subr.mxu0 0.0
    %508 = vmatpush2.msra.mxu0 0.0
    %509 = vmatprep.subr.mxu0 0.0
    %510 = vmatpush2.msra.mxu0 0.0
    %511 = vmatprep.subr.mxu0 0.0
    %512 = vmatpush2.msra.mxu0 0.0
    %513 = vmatprep.subr.mxu0 0.0
    %514 = vmatpush2.msra.mxu0 0.0
    %515 = vmatprep.subr.mxu0 0.0
    %516 = vmatpush2.msra.mxu0 0.0
    %517 = vmatprep.subr.mxu0 0.0
    %518 = vmatpush2.msra.mxu0 0.0
    %519 = vmatprep.subr.mxu0 0.0
    %520 = vmatpush2.msra.mxu0 0.0
    %521 = vmatprep.subr.mxu0 0.0
    %522 = vmatpush2.msra.mxu0 0.0
    %523 = vmatprep.subr.mxu0 0.0
    %524 = vmatpush2.msra.mxu0 0.0
    %525 = vmatprep.subr.mxu0 0.0
    %526 = vmatpush2.msra.mxu0 0.0
    %527 = vmatprep.subr.mxu0 0.0
    %528 = vmatpush2.msra.mxu0 0.0
    %529 = vmatprep.subr.mxu0 0.0
    %530 = vmatpush2.msra.mxu0 0.0
    %531 = vmatprep.subr.mxu0 0.0
    %532 = vmatpush2.msra.mxu0 0.0
    %533 = vmatprep.subr.mxu0 0.0
    %534 = vmatpush2.msra.mxu0 0.0
    %535 = vmatprep.subr.mxu0 0.0
    %536 = vmatpush2.msra.mxu0 0.0
    %537 = vmatprep.mubr.f32.mxu0 0.0
    %538 = vmatmul.mubr.f32.gmra.mxu0 %v471
    %v539 = vpop.f32.mrf.mxu0
    %v540 = vadd.f32 0.0, %v539
    %v541 = vpop.f32.mrf.mxu0
    %542 = vdwg.mxu0
    %543 = vrot.lane.b32.xlu0 %v275, 64
    %v544 = vpop.permute.xlu0 %543
    %v547 = vsel %vm293, %v466, 0
    %549 = vmatprep.subr.mxu0 0.0
    %550 = vmatpush1.msra.mxu0 0.0
    %551 = vmatprep.subr.mxu0 0.0
    %552 = vmatpush1.msra.mxu0 0.0
    %553 = vmatprep.subr.mxu0 0.0
    %554 = vmatpush1.msra.mxu0 0.0
    %555 = vmatprep.subr.mxu0 0.0
    %556 = vmatpush1.msra.mxu0 0.0
    %557 = vmatprep.subr.mxu0 0.0
    %558 = vmatpush1.msra.mxu0 0.0
    %559 = vmatprep.subr.mxu0 0.0
    %560 = vmatpush1.msra.mxu0 0.0
    %561 = vmatprep.subr.mxu0 0.0
    %562 = vmatpush1.msra.mxu0 0.0
    %563 = vmatprep.subr.mxu0 0.0
    %564 = vmatpush1.msra.mxu0 0.0
    %565 = vmatprep.subr.mxu0 0.0
    %566 = vmatpush1.msra.mxu0 0.0
    %567 = vmatprep.subr.mxu0 0.0
    %568 = vmatpush1.msra.mxu0 0.0
    %569 = vmatprep.subr.mxu0 0.0
    %570 = vmatpush1.msra.mxu0 0.0
    %571 = vmatprep.subr.mxu0 0.0
    %572 = vmatpush1.msra.mxu0 0.0
    %573 = vmatprep.subr.mxu0 0.0
    %574 = vmatpush1.msra.mxu0 0.0
    %575 = vmatprep.subr.mxu0 0.0
    %576 = vmatpush1.msra.mxu0 0.0
    %577 = vmatprep.subr.mxu0 0.0
    %578 = vmatpush1.msra.mxu0 0.0
    %579 = vmatprep.subr.mxu0 0.0
    %580 = vmatpush1.msra.mxu0 %v544
    %581 = vmatprep.subr.mxu0 0.0
    %582 = vmatpush2.msra.mxu0 0.0
    %583 = vmatprep.subr.mxu0 0.0
    %584 = vmatpush2.msra.mxu0 0.0
    %585 = vmatprep.subr.mxu0 0.0
    %586 = vmatpush2.msra.mxu0 0.0
    %587 = vmatprep.subr.mxu0 0.0
    %588 = vmatpush2.msra.mxu0 0.0
    %589 = vmatprep.subr.mxu0 0.0
    %590 = vmatpush2.msra.mxu0 0.0
    %591 = vmatprep.subr.mxu0 0.0
    %592 = vmatpush2.msra.mxu0 0.0
    %593 = vmatprep.subr.mxu0 0.0
    %594 = vmatpush2.msra.mxu0 0.0
    %595 = vmatprep.subr.mxu0 0.0
    %596 = vmatpush2.msra.mxu0 0.0
    %597 = vmatprep.subr.mxu0 0.0
    %598 = vmatpush2.msra.mxu0 0.0
    %599 = vmatprep.subr.mxu0 0.0
    %600 = vmatpush2.msra.mxu0 0.0
    %601 = vmatprep.subr.mxu0 0.0
    %602 = vmatpush2.msra.mxu0 0.0
    %603 = vmatprep.subr.mxu0 0.0
    %604 = vmatpush2.msra.mxu0 0.0
    %605 = vmatprep.subr.mxu0 0.0
    %606 = vmatpush2.msra.mxu0 0.0
    %607 = vmatprep.subr.mxu0 0.0
    %608 = vmatpush2.msra.mxu0 0.0
    %609 = vmatprep.subr.mxu0 0.0
    %610 = vmatpush2.msra.mxu0 0.0
    %611 = vmatprep.subr.mxu0 0.0
    %612 = vmatpush2.msra.mxu0 0.0
    %613 = vmatprep.mubr.f32.mxu0 0.0
    %614 = vmatmul.mubr.f32.gmra.mxu0 %v547
    %v615 = vpop.f32.mrf.mxu0
    %v616 = vadd.f32 0.0, %v615
    %v617 = vpop.f32.mrf.mxu0
    %618 = vdwg.mxu0
    %619 = vrot.lane.b32.xlu0 %v270, 120
    %v620 = vpop.permute.xlu0 %619
    %621 = vrot.lane.b32.xlu0 %v270, 88
    %v622 = vpop.permute.xlu0 %621
    %v623 = vsel %vm293, %v620, 0
    %v625 = vsel %vm293, %v622, 0
    %627 = vmatprep.subr.mxu0 0.0
    %628 = vmatpush1.xpose.msra.mxu0 0.0
    %629 = vmatprep.subr.mxu0 0.0
    %630 = vmatpush1.xpose.msra.mxu0 0.0
    %631 = vmatprep.subr.mxu0 0.0
    %632 = vmatpush1.xpose.msra.mxu0 0.0
    %633 = vmatprep.subr.mxu0 0.0
    %634 = vmatpush1.xpose.msra.mxu0 0.0
    %635 = vmatprep.subr.mxu0 0.0
    %636 = vmatpush1.xpose.msra.mxu0 0.0
    %637 = vmatprep.subr.mxu0 0.0
    %638 = vmatpush1.xpose.msra.mxu0 0.0
    %639 = vmatprep.subr.mxu0 0.0
    %640 = vmatpush1.xpose.msra.mxu0 0.0
    %641 = vmatprep.subr.mxu0 0.0
    %642 = vmatpush1.xpose.msra.mxu0 0.0
    %643 = vmatprep.subr.mxu0 0.0
    %644 = vmatpush1.xpose.msra.mxu0 0.0
    %645 = vmatprep.subr.mxu0 0.0
    %646 = vmatpush1.xpose.msra.mxu0 0.0
    %647 = vmatprep.subr.mxu0 0.0
    %648 = vmatpush1.xpose.msra.mxu0 0.0
    %649 = vmatprep.subr.mxu0 0.0
    %650 = vmatpush1.xpose.msra.mxu0 0.0
    %651 = vmatprep.subr.mxu0 0.0
    %652 = vmatpush1.xpose.msra.mxu0 0.0
    %653 = vmatprep.subr.mxu0 0.0
    %654 = vmatpush1.xpose.msra.mxu0 0.0
    %655 = vmatprep.subr.mxu0 0.0
    %656 = vmatpush1.xpose.msra.mxu0 0.0
    %657 = vmatprep.subr.mxu0 0.0
    %658 = vmatpush1.xpose.msra.mxu0 %v625
    %659 = vmatprep.subr.mxu0 0.0
    %660 = vmatpush2.xpose.msra.mxu0 0.0
    %661 = vmatprep.subr.mxu0 0.0
    %662 = vmatpush2.xpose.msra.mxu0 0.0
    %663 = vmatprep.subr.mxu0 0.0
    %664 = vmatpush2.xpose.msra.mxu0 0.0
    %665 = vmatprep.subr.mxu0 0.0
    %666 = vmatpush2.xpose.msra.mxu0 0.0
    %667 = vmatprep.subr.mxu0 0.0
    %668 = vmatpush2.xpose.msra.mxu0 0.0
    %669 = vmatprep.subr.mxu0 0.0
    %670 = vmatpush2.xpose.msra.mxu0 0.0
    %671 = vmatprep.subr.mxu0 0.0
    %672 = vmatpush2.xpose.msra.mxu0 0.0
    %673 = vmatprep.subr.mxu0 0.0
    %674 = vmatpush2.xpose.msra.mxu0 0.0
    %675 = vmatprep.subr.mxu0 0.0
    %676 = vmatpush2.xpose.msra.mxu0 0.0
    %677 = vmatprep.subr.mxu0 0.0
    %678 = vmatpush2.xpose.msra.mxu0 0.0
    %679 = vmatprep.subr.mxu0 0.0
    %680 = vmatpush2.xpose.msra.mxu0 0.0
    %681 = vmatprep.subr.mxu0 0.0
    %682 = vmatpush2.xpose.msra.mxu0 0.0
    %683 = vmatprep.subr.mxu0 0.0
    %684 = vmatpush2.xpose.msra.mxu0 0.0
    %685 = vmatprep.subr.mxu0 0.0
    %686 = vmatpush2.xpose.msra.mxu0 0.0
    %687 = vmatprep.subr.mxu0 0.0
    %688 = vmatpush2.xpose.msra.mxu0 0.0
    %689 = vmatprep.subr.mxu0 0.0
    %690 = vmatpush2.xpose.msra.mxu0 0.0
    %691 = vmatprep.mubr.f32.mxu0 0.0
    %692 = vmatmul.mubr.f32.gmra.mxu0 %v623
    %v693 = vpop.f32.mrf.mxu0
    %v694 = vadd.f32 %v283, %v693
    %v695 = vpop.f32.mrf.mxu0
    %696 = vdwg.mxu0
    %697 = vrot.lane.b32.xlu0 %v275, 120
    %v698 = vpop.permute.xlu0 %697
    %699 = vrot.lane.b32.xlu0 %v275, 88
    %v700 = vpop.permute.xlu0 %699
    %v701 = vsel %vm293, %v698, 0
    %v703 = vsel %vm293, %v700, 0
    %705 = vmatprep.subr.mxu0 0.0
    %706 = vmatpush1.xpose.msra.mxu0 0.0
    %707 = vmatprep.subr.mxu0 0.0
    %708 = vmatpush1.xpose.msra.mxu0 0.0
    %709 = vmatprep.subr.mxu0 0.0
    %710 = vmatpush1.xpose.msra.mxu0 0.0
    %711 = vmatprep.subr.mxu0 0.0
    %712 = vmatpush1.xpose.msra.mxu0 0.0
    %713 = vmatprep.subr.mxu0 0.0
    %714 = vmatpush1.xpose.msra.mxu0 0.0
    %715 = vmatprep.subr.mxu0 0.0
    %716 = vmatpush1.xpose.msra.mxu0 0.0
    %717 = vmatprep.subr.mxu0 0.0
    %718 = vmatpush1.xpose.msra.mxu0 0.0
    %719 = vmatprep.subr.mxu0 0.0
    %720 = vmatpush1.xpose.msra.mxu0 0.0
    %721 = vmatprep.subr.mxu0 0.0
    %722 = vmatpush1.xpose.msra.mxu0 0.0
    %723 = vmatprep.subr.mxu0 0.0
    %724 = vmatpush1.xpose.msra.mxu0 0.0
    %725 = vmatprep.subr.mxu0 0.0
    %726 = vmatpush1.xpose.msra.mxu0 0.0
    %727 = vmatprep.subr.mxu0 0.0
    %728 = vmatpush1.xpose.msra.mxu0 0.0
    %729 = vmatprep.subr.mxu0 0.0
    %730 = vmatpush1.xpose.msra.mxu0 0.0
    %731 = vmatprep.subr.mxu0 0.0
    %732 = vmatpush1.xpose.msra.mxu0 0.0
    %733 = vmatprep.subr.mxu0 0.0
    %734 = vmatpush1.xpose.msra.mxu0 0.0
    %735 = vmatprep.subr.mxu0 0.0
    %736 = vmatpush1.xpose.msra.mxu0 %v703
    %737 = vmatprep.subr.mxu0 0.0
    %738 = vmatpush2.xpose.msra.mxu0 0.0
    %739 = vmatprep.subr.mxu0 0.0
    %740 = vmatpush2.xpose.msra.mxu0 0.0
    %741 = vmatprep.subr.mxu0 0.0
    %742 = vmatpush2.xpose.msra.mxu0 0.0
    %743 = vmatprep.subr.mxu0 0.0
    %744 = vmatpush2.xpose.msra.mxu0 0.0
    %745 = vmatprep.subr.mxu0 0.0
    %746 = vmatpush2.xpose.msra.mxu0 0.0
    %747 = vmatprep.subr.mxu0 0.0
    %748 = vmatpush2.xpose.msra.mxu0 0.0
    %749 = vmatprep.subr.mxu0 0.0
    %750 = vmatpush2.xpose.msra.mxu0 0.0
    %751 = vmatprep.subr.mxu0 0.0
    %752 = vmatpush2.xpose.msra.mxu0 0.0
    %753 = vmatprep.subr.mxu0 0.0
    %754 = vmatpush2.xpose.msra.mxu0 0.0
    %755 = vmatprep.subr.mxu0 0.0
    %756 = vmatpush2.xpose.msra.mxu0 0.0
    %757 = vmatprep.subr.mxu0 0.0
    %758 = vmatpush2.xpose.msra.mxu0 0.0
    %759 = vmatprep.subr.mxu0 0.0
    %760 = vmatpush2.xpose.msra.mxu0 0.0
    %761 = vmatprep.subr.mxu0 0.0
    %762 = vmatpush2.xpose.msra.mxu0 0.0
    %763 = vmatprep.subr.mxu0 0.0
    %764 = vmatpush2.xpose.msra.mxu0 0.0
    %765 = vmatprep.subr.mxu0 0.0
    %766 = vmatpush2.xpose.msra.mxu0 0.0
    %767 = vmatprep.subr.mxu0 0.0
    %768 = vmatpush2.xpose.msra.mxu0 0.0
    %769 = vmatprep.mubr.f32.mxu0 0.0
    %770 = vmatmul.mubr.f32.gmra.mxu0 %v701
    %v771 = vpop.f32.mrf.mxu0
    %v772 = vadd.f32 %v287, %v771
    %v773 = vpop.f32.mrf.mxu0
    %774 = vdwg.mxu0
    %v775 = vsel %vm293, %v694, -inf
    %776 = vmax.xlane.f32.xlu0 %v775
    %v777 = vpop.xlane.xlu0 %776
    %v778 = vsel %vm293, %v772, -inf
    %779 = vmax.xlane.f32.xlu0 %v778
    %v780 = vpop.xlane.xlu0 %779
    %v781 = vsub.f32 %v694, %v777
    %v782 = vsub.f32 %v772, %v780
    %v783 = vmul.f32 %v781, 1.442695
    %v784 = vpow.pop %v783
    %v785 = vmul.f32 %v782, 1.442695
    %v786 = vpow.pop %v785
    %v787 = vsel %vm293, %v784, 0.0
    %788 = vadd.xlane.f32.xlu0 %v787
    %v789 = vpop.xlane.xlu0 %788
    %v790 = vsel %vm293, %v786, 0.0
    %791 = vadd.xlane.f32.xlu0 %v790
    %v792 = vpop.xlane.xlu0 %791
    %v793 = vrcp.pop %v789
    %v794 = vmul.f32 %v784, %v793
    %v795 = vrcp.pop %v792
    %v796 = vmul.f32 %v786, %v795
    %797 = vrot.lane.b32.xlu0 %v270, 56
    %v798 = vpop.permute.xlu0 %797
    %v801 = vsel %vm293, %v794, 0
    %803 = vmatprep.subr.mxu0 0.0
    %804 = vmatpush1.msra.mxu0 0.0
    %805 = vmatprep.subr.mxu0 0.0
    %806 = vmatpush1.msra.mxu0 0.0
    %807 = vmatprep.subr.mxu0 0.0
    %808 = vmatpush1.msra.mxu0 0.0
    %809 = vmatprep.subr.mxu0 0.0
    %810 = vmatpush1.msra.mxu0 0.0
    %811 = vmatprep.subr.mxu0 0.0
    %812 = vmatpush1.msra.mxu0 0.0
    %813 = vmatprep.subr.mxu0 0.0
    %814 = vmatpush1.msra.mxu0 0.0
    %815 = vmatprep.subr.mxu0 0.0
    %816 = vmatpush1.msra.mxu0 0.0
    %817 = vmatprep.subr.mxu0 0.0
    %818 = vmatpush1.msra.mxu0 0.0
    %819 = vmatprep.subr.mxu0 0.0
    %820 = vmatpush1.msra.mxu0 0.0
    %821 = vmatprep.subr.mxu0 0.0
    %822 = vmatpush1.msra.mxu0 0.0
    %823 = vmatprep.subr.mxu0 0.0
    %824 = vmatpush1.msra.mxu0 0.0
    %825 = vmatprep.subr.mxu0 0.0
    %826 = vmatpush1.msra.mxu0 0.0
    %827 = vmatprep.subr.mxu0 0.0
    %828 = vmatpush1.msra.mxu0 0.0
    %829 = vmatprep.subr.mxu0 0.0
    %830 = vmatpush1.msra.mxu0 0.0
    %831 = vmatprep.subr.mxu0 0.0
    %832 = vmatpush1.msra.mxu0 0.0
    %833 = vmatprep.subr.mxu0 0.0
    %834 = vmatpush1.msra.mxu0 %v798
    %835 = vmatprep.subr.mxu0 0.0
    %836 = vmatpush2.msra.mxu0 0.0
    %837 = vmatprep.subr.mxu0 0.0
    %838 = vmatpush2.msra.mxu0 0.0
    %839 = vmatprep.subr.mxu0 0.0
    %840 = vmatpush2.msra.mxu0 0.0
    %841 = vmatprep.subr.mxu0 0.0
    %842 = vmatpush2.msra.mxu0 0.0
    %843 = vmatprep.subr.mxu0 0.0
    %844 = vmatpush2.msra.mxu0 0.0
    %845 = vmatprep.subr.mxu0 0.0
    %846 = vmatpush2.msra.mxu0 0.0
    %847 = vmatprep.subr.mxu0 0.0
    %848 = vmatpush2.msra.mxu0 0.0
    %849 = vmatprep.subr.mxu0 0.0
    %850 = vmatpush2.msra.mxu0 0.0
    %851 = vmatprep.subr.mxu0 0.0
    %852 = vmatpush2.msra.mxu0 0.0
    %853 = vmatprep.subr.mxu0 0.0
    %854 = vmatpush2.msra.mxu0 0.0
    %855 = vmatprep.subr.mxu0 0.0
    %856 = vmatpush2.msra.mxu0 0.0
    %857 = vmatprep.subr.mxu0 0.0
    %858 = vmatpush2.msra.mxu0 0.0
    %859 = vmatprep.subr.mxu0 0.0
    %860 = vmatpush2.msra.mxu0 0.0
    %861 = vmatprep.subr.mxu0 0.0
    %862 = vmatpush2.msra.mxu0 0.0
    %863 = vmatprep.subr.mxu0 0.0
    %864 = vmatpush2.msra.mxu0 0.0
    %865 = vmatprep.subr.mxu0 0.0
    %866 = vmatpush2.msra.mxu0 0.0
    %867 = vmatprep.mubr.f32.mxu0 0.0
    %868 = vmatmul.mubr.f32.gmra.mxu0 %v801
    %v869 = vpop.f32.mrf.mxu0
    %v870 = vadd.f32 0.0, %v869
    %v871 = vpop.f32.mrf.mxu0
    %872 = vdwg.mxu0
    %873 = vrot.lane.b32.xlu0 %v275, 56
    %v874 = vpop.permute.xlu0 %873
    %v877 = vsel %vm293, %v796, 0
    %879 = vmatprep.subr.mxu0 0.0
    %880 = vmatpush1.msra.mxu0 0.0
    %881 = vmatprep.subr.mxu0 0.0
    %882 = vmatpush1.msra.mxu0 0.0
    %883 = vmatprep.subr.mxu0 0.0
    %884 = vmatpush1.msra.mxu0 0.0
    %885 = vmatprep.subr.mxu0 0.0
    %886 = vmatpush1.msra.mxu0 0.0
    %887 = vmatprep.subr.mxu0 0.0
    %888 = vmatpush1.msra.mxu0 0.0
    %889 = vmatprep.subr.mxu0 0.0
    %890 = vmatpush1.msra.mxu0 0.0
    %891 = vmatprep.subr.mxu0 0.0
    %892 = vmatpush1.msra.mxu0 0.0
    %893 = vmatprep.subr.mxu0 0.0
    %894 = vmatpush1.msra.mxu0 0.0
    %895 = vmatprep.subr.mxu0 0.0
    %896 = vmatpush1.msra.mxu0 0.0
    %897 = vmatprep.subr.mxu0 0.0
    %898 = vmatpush1.msra.mxu0 0.0
    %899 = vmatprep.subr.mxu0 0.0
    %900 = vmatpush1.msra.mxu0 0.0
    %901 = vmatprep.subr.mxu0 0.0
    %902 = vmatpush1.msra.mxu0 0.0
    %903 = vmatprep.subr.mxu0 0.0
    %904 = vmatpush1.msra.mxu0 0.0
    %905 = vmatprep.subr.mxu0 0.0
    %906 = vmatpush1.msra.mxu0 0.0
    %907 = vmatprep.subr.mxu0 0.0
    %908 = vmatpush1.msra.mxu0 0.0
    %909 = vmatprep.subr.mxu0 0.0
    %910 = vmatpush1.msra.mxu0 %v874
    %911 = vmatprep.subr.mxu0 0.0
    %912 = vmatpush2.msra.mxu0 0.0
    %913 = vmatprep.subr.mxu0 0.0
    %914 = vmatpush2.msra.mxu0 0.0
    %915 = vmatprep.subr.mxu0 0.0
    %916 = vmatpush2.msra.mxu0 0.0
    %917 = vmatprep.subr.mxu0 0.0
    %918 = vmatpush2.msra.mxu0 0.0
    %919 = vmatprep.subr.mxu0 0.0
    %920 = vmatpush2.msra.mxu0 0.0
    %921 = vmatprep.subr.mxu0 0.0
    %922 = vmatpush2.msra.mxu0 0.0
    %923 = vmatprep.subr.mxu0 0.0
    %924 = vmatpush2.msra.mxu0 0.0
    %925 = vmatprep.subr.mxu0 0.0
    %926 = vmatpush2.msra.mxu0 0.0
    %927 = vmatprep.subr.mxu0 0.0
    %928 = vmatpush2.msra.mxu0 0.0
    %929 = vmatprep.subr.mxu0 0.0
    %930 = vmatpush2.msra.mxu0 0.0
    %931 = vmatprep.subr.mxu0 0.0
    %932 = vmatpush2.msra.mxu0 0.0
    %933 = vmatprep.subr.mxu0 0.0
    %934 = vmatpush2.msra.mxu0 0.0
    %935 = vmatprep.subr.mxu0 0.0
    %936 = vmatpush2.msra.mxu0 0.0
    %937 = vmatprep.subr.mxu0 0.0
    %938 = vmatpush2.msra.mxu0 0.0
    %939 = vmatprep.subr.mxu0 0.0
    %940 = vmatpush2.msra.mxu0 0.0
    %941 = vmatprep.subr.mxu0 0.0
    %942 = vmatpush2.msra.mxu0 0.0
    %943 = vmatprep.mubr.f32.mxu0 0.0
    %944 = vmatmul.mubr.f32.gmra.mxu0 %v877
    %v945 = vpop.f32.mrf.mxu0
    %v946 = vadd.f32 0.0, %v945
    %v947 = vpop.f32.mrf.mxu0
    %948 = vdwg.mxu0
    %949 = vrot.lane.b32.xlu0 %v270, 112
    %v950 = vpop.permute.xlu0 %949
    %951 = vrot.lane.b32.xlu0 %v270, 80
    %v952 = vpop.permute.xlu0 %951
    %v953 = vsel %vm293, %v950, 0
    %v955 = vsel %vm293, %v952, 0
    %957 = vmatprep.subr.mxu0 0.0
    %958 = vmatpush1.xpose.msra.mxu0 0.0
    %959 = vmatprep.subr.mxu0 0.0
    %960 = vmatpush1.xpose.msra.mxu0 0.0
    %961 = vmatprep.subr.mxu0 0.0
    %962 = vmatpush1.xpose.msra.mxu0 0.0
    %963 = vmatprep.subr.mxu0 0.0
    %964 = vmatpush1.xpose.msra.mxu0 0.0
    %965 = vmatprep.subr.mxu0 0.0
    %966 = vmatpush1.xpose.msra.mxu0 0.0
    %967 = vmatprep.subr.mxu0 0.0
    %968 = vmatpush1.xpose.msra.mxu0 0.0
    %969 = vmatprep.subr.mxu0 0.0
    %970 = vmatpush1.xpose.msra.mxu0 0.0
    %971 = vmatprep.subr.mxu0 0.0
    %972 = vmatpush1.xpose.msra.mxu0 0.0
    %973 = vmatprep.subr.mxu0 0.0
    %974 = vmatpush1.xpose.msra.mxu0 0.0
    %975 = vmatprep.subr.mxu0 0.0
    %976 = vmatpush1.xpose.msra.mxu0 0.0
    %977 = vmatprep.subr.mxu0 0.0
    %978 = vmatpush1.xpose.msra.mxu0 0.0
    %979 = vmatprep.subr.mxu0 0.0
    %980 = vmatpush1.xpose.msra.mxu0 0.0
    %981 = vmatprep.subr.mxu0 0.0
    %982 = vmatpush1.xpose.msra.mxu0 0.0
    %983 = vmatprep.subr.mxu0 0.0
    %984 = vmatpush1.xpose.msra.mxu0 0.0
    %985 = vmatprep.subr.mxu0 0.0
    %986 = vmatpush1.xpose.msra.mxu0 0.0
    %987 = vmatprep.subr.mxu0 0.0
    %988 = vmatpush1.xpose.msra.mxu0 %v955
    %989 = vmatprep.subr.mxu0 0.0
    %990 = vmatpush2.xpose.msra.mxu0 0.0
    %991 = vmatprep.subr.mxu0 0.0
    %992 = vmatpush2.xpose.msra.mxu0 0.0
    %993 = vmatprep.subr.mxu0 0.0
    %994 = vmatpush2.xpose.msra.mxu0 0.0
    %995 = vmatprep.subr.mxu0 0.0
    %996 = vmatpush2.xpose.msra.mxu0 0.0
    %997 = vmatprep.subr.mxu0 0.0
    %998 = vmatpush2.xpose.msra.mxu0 0.0
    %999 = vmatprep.subr.mxu0 0.0
    %1000 = vmatpush2.xpose.msra.mxu0 0.0
    %1001 = vmatprep.subr.mxu0 0.0
    %1002 = vmatpush2.xpose.msra.mxu0 0.0
    %1003 = vmatprep.subr.mxu0 0.0
    %1004 = vmatpush2.xpose.msra.mxu0 0.0
    %1005 = vmatprep.subr.mxu0 0.0
    %1006 = vmatpush2.xpose.msra.mxu0 0.0
    %1007 = vmatprep.subr.mxu0 0.0
    %1008 = vmatpush2.xpose.msra.mxu0 0.0
    %1009 = vmatprep.subr.mxu0 0.0
    %1010 = vmatpush2.xpose.msra.mxu0 0.0
    %1011 = vmatprep.subr.mxu0 0.0
    %1012 = vmatpush2.xpose.msra.mxu0 0.0
    %1013 = vmatprep.subr.mxu0 0.0
    %1014 = vmatpush2.xpose.msra.mxu0 0.0
    %1015 = vmatprep.subr.mxu0 0.0
    %1016 = vmatpush2.xpose.msra.mxu0 0.0
    %1017 = vmatprep.subr.mxu0 0.0
    %1018 = vmatpush2.xpose.msra.mxu0 0.0
    %1019 = vmatprep.subr.mxu0 0.0
    %1020 = vmatpush2.xpose.msra.mxu0 0.0
    %1021 = vmatprep.mubr.f32.mxu0 0.0
    %1022 = vmatmul.mubr.f32.gmra.mxu0 %v953
    %v1023 = vpop.f32.mrf.mxu0
    %v1024 = vadd.f32 %v283, %v1023
    %v1025 = vpop.f32.mrf.mxu0
    %1026 = vdwg.mxu0
    %1027 = vrot.lane.b32.xlu0 %v275, 112
    %v1028 = vpop.permute.xlu0 %1027
    %1029 = vrot.lane.b32.xlu0 %v275, 80
    %v1030 = vpop.permute.xlu0 %1029
    %v1031 = vsel %vm293, %v1028, 0
    %v1033 = vsel %vm293, %v1030, 0
    %1035 = vmatprep.subr.mxu0 0.0
    %1036 = vmatpush1.xpose.msra.mxu0 0.0
    %1037 = vmatprep.subr.mxu0 0.0
    %1038 = vmatpush1.xpose.msra.mxu0 0.0
    %1039 = vmatprep.subr.mxu0 0.0
    %1040 = vmatpush1.xpose.msra.mxu0 0.0
    %1041 = vmatprep.subr.mxu0 0.0
    %1042 = vmatpush1.xpose.msra.mxu0 0.0
    %1043 = vmatprep.subr.mxu0 0.0
    %1044 = vmatpush1.xpose.msra.mxu0 0.0
    %1045 = vmatprep.subr.mxu0 0.0
    %1046 = vmatpush1.xpose.msra.mxu0 0.0
    %1047 = vmatprep.subr.mxu0 0.0
    %1048 = vmatpush1.xpose.msra.mxu0 0.0
    %1049 = vmatprep.subr.mxu0 0.0
    %1050 = vmatpush1.xpose.msra.mxu0 0.0
    %1051 = vmatprep.subr.mxu0 0.0
    %1052 = vmatpush1.xpose.msra.mxu0 0.0
    %1053 = vmatprep.subr.mxu0 0.0
    %1054 = vmatpush1.xpose.msra.mxu0 0.0
    %1055 = vmatprep.subr.mxu0 0.0
    %1056 = vmatpush1.xpose.msra.mxu0 0.0
    %1057 = vmatprep.subr.mxu0 0.0
    %1058 = vmatpush1.xpose.msra.mxu0 0.0
    %1059 = vmatprep.subr.mxu0 0.0
    %1060 = vmatpush1.xpose.msra.mxu0 0.0
    %1061 = vmatprep.subr.mxu0 0.0
    %1062 = vmatpush1.xpose.msra.mxu0 0.0
    %1063 = vmatprep.subr.mxu0 0.0
    %1064 = vmatpush1.xpose.msra.mxu0 0.0
    %1065 = vmatprep.subr.mxu0 0.0
    %1066 = vmatpush1.xpose.msra.mxu0 %v1033
    %1067 = vmatprep.subr.mxu0 0.0
    %1068 = vmatpush2.xpose.msra.mxu0 0.0
    %1069 = vmatprep.subr.mxu0 0.0
    %1070 = vmatpush2.xpose.msra.mxu0 0.0
    %1071 = vmatprep.subr.mxu0 0.0
    %1072 = vmatpush2.xpose.msra.mxu0 0.0
    %1073 = vmatprep.subr.mxu0 0.0
    %1074 = vmatpush2.xpose.msra.mxu0 0.0
    %1075 = vmatprep.subr.mxu0 0.0
    %1076 = vmatpush2.xpose.msra.mxu0 0.0
    %1077 = vmatprep.subr.mxu0 0.0
    %1078 = vmatpush2.xpose.msra.mxu0 0.0
    %1079 = vmatprep.subr.mxu0 0.0
    %1080 = vmatpush2.xpose.msra.mxu0 0.0
    %1081 = vmatprep.subr.mxu0 0.0
    %1082 = vmatpush2.xpose.msra.mxu0 0.0
    %1083 = vmatprep.subr.mxu0 0.0
    %1084 = vmatpush2.xpose.msra.mxu0 0.0
    %1085 = vmatprep.subr.mxu0 0.0
    %1086 = vmatpush2.xpose.msra.mxu0 0.0
    %1087 = vmatprep.subr.mxu0 0.0
    %1088 = vmatpush2.xpose.msra.mxu0 0.0
    %1089 = vmatprep.subr.mxu0 0.0
    %1090 = vmatpush2.xpose.msra.mxu0 0.0
    %1091 = vmatprep.subr.mxu0 0.0
    %1092 = vmatpush2.xpose.msra.mxu0 0.0
    %1093 = vmatprep.subr.mxu0 0.0
    %1094 = vmatpush2.xpose.msra.mxu0 0.0
    %1095 = vmatprep.subr.mxu0 0.0
    %1096 = vmatpush2.xpose.msra.mxu0 0.0
    %1097 = vmatprep.subr.mxu0 0.0
    %1098 = vmatpush2.xpose.msra.mxu0 0.0
    %1099 = vmatprep.mubr.f32.mxu0 0.0
    %1100 = vmatmul.mubr.f32.gmra.mxu0 %v1031
    %v1101 = vpop.f32.mrf.mxu0
    %v1102 = vadd.f32 %v287, %v1101
    %v1103 = vpop.f32.mrf.mxu0
    %1104 = vdwg.mxu0
    %v1105 = vsel %vm293, %v1024, -inf
    %1106 = vmax.xlane.f32.xlu0 %v1105
    %v1107 = vpop.xlane.xlu0 %1106
    %v1108 = vsel %vm293, %v1102, -inf
    %1109 = vmax.xlane.f32.xlu0 %v1108
    %v1110 = vpop.xlane.xlu0 %1109
    %v1111 = vsub.f32 %v1024, %v1107
    %v1112 = vsub.f32 %v1102, %v1110
    %v1113 = vmul.f32 %v1111, 1.442695
    %v1114 = vpow.pop %v1113
    %v1115 = vmul.f32 %v1112, 1.442695
    %v1116 = vpow.pop %v1115
    %v1117 = vsel %vm293, %v1114, 0.0
    %1118 = vadd.xlane.f32.xlu0 %v1117
    %v1119 = vpop.xlane.xlu0 %1118
    %v1120 = vsel %vm293, %v1116, 0.0
    %1121 = vadd.xlane.f32.xlu0 %v1120
    %v1122 = vpop.xlane.xlu0 %1121
    %v1123 = vrcp.pop %v1119
    %v1124 = vmul.f32 %v1114, %v1123
    %v1125 = vrcp.pop %v1122
    %v1126 = vmul.f32 %v1116, %v1125
    %1127 = vrot.lane.b32.xlu0 %v270, 48
    %v1128 = vpop.permute.xlu0 %1127
    %v1131 = vsel %vm293, %v1124, 0
    %1133 = vmatprep.subr.mxu0 0.0
    %1134 = vmatpush1.msra.mxu0 0.0
    %1135 = vmatprep.subr.mxu0 0.0
    %1136 = vmatpush1.msra.mxu0 0.0
    %1137 = vmatprep.subr.mxu0 0.0
    %1138 = vmatpush1.msra.mxu0 0.0
    %1139 = vmatprep.subr.mxu0 0.0
    %1140 = vmatpush1.msra.mxu0 0.0
    %1141 = vmatprep.subr.mxu0 0.0
    %1142 = vmatpush1.msra.mxu0 0.0
    %1143 = vmatprep.subr.mxu0 0.0
    %1144 = vmatpush1.msra.mxu0 0.0
    %1145 = vmatprep.subr.mxu0 0.0
    %1146 = vmatpush1.msra.mxu0 0.0
    %1147 = vmatprep.subr.mxu0 0.0
    %1148 = vmatpush1.msra.mxu0 0.0
    %1149 = vmatprep.subr.mxu0 0.0
    %1150 = vmatpush1.msra.mxu0 0.0
    %1151 = vmatprep.subr.mxu0 0.0
    %1152 = vmatpush1.msra.mxu0 0.0
    %1153 = vmatprep.subr.mxu0 0.0
    %1154 = vmatpush1.msra.mxu0 0.0
    %1155 = vmatprep.subr.mxu0 0.0
    %1156 = vmatpush1.msra.mxu0 0.0
    %1157 = vmatprep.subr.mxu0 0.0
    %1158 = vmatpush1.msra.mxu0 0.0
    %1159 = vmatprep.subr.mxu0 0.0
    %1160 = vmatpush1.msra.mxu0 0.0
    %1161 = vmatprep.subr.mxu0 0.0
    %1162 = vmatpush1.msra.mxu0 0.0
    %1163 = vmatprep.subr.mxu0 0.0
    %1164 = vmatpush1.msra.mxu0 %v1128
    %1165 = vmatprep.subr.mxu0 0.0
    %1166 = vmatpush2.msra.mxu0 0.0
    %1167 = vmatprep.subr.mxu0 0.0
    %1168 = vmatpush2.msra.mxu0 0.0
    %1169 = vmatprep.subr.mxu0 0.0
    %1170 = vmatpush2.msra.mxu0 0.0
    %1171 = vmatprep.subr.mxu0 0.0
    %1172 = vmatpush2.msra.mxu0 0.0
    %1173 = vmatprep.subr.mxu0 0.0
    %1174 = vmatpush2.msra.mxu0 0.0
    %1175 = vmatprep.subr.mxu0 0.0
    %1176 = vmatpush2.msra.mxu0 0.0
    %1177 = vmatprep.subr.mxu0 0.0
    %1178 = vmatpush2.msra.mxu0 0.0
    %1179 = vmatprep.subr.mxu0 0.0
    %1180 = vmatpush2.msra.mxu0 0.0
    %1181 = vmatprep.subr.mxu0 0.0
    %1182 = vmatpush2.msra.mxu0 0.0
    %1183 = vmatprep.subr.mxu0 0.0
    %1184 = vmatpush2.msra.mxu0 0.0
    %1185 = vmatprep.subr.mxu0 0.0
    %1186 = vmatpush2.msra.mxu0 0.0
    %1187 = vmatprep.subr.mxu0 0.0
    %1188 = vmatpush2.msra.mxu0 0.0
    %1189 = vmatprep.subr.mxu0 0.0
    %1190 = vmatpush2.msra.mxu0 0.0
    %1191 = vmatprep.subr.mxu0 0.0
    %1192 = vmatpush2.msra.mxu0 0.0
    %1193 = vmatprep.subr.mxu0 0.0
    %1194 = vmatpush2.msra.mxu0 0.0
    %1195 = vmatprep.subr.mxu0 0.0
    %1196 = vmatpush2.msra.mxu0 0.0
    %1197 = vmatprep.mubr.f32.mxu0 0.0
    %1198 = vmatmul.mubr.f32.gmra.mxu0 %v1131
    %v1199 = vpop.f32.mrf.mxu0
    %v1200 = vadd.f32 0.0, %v1199
    %v1201 = vpop.f32.mrf.mxu0
    %1202 = vdwg.mxu0
    %1203 = vrot.lane.b32.xlu0 %v275, 48
    %v1204 = vpop.permute.xlu0 %1203
    %v1207 = vsel %vm293, %v1126, 0
    %1209 = vmatprep.subr.mxu0 0.0
    %1210 = vmatpush1.msra.mxu0 0.0
    %1211 = vmatprep.subr.mxu0 0.0
    %1212 = vmatpush1.msra.mxu0 0.0
    %1213 = vmatprep.subr.mxu0 0.0
    %1214 = vmatpush1.msra.mxu0 0.0
    %1215 = vmatprep.subr.mxu0 0.0
    %1216 = vmatpush1.msra.mxu0 0.0
    %1217 = vmatprep.subr.mxu0 0.0
    %1218 = vmatpush1.msra.mxu0 0.0
    %1219 = vmatprep.subr.mxu0 0.0
    %1220 = vmatpush1.msra.mxu0 0.0
    %1221 = vmatprep.subr.mxu0 0.0
    %1222 = vmatpush1.msra.mxu0 0.0
    %1223 = vmatprep.subr.mxu0 0.0
    %1224 = vmatpush1.msra.mxu0 0.0
    %1225 = vmatprep.subr.mxu0 0.0
    %1226 = vmatpush1.msra.mxu0 0.0
    %1227 = vmatprep.subr.mxu0 0.0
    %1228 = vmatpush1.msra.mxu0 0.0
    %1229 = vmatprep.subr.mxu0 0.0
    %1230 = vmatpush1.msra.mxu0 0.0
    %1231 = vmatprep.subr.mxu0 0.0
    %1232 = vmatpush1.msra.mxu0 0.0
    %1233 = vmatprep.subr.mxu0 0.0
    %1234 = vmatpush1.msra.mxu0 0.0
    %1235 = vmatprep.subr.mxu0 0.0
    %1236 = vmatpush1.msra.mxu0 0.0
    %1237 = vmatprep.subr.mxu0 0.0
    %1238 = vmatpush1.msra.mxu0 0.0
    %1239 = vmatprep.subr.mxu0 0.0
    %1240 = vmatpush1.msra.mxu0 %v1204
    %1241 = vmatprep.subr.mxu0 0.0
    %1242 = vmatpush2.msra.mxu0 0.0
    %1243 = vmatprep.subr.mxu0 0.0
    %1244 = vmatpush2.msra.mxu0 0.0
    %1245 = vmatprep.subr.mxu0 0.0
    %1246 = vmatpush2.msra.mxu0 0.0
    %1247 = vmatprep.subr.mxu0 0.0
    %1248 = vmatpush2.msra.mxu0 0.0
    %1249 = vmatprep.subr.mxu0 0.0
    %1250 = vmatpush2.msra.mxu0 0.0
    %1251 = vmatprep.subr.mxu0 0.0
    %1252 = vmatpush2.msra.mxu0 0.0
    %1253 = vmatprep.subr.mxu0 0.0
    %1254 = vmatpush2.msra.mxu0 0.0
    %1255 = vmatprep.subr.mxu0 0.0
    %1256 = vmatpush2.msra.mxu0 0.0
    %1257 = vmatprep.subr.mxu0 0.0
    %1258 = vmatpush2.msra.mxu0 0.0
    %1259 = vmatprep.subr.mxu0 0.0
    %1260 = vmatpush2.msra.mxu0 0.0
    %1261 = vmatprep.subr.mxu0 0.0
    %1262 = vmatpush2.msra.mxu0 0.0
    %1263 = vmatprep.subr.mxu0 0.0
    %1264 = vmatpush2.msra.mxu0 0.0
    %1265 = vmatprep.subr.mxu0 0.0
    %1266 = vmatpush2.msra.mxu0 0.0
    %1267 = vmatprep.subr.mxu0 0.0
    %1268 = vmatpush2.msra.mxu0 0.0
    %1269 = vmatprep.subr.mxu0 0.0
    %1270 = vmatpush2.msra.mxu0 0.0
    %1271 = vmatprep.subr.mxu0 0.0
    %1272 = vmatpush2.msra.mxu0 0.0
    %1273 = vmatprep.mubr.f32.mxu0 0.0
    %1274 = vmatmul.mubr.f32.gmra.mxu0 %v1207
    %v1275 = vpop.f32.mrf.mxu0
    %v1276 = vadd.f32 0.0, %v1275
    %v1277 = vpop.f32.mrf.mxu0
    %1278 = vdwg.mxu0
    %1279 = vrot.lane.b32.xlu0 %v270, 104
    %v1280 = vpop.permute.xlu0 %1279
    %1281 = vrot.lane.b32.xlu0 %v270, 72
    %v1282 = vpop.permute.xlu0 %1281
    %v1283 = vsel %vm293, %v1280, 0
    %v1285 = vsel %vm293, %v1282, 0
    %1287 = vmatprep.subr.mxu0 0.0
    %1288 = vmatpush1.xpose.msra.mxu0 0.0
    %1289 = vmatprep.subr.mxu0 0.0
    %1290 = vmatpush1.xpose.msra.mxu0 0.0
    %1291 = vmatprep.subr.mxu0 0.0
    %1292 = vmatpush1.xpose.msra.mxu0 0.0
    %1293 = vmatprep.subr.mxu0 0.0
    %1294 = vmatpush1.xpose.msra.mxu0 0.0
    %1295 = vmatprep.subr.mxu0 0.0
    %1296 = vmatpush1.xpose.msra.mxu0 0.0
    %1297 = vmatprep.subr.mxu0 0.0
    %1298 = vmatpush1.xpose.msra.mxu0 0.0
    %1299 = vmatprep.subr.mxu0 0.0
    %1300 = vmatpush1.xpose.msra.mxu0 0.0
    %1301 = vmatprep.subr.mxu0 0.0
    %1302 = vmatpush1.xpose.msra.mxu0 0.0
    %1303 = vmatprep.subr.mxu0 0.0
    %1304 = vmatpush1.xpose.msra.mxu0 0.0
    %1305 = vmatprep.subr.mxu0 0.0
    %1306 = vmatpush1.xpose.msra.mxu0 0.0
    %1307 = vmatprep.subr.mxu0 0.0
    %1308 = vmatpush1.xpose.msra.mxu0 0.0
    %1309 = vmatprep.subr.mxu0 0.0
    %1310 = vmatpush1.xpose.msra.mxu0 0.0
    %1311 = vmatprep.subr.mxu0 0.0
    %1312 = vmatpush1.xpose.msra.mxu0 0.0
    %1313 = vmatprep.subr.mxu0 0.0
    %1314 = vmatpush1.xpose.msra.mxu0 0.0
    %1315 = vmatprep.subr.mxu0 0.0
    %1316 = vmatpush1.xpose.msra.mxu0 0.0
    %1317 = vmatprep.subr.mxu0 0.0
    %1318 = vmatpush1.xpose.msra.mxu0 %v1285
    %1319 = vmatprep.subr.mxu0 0.0
    %1320 = vmatpush2.xpose.msra.mxu0 0.0
    %1321 = vmatprep.subr.mxu0 0.0
    %1322 = vmatpush2.xpose.msra.mxu0 0.0
    %1323 = vmatprep.subr.mxu0 0.0
    %1324 = vmatpush2.xpose.msra.mxu0 0.0
    %1325 = vmatprep.subr.mxu0 0.0
    %1326 = vmatpush2.xpose.msra.mxu0 0.0
    %1327 = vmatprep.subr.mxu0 0.0
    %1328 = vmatpush2.xpose.msra.mxu0 0.0
    %1329 = vmatprep.subr.mxu0 0.0
    %1330 = vmatpush2.xpose.msra.mxu0 0.0
    %1331 = vmatprep.subr.mxu0 0.0
    %1332 = vmatpush2.xpose.msra.mxu0 0.0
    %1333 = vmatprep.subr.mxu0 0.0
    %1334 = vmatpush2.xpose.msra.mxu0 0.0
    %1335 = vmatprep.subr.mxu0 0.0
    %1336 = vmatpush2.xpose.msra.mxu0 0.0
    %1337 = vmatprep.subr.mxu0 0.0
    %1338 = vmatpush2.xpose.msra.mxu0 0.0
    %1339 = vmatprep.subr.mxu0 0.0
    %1340 = vmatpush2.xpose.msra.mxu0 0.0
    %1341 = vmatprep.subr.mxu0 0.0
    %1342 = vmatpush2.xpose.msra.mxu0 0.0
    %1343 = vmatprep.subr.mxu0 0.0
    %1344 = vmatpush2.xpose.msra.mxu0 0.0
    %1345 = vmatprep.subr.mxu0 0.0
    %1346 = vmatpush2.xpose.msra.mxu0 0.0
    %1347 = vmatprep.subr.mxu0 0.0
    %1348 = vmatpush2.xpose.msra.mxu0 0.0
    %1349 = vmatprep.subr.mxu0 0.0
    %1350 = vmatpush2.xpose.msra.mxu0 0.0
    %1351 = vmatprep.mubr.f32.mxu0 0.0
    %1352 = vmatmul.mubr.f32.gmra.mxu0 %v1283
    %v1353 = vpop.f32.mrf.mxu0
    %v1354 = vadd.f32 %v283, %v1353
    %v1355 = vpop.f32.mrf.mxu0
    %1356 = vdwg.mxu0
    %1357 = vrot.lane.b32.xlu0 %v275, 104
    %v1358 = vpop.permute.xlu0 %1357
    %1359 = vrot.lane.b32.xlu0 %v275, 72
    %v1360 = vpop.permute.xlu0 %1359
    %v1361 = vsel %vm293, %v1358, 0
    %v1363 = vsel %vm293, %v1360, 0
    %1365 = vmatprep.subr.mxu0 0.0
    %1366 = vmatpush1.xpose.msra.mxu0 0.0
    %1367 = vmatprep.subr.mxu0 0.0
    %1368 = vmatpush1.xpose.msra.mxu0 0.0
    %1369 = vmatprep.subr.mxu0 0.0
    %1370 = vmatpush1.xpose.msra.mxu0 0.0
    %1371 = vmatprep.subr.mxu0 0.0
    %1372 = vmatpush1.xpose.msra.mxu0 0.0
    %1373 = vmatprep.subr.mxu0 0.0
    %1374 = vmatpush1.xpose.msra.mxu0 0.0
    %1375 = vmatprep.subr.mxu0 0.0
    %1376 = vmatpush1.xpose.msra.mxu0 0.0
    %1377 = vmatprep.subr.mxu0 0.0
    %1378 = vmatpush1.xpose.msra.mxu0 0.0
    %1379 = vmatprep.subr.mxu0 0.0
    %1380 = vmatpush1.xpose.msra.mxu0 0.0
    %1381 = vmatprep.subr.mxu0 0.0
    %1382 = vmatpush1.xpose.msra.mxu0 0.0
    %1383 = vmatprep.subr.mxu0 0.0
    %1384 = vmatpush1.xpose.msra.mxu0 0.0
    %1385 = vmatprep.subr.mxu0 0.0
    %1386 = vmatpush1.xpose.msra.mxu0 0.0
    %1387 = vmatprep.subr.mxu0 0.0
    %1388 = vmatpush1.xpose.msra.mxu0 0.0
    %1389 = vmatprep.subr.mxu0 0.0
    %1390 = vmatpush1.xpose.msra.mxu0 0.0
    %1391 = vmatprep.subr.mxu0 0.0
    %1392 = vmatpush1.xpose.msra.mxu0 0.0
    %1393 = vmatprep.subr.mxu0 0.0
    %1394 = vmatpush1.xpose.msra.mxu0 0.0
    %1395 = vmatprep.subr.mxu0 0.0
    %1396 = vmatpush1.xpose.msra.mxu0 %v1363
    %1397 = vmatprep.subr.mxu0 0.0
    %1398 = vmatpush2.xpose.msra.mxu0 0.0
    %1399 = vmatprep.subr.mxu0 0.0
    %1400 = vmatpush2.xpose.msra.mxu0 0.0
    %1401 = vmatprep.subr.mxu0 0.0
    %1402 = vmatpush2.xpose.msra.mxu0 0.0
    %1403 = vmatprep.subr.mxu0 0.0
    %1404 = vmatpush2.xpose.msra.mxu0 0.0
    %1405 = vmatprep.subr.mxu0 0.0
    %1406 = vmatpush2.xpose.msra.mxu0 0.0
    %1407 = vmatprep.subr.mxu0 0.0
    %1408 = vmatpush2.xpose.msra.mxu0 0.0
    %1409 = vmatprep.subr.mxu0 0.0
    %1410 = vmatpush2.xpose.msra.mxu0 0.0
    %1411 = vmatprep.subr.mxu0 0.0
    %1412 = vmatpush2.xpose.msra.mxu0 0.0
    %1413 = vmatprep.subr.mxu0 0.0
    %1414 = vmatpush2.xpose.msra.mxu0 0.0
    %1415 = vmatprep.subr.mxu0 0.0
    %1416 = vmatpush2.xpose.msra.mxu0 0.0
    %1417 = vmatprep.subr.mxu0 0.0
    %1418 = vmatpush2.xpose.msra.mxu0 0.0
    %1419 = vmatprep.subr.mxu0 0.0
    %1420 = vmatpush2.xpose.msra.mxu0 0.0
    %1421 = vmatprep.subr.mxu0 0.0
    %1422 = vmatpush2.xpose.msra.mxu0 0.0
    %1423 = vmatprep.subr.mxu0 0.0
    %1424 = vmatpush2.xpose.msra.mxu0 0.0
    %1425 = vmatprep.subr.mxu0 0.0
    %1426 = vmatpush2.xpose.msra.mxu0 0.0
    %1427 = vmatprep.subr.mxu0 0.0
    %1428 = vmatpush2.xpose.msra.mxu0 0.0
    %1429 = vmatprep.mubr.f32.mxu0 0.0
    %1430 = vmatmul.mubr.f32.gmra.mxu0 %v1361
    %v1431 = vpop.f32.mrf.mxu0
    %v1432 = vadd.f32 %v287, %v1431
    %v1433 = vpop.f32.mrf.mxu0
    %1434 = vdwg.mxu0
    %v1435 = vsel %vm293, %v1354, -inf
    %1436 = vmax.xlane.f32.xlu0 %v1435
    %v1437 = vpop.xlane.xlu0 %1436
    %v1438 = vsel %vm293, %v1432, -inf
    %1439 = vmax.xlane.f32.xlu0 %v1438
    %v1440 = vpop.xlane.xlu0 %1439
    %v1441 = vsub.f32 %v1354, %v1437
    %v1442 = vsub.f32 %v1432, %v1440
    %v1443 = vmul.f32 %v1441, 1.442695
    %v1444 = vpow.pop %v1443
    %v1445 = vmul.f32 %v1442, 1.442695
    %v1446 = vpow.pop %v1445
    %v1447 = vsel %vm293, %v1444, 0.0
    %1448 = vadd.xlane.f32.xlu0 %v1447
    %v1449 = vpop.xlane.xlu0 %1448
    %v1450 = vsel %vm293, %v1446, 0.0
    %1451 = vadd.xlane.f32.xlu0 %v1450
    %v1452 = vpop.xlane.xlu0 %1451
    %v1453 = vrcp.pop %v1449
    %v1454 = vmul.f32 %v1444, %v1453
    %v1455 = vrcp.pop %v1452
    %v1456 = vmul.f32 %v1446, %v1455
    %1457 = vrot.lane.b32.xlu0 %v270, 40
    %v1458 = vpop.permute.xlu0 %1457
    %v1461 = vsel %vm293, %v1454, 0
    %1463 = vmatprep.subr.mxu0 0.0
    %1464 = vmatpush1.msra.mxu0 0.0
    %1465 = vmatprep.subr.mxu0 0.0
    %1466 = vmatpush1.msra.mxu0 0.0
    %1467 = vmatprep.subr.mxu0 0.0
    %1468 = vmatpush1.msra.mxu0 0.0
    %1469 = vmatprep.subr.mxu0 0.0
    %1470 = vmatpush1.msra.mxu0 0.0
    %1471 = vmatprep.subr.mxu0 0.0
    %1472 = vmatpush1.msra.mxu0 0.0
    %1473 = vmatprep.subr.mxu0 0.0
    %1474 = vmatpush1.msra.mxu0 0.0
    %1475 = vmatprep.subr.mxu0 0.0
    %1476 = vmatpush1.msra.mxu0 0.0
    %1477 = vmatprep.subr.mxu0 0.0
    %1478 = vmatpush1.msra.mxu0 0.0
    %1479 = vmatprep.subr.mxu0 0.0
    %1480 = vmatpush1.msra.mxu0 0.0
    %1481 = vmatprep.subr.mxu0 0.0
    %1482 = vmatpush1.msra.mxu0 0.0
    %1483 = vmatprep.subr.mxu0 0.0
    %1484 = vmatpush1.msra.mxu0 0.0
    %1485 = vmatprep.subr.mxu0 0.0
    %1486 = vmatpush1.msra.mxu0 0.0
    %1487 = vmatprep.subr.mxu0 0.0
    %1488 = vmatpush1.msra.mxu0 0.0
    %1489 = vmatprep.subr.mxu0 0.0
    %1490 = vmatpush1.msra.mxu0 0.0
    %1491 = vmatprep.subr.mxu0 0.0
    %1492 = vmatpush1.msra.mxu0 0.0
    %1493 = vmatprep.subr.mxu0 0.0
    %1494 = vmatpush1.msra.mxu0 %v1458
    %1495 = vmatprep.subr.mxu0 0.0
    %1496 = vmatpush2.msra.mxu0 0.0
    %1497 = vmatprep.subr.mxu0 0.0
    %1498 = vmatpush2.msra.mxu0 0.0
    %1499 = vmatprep.subr.mxu0 0.0
    %1500 = vmatpush2.msra.mxu0 0.0
    %1501 = vmatprep.subr.mxu0 0.0
    %1502 = vmatpush2.msra.mxu0 0.0
    %1503 = vmatprep.subr.mxu0 0.0
    %1504 = vmatpush2.msra.mxu0 0.0
    %1505 = vmatprep.subr.mxu0 0.0
    %1506 = vmatpush2.msra.mxu0 0.0
    %1507 = vmatprep.subr.mxu0 0.0
    %1508 = vmatpush2.msra.mxu0 0.0
    %1509 = vmatprep.subr.mxu0 0.0
    %1510 = vmatpush2.msra.mxu0 0.0
    %1511 = vmatprep.subr.mxu0 0.0
    %1512 = vmatpush2.msra.mxu0 0.0
    %1513 = vmatprep.subr.mxu0 0.0
    %1514 = vmatpush2.msra.mxu0 0.0
    %1515 = vmatprep.subr.mxu0 0.0
    %1516 = vmatpush2.msra.mxu0 0.0
    %1517 = vmatprep.subr.mxu0 0.0
    %1518 = vmatpush2.msra.mxu0 0.0
    %1519 = vmatprep.subr.mxu0 0.0
    %1520 = vmatpush2.msra.mxu0 0.0
    %1521 = vmatprep.subr.mxu0 0.0
    %1522 = vmatpush2.msra.mxu0 0.0
    %1523 = vmatprep.subr.mxu0 0.0
    %1524 = vmatpush2.msra.mxu0 0.0
    %1525 = vmatprep.subr.mxu0 0.0
    %1526 = vmatpush2.msra.mxu0 0.0
    %1527 = vmatprep.mubr.f32.mxu0 0.0
    %1528 = vmatmul.mubr.f32.gmra.mxu0 %v1461
    %v1529 = vpop.f32.mrf.mxu0
    %v1530 = vadd.f32 0.0, %v1529
    %v1531 = vpop.f32.mrf.mxu0
    %1532 = vdwg.mxu0
    %1533 = vrot.lane.b32.xlu0 %v275, 40
    %v1534 = vpop.permute.xlu0 %1533
    %v1537 = vsel %vm293, %v1456, 0
    %1539 = vmatprep.subr.mxu0 0.0
    %1540 = vmatpush1.msra.mxu0 0.0
    %1541 = vmatprep.subr.mxu0 0.0
    %1542 = vmatpush1.msra.mxu0 0.0
    %1543 = vmatprep.subr.mxu0 0.0
    %1544 = vmatpush1.msra.mxu0 0.0
    %1545 = vmatprep.subr.mxu0 0.0
    %1546 = vmatpush1.msra.mxu0 0.0
    %1547 = vmatprep.subr.mxu0 0.0
    %1548 = vmatpush1.msra.mxu0 0.0
    %1549 = vmatprep.subr.mxu0 0.0
    %1550 = vmatpush1.msra.mxu0 0.0
    %1551 = vmatprep.subr.mxu0 0.0
    %1552 = vmatpush1.msra.mxu0 0.0
    %1553 = vmatprep.subr.mxu0 0.0
    %1554 = vmatpush1.msra.mxu0 0.0
    %1555 = vmatprep.subr.mxu0 0.0
    %1556 = vmatpush1.msra.mxu0 0.0
    %1557 = vmatprep.subr.mxu0 0.0
    %1558 = vmatpush1.msra.mxu0 0.0
    %1559 = vmatprep.subr.mxu0 0.0
    %1560 = vmatpush1.msra.mxu0 0.0
    %1561 = vmatprep.subr.mxu0 0.0
    %1562 = vmatpush1.msra.mxu0 0.0
    %1563 = vmatprep.subr.mxu0 0.0
    %1564 = vmatpush1.msra.mxu0 0.0
    %1565 = vmatprep.subr.mxu0 0.0
    %1566 = vmatpush1.msra.mxu0 0.0
    %1567 = vmatprep.subr.mxu0 0.0
    %1568 = vmatpush1.msra.mxu0 0.0
    %1569 = vmatprep.subr.mxu0 0.0
    %1570 = vmatpush1.msra.mxu0 %v1534
    %1571 = vmatprep.subr.mxu0 0.0
    %1572 = vmatpush2.msra.mxu0 0.0
    %1573 = vmatprep.subr.mxu0 0.0
    %1574 = vmatpush2.msra.mxu0 0.0
    %1575 = vmatprep.subr.mxu0 0.0
    %1576 = vmatpush2.msra.mxu0 0.0
    %1577 = vmatprep.subr.mxu0 0.0
    %1578 = vmatpush2.msra.mxu0 0.0
    %1579 = vmatprep.subr.mxu0 0.0
    %1580 = vmatpush2.msra.mxu0 0.0
    %1581 = vmatprep.subr.mxu0 0.0
    %1582 = vmatpush2.msra.mxu0 0.0
    %1583 = vmatprep.subr.mxu0 0.0
    %1584 = vmatpush2.msra.mxu0 0.0
    %1585 = vmatprep.subr.mxu0 0.0
    %1586 = vmatpush2.msra.mxu0 0.0
    %1587 = vmatprep.subr.mxu0 0.0
    %1588 = vmatpush2.msra.mxu0 0.0
    %1589 = vmatprep.subr.mxu0 0.0
    %1590 = vmatpush2.msra.mxu0 0.0
    %1591 = vmatprep.subr.mxu0 0.0
    %1592 = vmatpush2.msra.mxu0 0.0
    %1593 = vmatprep.subr.mxu0 0.0
    %1594 = vmatpush2.msra.mxu0 0.0
    %1595 = vmatprep.subr.mxu0 0.0
    %1596 = vmatpush2.msra.mxu0 0.0
    %1597 = vmatprep.subr.mxu0 0.0
    %1598 = vmatpush2.msra.mxu0 0.0
    %1599 = vmatprep.subr.mxu0 0.0
    %1600 = vmatpush2.msra.mxu0 0.0
    %1601 = vmatprep.subr.mxu0 0.0
    %1602 = vmatpush2.msra.mxu0 0.0
    %1603 = vmatprep.mubr.f32.mxu0 0.0
    %1604 = vmatmul.mubr.f32.gmra.mxu0 %v1537
    %v1605 = vpop.f32.mrf.mxu0
    %v1606 = vadd.f32 0.0, %v1605
    %v1607 = vpop.f32.mrf.mxu0
    %1608 = vdwg.mxu0
    %1611 = vrot.lane.b32.xlu0 %v870, 8
    %v1612 = vpop.permute.xlu0 %1611
    %1613 = vrot.lane.b32.xlu0 %v946, 8
    %v1614 = vpop.permute.xlu0 %1613
    %1619 = vrot.lane.b32.xlu0 %v1200, 16
    %v1620 = vpop.permute.xlu0 %1619
    %1621 = vrot.lane.b32.xlu0 %v1276, 16
    %v1622 = vpop.permute.xlu0 %1621
    %1627 = vrot.lane.b32.xlu0 %v1530, 24
    %v1628 = vpop.permute.xlu0 %1627
    %1629 = vrot.lane.b32.xlu0 %v1606, 24
    %v1630 = vpop.permute.xlu0 %1629
    %v1633 = vsel %vm293, %v540, %v1612
    %v1634 = vsel %vm293, %v616, %v1614
    %vm1635 = vcmask 130048
    %v1636 = vsel %vm1635, %v1633, %v1620
    %v1637 = vsel %vm1635, %v1634, %v1622
    %vm1638 = vcmask 195584
    %v1639 = vsel %vm1638, %v1636, %v1628
    %v1640 = vsel %vm1638, %v1637, %v1630
    %v1641 = vld [vmem:[%s5] sm:$0xff]
    %v1642 = vld [vmem:[%s5 + $0x8] sm:$0xff]
    %v1643 = vld [vmem:[%s5 + $0x10] sm:$0xff]
    %v1644 = vld [vmem:[%s5 + $0x18] sm:$0xff]
    %v1645 = vld [vmem:[%s9 + $0x1] sm:$0x1]
    %v1646 = vlaneseq
    %v1647 = vshrl.u32 %v1646, 7
    %v1648 = vsub.s32 0, %v1647
    %v1649 = vrot.slane %v1645, %v1648
    %v1651 = vsel %vm146, %v1639, 0
    %v1654 = vsel %vm146, %v1640, 0
    %1656 = vmatprep.subr.mxu0 0.0
    %1657 = vmatpush1.msra.mxu0 0.0
    %1658 = vmatprep.subr.mxu0 0.0
    %1659 = vmatpush1.msra.mxu0 0.0
    %1660 = vmatprep.subr.mxu0 0.0
    %1661 = vmatpush1.msra.mxu0 0.0
    %1662 = vmatprep.subr.mxu0 0.0
    %1663 = vmatpush1.msra.mxu0 0.0
    %1664 = vmatprep.subr.mxu0 0.0
    %1665 = vmatpush1.msra.mxu0 0.0
    %1666 = vmatprep.subr.mxu0 0.0
    %1667 = vmatpush1.msra.mxu0 0.0
    %1668 = vmatprep.subr.mxu0 0.0
    %1669 = vmatpush1.msra.mxu0 0.0
    %1670 = vmatprep.subr.mxu0 0.0
    %1671 = vmatpush1.msra.mxu0 0.0
    %1672 = vmatprep.subr.mxu0 0.0
    %1673 = vmatpush1.msra.mxu0 0.0
    %1674 = vmatprep.subr.mxu0 0.0
    %1675 = vmatpush1.msra.mxu0 0.0
    %1676 = vmatprep.subr.mxu0 0.0
    %1677 = vmatpush1.msra.mxu0 0.0
    %1678 = vmatprep.subr.mxu0 0.0
    %1679 = vmatpush1.msra.mxu0 0.0
    %1680 = vmatprep.subr.mxu0 0.0
    %1681 = vmatpush1.msra.mxu0 %v1644
    %1682 = vmatprep.subr.mxu0 0.0
    %1683 = vmatpush1.msra.mxu0 %v1643
    %1684 = vmatprep.subr.mxu0 0.0
    %1685 = vmatpush1.msra.mxu0 %v1642
    %1686 = vmatprep.subr.mxu0 0.0
    %1687 = vmatpush1.msra.mxu0 %v1641
    %1688 = vmatprep.subr.mxu0 0.0
    %1689 = vmatpush2.msra.mxu0 0.0
    %1690 = vmatprep.subr.mxu0 0.0
    %1691 = vmatpush2.msra.mxu0 0.0
    %1692 = vmatprep.subr.mxu0 0.0
    %1693 = vmatpush2.msra.mxu0 0.0
    %1694 = vmatprep.subr.mxu0 0.0
    %1695 = vmatpush2.msra.mxu0 0.0
    %1696 = vmatprep.subr.mxu0 0.0
    %1697 = vmatpush2.msra.mxu0 0.0
    %1698 = vmatprep.subr.mxu0 0.0
    %1699 = vmatpush2.msra.mxu0 0.0
    %1700 = vmatprep.subr.mxu0 0.0
    %1701 = vmatpush2.msra.mxu0 0.0
    %1702 = vmatprep.subr.mxu0 0.0
    %1703 = vmatpush2.msra.mxu0 0.0
    %1704 = vmatprep.subr.mxu0 0.0
    %1705 = vmatpush2.msra.mxu0 0.0
    %1706 = vmatprep.subr.mxu0 0.0
    %1707 = vmatpush2.msra.mxu0 0.0
    %1708 = vmatprep.subr.mxu0 0.0
    %1709 = vmatpush2.msra.mxu0 0.0
    %1710 = vmatprep.subr.mxu0 0.0
    %1711 = vmatpush2.msra.mxu0 0.0
    %1712 = vmatprep.subr.mxu0 0.0
    %1713 = vmatpush2.msra.mxu0 0.0
    %1714 = vmatprep.subr.mxu0 0.0
    %1715 = vmatpush2.msra.mxu0 0.0
    %1716 = vmatprep.subr.mxu0 0.0
    %1717 = vmatpush2.msra.mxu0 0.0
    %1718 = vmatprep.subr.mxu0 0.0
    %1719 = vmatpush2.msra.mxu0 0.0
    %1720 = vmatprep.mubr.f32.mxu0 0.0
    %1721 = vmatmul.mubr.f32.gmra.mxu0 %v1651
    %v1722 = vpop.f32.mrf.mxu0
    %v1723 = vadd.f32 %v1649, %v1722
    %v1724 = vpop.f32.mrf.mxu0
    %1725 = vmatprep.mubr.f32.mxu0 0.0
    %1726 = vmatmul.mubr.f32.gmra.mxu0 %v1654
    %v1727 = vpop.f32.mrf.mxu0
    %v1728 = vadd.f32 %v1649, %v1727
    %v1729 = vpop.f32.mrf.mxu0
    %1730 = vdwg.mxu0
    %v1731 = vadd.f32 %v184, %v1723
    %v1732 = vadd.f32 %v185, %v1728
    %v1733 = vld [vmem:[%s9 + $0x2] sm:$0x1]
    %v1734 = vld [vmem:[%s9 + $0x3] sm:$0x1]
    %v1735 = vsel %vm146, %v1731, 0.0
    %1736 = vadd.xlane.f32.xlu0 %v1735
    %v1737 = vpop.xlane.xlu0 %1736
    %v1738 = vsel %vm146, %v1732, 0.0
    %1739 = vadd.xlane.f32.xlu0 %v1738
    %v1740 = vpop.xlane.xlu0 %1739
    %v1741 = vmul.f32 %v1737, %v153
    %v1742 = vmul.f32 %v1740, %v153
    %v1743 = vsub.f32 %v1731, %v1741
    %v1744 = vsub.f32 %v1732, %v1742
    %v1745 = vmul.f32 %v1743, %v1743
    %v1746 = vmul.f32 %v1744, %v1744
    %v1747 = vsel %vm146, %v1745, 0.0
    %1748 = vadd.xlane.f32.xlu0 %v1747
    %v1749 = vpop.xlane.xlu0 %1748
    %v1750 = vsel %vm146, %v1746, 0.0
    %1751 = vadd.xlane.f32.xlu0 %v1750
    %v1752 = vpop.xlane.xlu0 %1751
    %v1753 = vmul.f32 %v1749, %v153
    %v1754 = vmul.f32 %v1752, %v153
    %v1755 = vadd.f32 %v1753, 1e-12
    %v1756 = vadd.f32 %v1754, 1e-12
    %v1757 = vrsqrt.pop %v1755
    %v1758 = vrsqrt.pop %v1756
    %v1759 = vmul.f32 %v1743, %v1757
    %v1760 = vmul.f32 %v1744, %v1758
    %v1761 = vlaneseq
    %v1762 = vshrl.u32 %v1761, 7
    %v1763 = vsub.s32 0, %v1762
    %v1764 = vrot.slane %v1733, %v1763
    %v1765 = vmul.f32 %v1759, %v1764
    %v1766 = vmul.f32 %v1760, %v1764
    %v1767 = vlaneseq
    %v1768 = vshrl.u32 %v1767, 7
    %v1769 = vsub.s32 0, %v1768
    %v1770 = vrot.slane %v1734, %v1769
    %v1771 = vadd.f32 %v1765, %v1770
    %v1772 = vadd.f32 %v1766, %v1770
    %v1773 = vld [vmem:[%s6] sm:$0xff]
    %v1774 = vld [vmem:[%s6 + $0x8] sm:$0xff]
    %v1775 = vld [vmem:[%s6 + $0x10] sm:$0xff]
    %v1776 = vld [vmem:[%s6 + $0x18] sm:$0xff]
    %v1777 = vld [vmem:[%s9 + $0x4] sm:$0x1]
    %v1778 = vlaneseq
    %v1779 = vshrl.u32 %v1778, 7
    %v1780 = vsub.s32 0, %v1779
    %v1781 = vrot.slane %v1777, %v1780
    %v1783 = vsel %vm146, %v1771, 0
    %v1786 = vsel %vm146, %v1772, 0
    %1788 = vmatprep.subr.mxu0 0.0
    %1789 = vmatpush1.msra.mxu0 0.0
    %1790 = vmatprep.subr.mxu0 0.0
    %1791 = vmatpush1.msra.mxu0 0.0
    %1792 = vmatprep.subr.mxu0 0.0
    %1793 = vmatpush1.msra.mxu0 0.0
    %1794 = vmatprep.subr.mxu0 0.0
    %1795 = vmatpush1.msra.mxu0 0.0
    %1796 = vmatprep.subr.mxu0 0.0
    %1797 = vmatpush1.msra.mxu0 0.0
    %1798 = vmatprep.subr.mxu0 0.0
    %1799 = vmatpush1.msra.mxu0 0.0
    %1800 = vmatprep.subr.mxu0 0.0
    %1801 = vmatpush1.msra.mxu0 0.0
    %1802 = vmatprep.subr.mxu0 0.0
    %1803 = vmatpush1.msra.mxu0 0.0
    %1804 = vmatprep.subr.mxu0 0.0
    %1805 = vmatpush1.msra.mxu0 0.0
    %1806 = vmatprep.subr.mxu0 0.0
    %1807 = vmatpush1.msra.mxu0 0.0
    %1808 = vmatprep.subr.mxu0 0.0
    %1809 = vmatpush1.msra.mxu0 0.0
    %1810 = vmatprep.subr.mxu0 0.0
    %1811 = vmatpush1.msra.mxu0 0.0
    %1812 = vmatprep.subr.mxu0 0.0
    %1813 = vmatpush1.msra.mxu0 %v1776
    %1814 = vmatprep.subr.mxu0 0.0
    %1815 = vmatpush1.msra.mxu0 %v1775
    %1816 = vmatprep.subr.mxu0 0.0
    %1817 = vmatpush1.msra.mxu0 %v1774
    %1818 = vmatprep.subr.mxu0 0.0
    %1819 = vmatpush1.msra.mxu0 %v1773
    %1820 = vmatprep.subr.mxu0 0.0
    %1821 = vmatpush2.msra.mxu0 0.0
    %1822 = vmatprep.subr.mxu0 0.0
    %1823 = vmatpush2.msra.mxu0 0.0
    %1824 = vmatprep.subr.mxu0 0.0
    %1825 = vmatpush2.msra.mxu0 0.0
    %1826 = vmatprep.subr.mxu0 0.0
    %1827 = vmatpush2.msra.mxu0 0.0
    %1828 = vmatprep.subr.mxu0 0.0
    %1829 = vmatpush2.msra.mxu0 0.0
    %1830 = vmatprep.subr.mxu0 0.0
    %1831 = vmatpush2.msra.mxu0 0.0
    %1832 = vmatprep.subr.mxu0 0.0
    %1833 = vmatpush2.msra.mxu0 0.0
    %1834 = vmatprep.subr.mxu0 0.0
    %1835 = vmatpush2.msra.mxu0 0.0
    %1836 = vmatprep.subr.mxu0 0.0
    %1837 = vmatpush2.msra.mxu0 0.0
    %1838 = vmatprep.subr.mxu0 0.0
    %1839 = vmatpush2.msra.mxu0 0.0
    %1840 = vmatprep.subr.mxu0 0.0
    %1841 = vmatpush2.msra.mxu0 0.0
    %1842 = vmatprep.subr.mxu0 0.0
    %1843 = vmatpush2.msra.mxu0 0.0
    %1844 = vmatprep.subr.mxu0 0.0
    %1845 = vmatpush2.msra.mxu0 0.0
    %1846 = vmatprep.subr.mxu0 0.0
    %1847 = vmatpush2.msra.mxu0 0.0
    %1848 = vmatprep.subr.mxu0 0.0
    %1849 = vmatpush2.msra.mxu0 0.0
    %1850 = vmatprep.subr.mxu0 0.0
    %1851 = vmatpush2.msra.mxu0 0.0
    %1852 = vmatprep.mubr.f32.mxu0 0.0
    %1853 = vmatmul.mubr.f32.gmra.mxu0 %v1783
    %v1854 = vpop.f32.mrf.mxu0
    %v1855 = vadd.f32 %v1781, %v1854
    %v1856 = vpop.f32.mrf.mxu0
    %1857 = vmatprep.mubr.f32.mxu0 0.0
    %1858 = vmatmul.mubr.f32.gmra.mxu0 %v1786
    %v1859 = vpop.f32.mrf.mxu0
    %v1860 = vadd.f32 %v1781, %v1859
    %v1861 = vpop.f32.mrf.mxu0
    %1862 = vdwg.mxu0
    %v1863 = vmul.f32 %v1855, 0.5
    %v1864 = vmul.f32 %v1860, 0.5
    %v1865 = vmul.f32 %v1855, 0.044715
    %v1866 = vmul.f32 %v1860, 0.044715
    %v1867 = vmul.f32 %v1865, %v1855
    %v1868 = vmul.f32 %v1866, %v1860
    %v1869 = vmul.f32 %v1867, %v1855
    %v1870 = vmul.f32 %v1868, %v1860
    %v1871 = vadd.f32 %v1855, %v1869
    %v1872 = vadd.f32 %v1860, %v1870
    %v1873 = vmul.f32 %v1871, 0.7978846
    %v1874 = vmul.f32 %v1872, 0.7978846
    %v1875 = vtanh.pop %v1873
    %v1876 = vtanh.pop %v1874
    %v1877 = vadd.f32 %v1875, 1.0
    %v1878 = vadd.f32 %v1876, 1.0
    %v1879 = vmul.f32 %v1863, %v1877
    %v1880 = vmul.f32 %v1864, %v1878
    %v1881 = vld [vmem:[%s7] sm:$0xff]
    %v1882 = vld [vmem:[%s7 + $0x8] sm:$0xff]
    %v1883 = vld [vmem:[%s7 + $0x10] sm:$0xff]
    %v1884 = vld [vmem:[%s7 + $0x18] sm:$0xff]
    %v1885 = vld [vmem:[%s7 + $0x20] sm:$0xff]
    %v1886 = vld [vmem:[%s7 + $0x28] sm:$0xff]
    %v1887 = vld [vmem:[%s7 + $0x30] sm:$0xff]
    %v1888 = vld [vmem:[%s7 + $0x38] sm:$0xff]
    %v1889 = vld [vmem:[%s7 + $0x40] sm:$0xff]
    %v1890 = vld [vmem:[%s7 + $0x48] sm:$0xff]
    %v1891 = vld [vmem:[%s7 + $0x50] sm:$0xff]
    %v1892 = vld [vmem:[%s7 + $0x58] sm:$0xff]
    %v1893 = vld [vmem:[%s7 + $0x60] sm:$0xff]
    %v1894 = vld [vmem:[%s7 + $0x68] sm:$0xff]
    %v1895 = vld [vmem:[%s7 + $0x70] sm:$0xff]
    %v1896 = vld [vmem:[%s7 + $0x78] sm:$0xff]
    %v1897 = vld [vmem:[%s9 + $0x5] sm:$0x1]
    %v1898 = vlaneseq
    %v1899 = vshrl.u32 %v1898, 7
    %v1900 = vsub.s32 0, %v1899
    %v1901 = vrot.slane %v1897, %v1900
    %1902 = vmatprep.subr.mxu0 0.0
    %1903 = vmatpush1.msra.mxu0 %v1896
    %1904 = vmatprep.subr.mxu0 0.0
    %1905 = vmatpush1.msra.mxu0 %v1895
    %1906 = vmatprep.subr.mxu0 0.0
    %1907 = vmatpush1.msra.mxu0 %v1894
    %1908 = vmatprep.subr.mxu0 0.0
    %1909 = vmatpush1.msra.mxu0 %v1893
    %1910 = vmatprep.subr.mxu0 0.0
    %1911 = vmatpush1.msra.mxu0 %v1892
    %1912 = vmatprep.subr.mxu0 0.0
    %1913 = vmatpush1.msra.mxu0 %v1891
    %1914 = vmatprep.subr.mxu0 0.0
    %1915 = vmatpush1.msra.mxu0 %v1890
    %1916 = vmatprep.subr.mxu0 0.0
    %1917 = vmatpush1.msra.mxu0 %v1889
    %1918 = vmatprep.subr.mxu0 0.0
    %1919 = vmatpush1.msra.mxu0 %v1888
    %1920 = vmatprep.subr.mxu0 0.0
    %1921 = vmatpush1.msra.mxu0 %v1887
    %1922 = vmatprep.subr.mxu0 0.0
    %1923 = vmatpush1.msra.mxu0 %v1886
    %1924 = vmatprep.subr.mxu0 0.0
    %1925 = vmatpush1.msra.mxu0 %v1885
    %1926 = vmatprep.subr.mxu0 0.0
    %1927 = vmatpush1.msra.mxu0 %v1884
    %1928 = vmatprep.subr.mxu0 0.0
    %1929 = vmatpush1.msra.mxu0 %v1883
    %1930 = vmatprep.subr.mxu0 0.0
    %1931 = vmatpush1.msra.mxu0 %v1882
    %1932 = vmatprep.subr.mxu0 0.0
    %1933 = vmatpush1.msra.mxu0 %v1881
    %1934 = vmatprep.subr.mxu0 0.0
    %1935 = vmatpush2.msra.mxu0 0.0
    %1936 = vmatprep.subr.mxu0 0.0
    %1937 = vmatpush2.msra.mxu0 0.0
    %1938 = vmatprep.subr.mxu0 0.0
    %1939 = vmatpush2.msra.mxu0 0.0
    %1940 = vmatprep.subr.mxu0 0.0
    %1941 = vmatpush2.msra.mxu0 0.0
    %1942 = vmatprep.subr.mxu0 0.0
    %1943 = vmatpush2.msra.mxu0 0.0
    %1944 = vmatprep.subr.mxu0 0.0
    %1945 = vmatpush2.msra.mxu0 0.0
    %1946 = vmatprep.subr.mxu0 0.0
    %1947 = vmatpush2.msra.mxu0 0.0
    %1948 = vmatprep.subr.mxu0 0.0
    %1949 = vmatpush2.msra.mxu0 0.0
    %1950 = vmatprep.subr.mxu0 0.0
    %1951 = vmatpush2.msra.mxu0 0.0
    %1952 = vmatprep.subr.mxu0 0.0
    %1953 = vmatpush2.msra.mxu0 0.0
    %1954 = vmatprep.subr.mxu0 0.0
    %1955 = vmatpush2.msra.mxu0 0.0
    %1956 = vmatprep.subr.mxu0 0.0
    %1957 = vmatpush2.msra.mxu0 0.0
    %1958 = vmatprep.subr.mxu0 0.0
    %1959 = vmatpush2.msra.mxu0 0.0
    %1960 = vmatprep.subr.mxu0 0.0
    %1961 = vmatpush2.msra.mxu0 0.0
    %1962 = vmatprep.subr.mxu0 0.0
    %1963 = vmatpush2.msra.mxu0 0.0
    %1964 = vmatprep.subr.mxu0 0.0
    %1965 = vmatpush2.msra.mxu0 0.0
    %1966 = vmatprep.mubr.f32.mxu0 0.0
    %1967 = vmatmul.mubr.f32.gmra.mxu0 %v1879
    %v1968 = vpop.f32.mrf.mxu0
    %v1969 = vadd.f32 %v1901, %v1968
    %v1970 = vpop.f32.mrf.mxu0
    %1971 = vmatprep.mubr.f32.mxu0 0.0
    %1972 = vmatmul.mubr.f32.gmra.mxu0 %v1880
    %v1973 = vpop.f32.mrf.mxu0
    %v1974 = vadd.f32 %v1901, %v1973
    %v1975 = vpop.f32.mrf.mxu0
    %1976 = vdwg.mxu0
    %v1977 = vadd.f32 %v1771, %v1969
    %v1978 = vadd.f32 %v1772, %v1974
    %v1979 = vld [vmem:[%s9 + $0x6] sm:$0x1]
    %v1980 = vld [vmem:[%s9 + $0x7] sm:$0x1]
    %v1981 = vsel %vm146, %v1977, 0.0
    %1982 = vadd.xlane.f32.xlu0 %v1981
    %v1983 = vpop.xlane.xlu0 %1982
    %v1984 = vsel %vm146, %v1978, 0.0
    %1985 = vadd.xlane.f32.xlu0 %v1984
    %v1986 = vpop.xlane.xlu0 %1985
    %v1987 = vmul.f32 %v1983, %v153
    %v1988 = vmul.f32 %v1986, %v153
    %v1989 = vsub.f32 %v1977, %v1987
    %v1990 = vsub.f32 %v1978, %v1988
    %v1991 = vmul.f32 %v1989, %v1989
    %v1992 = vmul.f32 %v1990, %v1990
    %v1993 = vsel %vm146, %v1991, 0.0
    %1994 = vadd.xlane.f32.xlu0 %v1993
    %v1995 = vpop.xlane.xlu0 %1994
    %v1996 = vsel %vm146, %v1992, 0.0
    %1997 = vadd.xlane.f32.xlu0 %v1996
    %v1998 = vpop.xlane.xlu0 %1997
    %v1999 = vmul.f32 %v1995, %v153
    %v2000 = vmul.f32 %v1998, %v153
    %v2001 = vadd.f32 %v1999, 1e-12
    %v2002 = vadd.f32 %v2000, 1e-12
    %v2003 = vrsqrt.pop %v2001
    %v2004 = vrsqrt.pop %v2002
    %v2005 = vmul.f32 %v1989, %v2003
    %v2006 = vmul.f32 %v1990, %v2004
    %v2007 = vlaneseq
    %v2008 = vshrl.u32 %v2007, 7
    %v2009 = vsub.s32 0, %v2008
    %v2010 = vrot.slane %v1979, %v2009
    %v2011 = vmul.f32 %v2005, %v2010
    %v2012 = vmul.f32 %v2006, %v2010
    %v2013 = vlaneseq
    %v2014 = vshrl.u32 %v2013, 7
    %v2015 = vsub.s32 0, %v2014
    %v2016 = vrot.slane %v1980, %v2015
    %v2017 = vadd.f32 %v2011, %v2016
    %v2018 = vadd.f32 %v2012, %v2016
    %s2019 = scalar_lea.vmem %s4, 32
    %v2020 = vld [vmem:[%s2019] sm:$0xff]
    %v2021 = vld [vmem:[%s2019 + $0x8] sm:$0xff]
    %v2022 = vld [vmem:[%s2019 + $0x10] sm:$0xff]
    %v2023 = vld [vmem:[%s2019 + $0x18] sm:$0xff]
    %v2024 = vld [vmem:[%s9 + $0x8] sm:$0x1]
    %v2025 = vlaneseq
    %v2026 = vshrl.u32 %v2025, 7
    %v2027 = vsub.s32 0, %v2026
    %v2028 = vrot.slane %v2024, %v2027
    %v2030 = vsel %vm146, %v2017, 0
    %v2033 = vsel %vm146, %v2018, 0
    %2035 = vmatprep.subr.mxu0 0.0
    %2036 = vmatpush1.msra.mxu0 0.0
    %2037 = vmatprep.subr.mxu0 0.0
    %2038 = vmatpush1.msra.mxu0 0.0
    %2039 = vmatprep.subr.mxu0 0.0
    %2040 = vmatpush1.msra.mxu0 0.0
    %2041 = vmatprep.subr.mxu0 0.0
    %2042 = vmatpush1.msra.mxu0 0.0
    %2043 = vmatprep.subr.mxu0 0.0
    %2044 = vmatpush1.msra.mxu0 0.0
    %2045 = vmatprep.subr.mxu0 0.0
    %2046 = vmatpush1.msra.mxu0 0.0
    %2047 = vmatprep.subr.mxu0 0.0
    %2048 = vmatpush1.msra.mxu0 0.0
    %2049 = vmatprep.subr.mxu0 0.0
    %2050 = vmatpush1.msra.mxu0 0.0
    %2051 = vmatprep.subr.mxu0 0.0
    %2052 = vmatpush1.msra.mxu0 0.0
    %2053 = vmatprep.subr.mxu0 0.0
    %2054 = vmatpush1.msra.mxu0 0.0
    %2055 = vmatprep.subr.mxu0 0.0
    %2056 = vmatpush1.msra.mxu0 0.0
    %2057 = vmatprep.subr.mxu0 0.0
    %2058 = vmatpush1.msra.mxu0 0.0
    %2059 = vmatprep.subr.mxu0 0.0
    %2060 = vmatpush1.msra.mxu0 %v2023
    %2061 = vmatprep.subr.mxu0 0.0
    %2062 = vmatpush1.msra.mxu0 %v2022
    %2063 = vmatprep.subr.mxu0 0.0
    %2064 = vmatpush1.msra.mxu0 %v2021
    %2065 = vmatprep.subr.mxu0 0.0
    %2066 = vmatpush1.msra.mxu0 %v2020
    %2067 = vmatprep.subr.mxu0 0.0
    %2068 = vmatpush2.msra.mxu0 0.0
    %2069 = vmatprep.subr.mxu0 0.0
    %2070 = vmatpush2.msra.mxu0 0.0
    %2071 = vmatprep.subr.mxu0 0.0
    %2072 = vmatpush2.msra.mxu0 0.0
    %2073 = vmatprep.subr.mxu0 0.0
    %2074 = vmatpush2.msra.mxu0 0.0
    %2075 = vmatprep.subr.mxu0 0.0
    %2076 = vmatpush2.msra.mxu0 0.0
    %2077 = vmatprep.subr.mxu0 0.0
    %2078 = vmatpush2.msra.mxu0 0.0
    %2079 = vmatprep.subr.mxu0 0.0
    %2080 = vmatpush2.msra.mxu0 0.0
    %2081 = vmatprep.subr.mxu0 0.0
    %2082 = vmatpush2.msra.mxu0 0.0
    %2083 = vmatprep.subr.mxu0 0.0
    %2084 = vmatpush2.msra.mxu0 0.0
    %2085 = vmatprep.subr.mxu0 0.0
    %2086 = vmatpush2.msra.mxu0 0.0
    %2087 = vmatprep.subr.mxu0 0.0
    %2088 = vmatpush2.msra.mxu0 0.0
    %2089 = vmatprep.subr.mxu0 0.0
    %2090 = vmatpush2.msra.mxu0 0.0
    %2091 = vmatprep.subr.mxu0 0.0
    %2092 = vmatpush2.msra.mxu0 0.0
    %2093 = vmatprep.subr.mxu0 0.0
    %2094 = vmatpush2.msra.mxu0 0.0
    %2095 = vmatprep.subr.mxu0 0.0
    %2096 = vmatpush2.msra.mxu0 0.0
    %2097 = vmatprep.subr.mxu0 0.0
    %2098 = vmatpush2.msra.mxu0 0.0
    %2099 = vmatprep.mubr.f32.mxu0 0.0
    %2100 = vmatmul.mubr.f32.gmra.mxu0 %v2030
    %v2101 = vpop.f32.mrf.mxu0
    %v2102 = vadd.f32 %v2028, %v2101
    %v2103 = vpop.f32.mrf.mxu0
    %2104 = vmatprep.mubr.f32.mxu0 0.0
    %2105 = vmatmul.mubr.f32.gmra.mxu0 %v2033
    %v2106 = vpop.f32.mrf.mxu0
    %v2107 = vadd.f32 %v2028, %v2106
    %v2108 = vpop.f32.mrf.mxu0
    %2109 = vdwg.mxu0
    %2111 = vrot.lane.b32.xlu0 %v2102, 96
    %v2112 = vpop.permute.xlu0 %2111
    %v2113 = vsel %vm293, %v2102, 0
    %v2115 = vsel %vm293, %v2112, 0
    %2117 = vmatprep.subr.mxu0 0.0
    %2118 = vmatpush1.xpose.msra.mxu0 0.0
    %2119 = vmatprep.subr.mxu0 0.0
    %2120 = vmatpush1.xpose.msra.mxu0 0.0
    %2121 = vmatprep.subr.mxu0 0.0
    %2122 = vmatpush1.xpose.msra.mxu0 0.0
    %2123 = vmatprep.subr.mxu0 0.0
    %2124 = vmatpush1.xpose.msra.mxu0 0.0
    %2125 = vmatprep.subr.mxu0 0.0
    %2126 = vmatpush1.xpose.msra.mxu0 0.0
    %2127 = vmatprep.subr.mxu0 0.0
    %2128 = vmatpush1.xpose.msra.mxu0 0.0
    %2129 = vmatprep.subr.mxu0 0.0
    %2130 = vmatpush1.xpose.msra.mxu0 0.0
    %2131 = vmatprep.subr.mxu0 0.0
    %2132 = vmatpush1.xpose.msra.mxu0 0.0
    %2133 = vmatprep.subr.mxu0 0.0
    %2134 = vmatpush1.xpose.msra.mxu0 0.0
    %2135 = vmatprep.subr.mxu0 0.0
    %2136 = vmatpush1.xpose.msra.mxu0 0.0
    %2137 = vmatprep.subr.mxu0 0.0
    %2138 = vmatpush1.xpose.msra.mxu0 0.0
    %2139 = vmatprep.subr.mxu0 0.0
    %2140 = vmatpush1.xpose.msra.mxu0 0.0
    %2141 = vmatprep.subr.mxu0 0.0
    %2142 = vmatpush1.xpose.msra.mxu0 0.0
    %2143 = vmatprep.subr.mxu0 0.0
    %2144 = vmatpush1.xpose.msra.mxu0 0.0
    %2145 = vmatprep.subr.mxu0 0.0
    %2146 = vmatpush1.xpose.msra.mxu0 0.0
    %2147 = vmatprep.subr.mxu0 0.0
    %2148 = vmatpush1.xpose.msra.mxu0 %v2115
    %2149 = vmatprep.subr.mxu0 0.0
    %2150 = vmatpush2.xpose.msra.mxu0 0.0
    %2151 = vmatprep.subr.mxu0 0.0
    %2152 = vmatpush2.xpose.msra.mxu0 0.0
    %2153 = vmatprep.subr.mxu0 0.0
    %2154 = vmatpush2.xpose.msra.mxu0 0.0
    %2155 = vmatprep.subr.mxu0 0.0
    %2156 = vmatpush2.xpose.msra.mxu0 0.0
    %2157 = vmatprep.subr.mxu0 0.0
    %2158 = vmatpush2.xpose.msra.mxu0 0.0
    %2159 = vmatprep.subr.mxu0 0.0
    %2160 = vmatpush2.xpose.msra.mxu0 0.0
    %2161 = vmatprep.subr.mxu0 0.0
    %2162 = vmatpush2.xpose.msra.mxu0 0.0
    %2163 = vmatprep.subr.mxu0 0.0
    %2164 = vmatpush2.xpose.msra.mxu0 0.0
    %2165 = vmatprep.subr.mxu0 0.0
    %2166 = vmatpush2.xpose.msra.mxu0 0.0
    %2167 = vmatprep.subr.mxu0 0.0
    %2168 = vmatpush2.xpose.msra.mxu0 0.0
    %2169 = vmatprep.subr.mxu0 0.0
    %2170 = vmatpush2.xpose.msra.mxu0 0.0
    %2171 = vmatprep.subr.mxu0 0.0
    %2172 = vmatpush2.xpose.msra.mxu0 0.0
    %2173 = vmatprep.subr.mxu0 0.0
    %2174 = vmatpush2.xpose.msra.mxu0 0.0
    %2175 = vmatprep.subr.mxu0 0.0
    %2176 = vmatpush2.xpose.msra.mxu0 0.0
    %2177 = vmatprep.subr.mxu0 0.0
    %2178 = vmatpush2.xpose.msra.mxu0 0.0
    %2179 = vmatprep.subr.mxu0 0.0
    %2180 = vmatpush2.xpose.msra.mxu0 0.0
    %2181 = vmatprep.mubr.f32.mxu0 0.0
    %2182 = vmatmul.mubr.f32.gmra.mxu0 %v2113
    %v2183 = vpop.f32.mrf.mxu0
    %v2184 = vadd.f32 %v283, %v2183
    %v2185 = vpop.f32.mrf.mxu0
    %2186 = vdwg.mxu0
    %2188 = vrot.lane.b32.xlu0 %v2107, 96
    %v2189 = vpop.permute.xlu0 %2188
    %v2190 = vsel %vm293, %v2107, 0
    %v2192 = vsel %vm293, %v2189, 0
    %2194 = vmatprep.subr.mxu0 0.0
    %2195 = vmatpush1.xpose.msra.mxu0 0.0
    %2196 = vmatprep.subr.mxu0 0.0
    %2197 = vmatpush1.xpose.msra.mxu0 0.0
    %2198 = vmatprep.subr.mxu0 0.0
    %2199 = vmatpush1.xpose.msra.mxu0 0.0
    %2200 = vmatprep.subr.mxu0 0.0
    %2201 = vmatpush1.xpose.msra.mxu0 0.0
    %2202 = vmatprep.subr.mxu0 0.0
    %2203 = vmatpush1.xpose.msra.mxu0 0.0
    %2204 = vmatprep.subr.mxu0 0.0
    %2205 = vmatpush1.xpose.msra.mxu0 0.0
    %2206 = vmatprep.subr.mxu0 0.0
    %2207 = vmatpush1.xpose.msra.mxu0 0.0
    %2208 = vmatprep.subr.mxu0 0.0
    %2209 = vmatpush1.xpose.msra.mxu0 0.0
    %2210 = vmatprep.subr.mxu0 0.0
    %2211 = vmatpush1.xpose.msra.mxu0 0.0
    %2212 = vmatprep.subr.mxu0 0.0
    %2213 = vmatpush1.xpose.msra.mxu0 0.0
    %2214 = vmatprep.subr.mxu0 0.0
    %2215 = vmatpush1.xpose.msra.mxu0 0.0
    %2216 = vmatprep.subr.mxu0 0.0
    %2217 = vmatpush1.xpose.msra.mxu0 0.0
    %2218 = vmatprep.subr.mxu0 0.0
    %2219 = vmatpush1.xpose.msra.mxu0 0.0
    %2220 = vmatprep.subr.mxu0 0.0
    %2221 = vmatpush1.xpose.msra.mxu0 0.0
    %2222 = vmatprep.subr.mxu0 0.0
    %2223 = vmatpush1.xpose.msra.mxu0 0.0
    %2224 = vmatprep.subr.mxu0 0.0
    %2225 = vmatpush1.xpose.msra.mxu0 %v2192
    %2226 = vmatprep.subr.mxu0 0.0
    %2227 = vmatpush2.xpose.msra.mxu0 0.0
    %2228 = vmatprep.subr.mxu0 0.0
    %2229 = vmatpush2.xpose.msra.mxu0 0.0
    %2230 = vmatprep.subr.mxu0 0.0
    %2231 = vmatpush2.xpose.msra.mxu0 0.0
    %2232 = vmatprep.subr.mxu0 0.0
    %2233 = vmatpush2.xpose.msra.mxu0 0.0
    %2234 = vmatprep.subr.mxu0 0.0
    %2235 = vmatpush2.xpose.msra.mxu0 0.0
    %2236 = vmatprep.subr.mxu0 0.0
    %2237 = vmatpush2.xpose.msra.mxu0 0.0
    %2238 = vmatprep.subr.mxu0 0.0
    %2239 = vmatpush2.xpose.msra.mxu0 0.0
    %2240 = vmatprep.subr.mxu0 0.0
    %2241 = vmatpush2.xpose.msra.mxu0 0.0
    %2242 = vmatprep.subr.mxu0 0.0
    %2243 = vmatpush2.xpose.msra.mxu0 0.0
    %2244 = vmatprep.subr.mxu0 0.0
    %2245 = vmatpush2.xpose.msra.mxu0 0.0
    %2246 = vmatprep.subr.mxu0 0.0
    %2247 = vmatpush2.xpose.msra.mxu0 0.0
    %2248 = vmatprep.subr.mxu0 0.0
    %2249 = vmatpush2.xpose.msra.mxu0 0.0
    %2250 = vmatprep.subr.mxu0 0.0
    %2251 = vmatpush2.xpose.msra.mxu0 0.0
    %2252 = vmatprep.subr.mxu0 0.0
    %2253 = vmatpush2.xpose.msra.mxu0 0.0
    %2254 = vmatprep.subr.mxu0 0.0
    %2255 = vmatpush2.xpose.msra.mxu0 0.0
    %2256 = vmatprep.subr.mxu0 0.0
    %2257 = vmatpush2.xpose.msra.mxu0 0.0
    %2258 = vmatprep.mubr.f32.mxu0 0.0
    %2259 = vmatmul.mubr.f32.gmra.mxu0 %v2190
    %v2260 = vpop.f32.mrf.mxu0
    %v2261 = vadd.f32 %v287, %v2260
    %v2262 = vpop.f32.mrf.mxu0
    %2263 = vdwg.mxu0
    %v2264 = vsel %vm293, %v2184, -inf
    %2265 = vmax.xlane.f32.xlu0 %v2264
    %v2266 = vpop.xlane.xlu0 %2265
    %v2267 = vsel %vm293, %v2261, -inf
    %2268 = vmax.xlane.f32.xlu0 %v2267
    %v2269 = vpop.xlane.xlu0 %2268
    %v2270 = vsub.f32 %v2184, %v2266
    %v2271 = vsub.f32 %v2261, %v2269
    %v2272 = vmul.f32 %v2270, 1.442695
    %v2273 = vpow.pop %v2272
    %v2274 = vmul.f32 %v2271, 1.442695
    %v2275 = vpow.pop %v2274
    %v2276 = vsel %vm293, %v2273, 0.0
    %2277 = vadd.xlane.f32.xlu0 %v2276
    %v2278 = vpop.xlane.xlu0 %2277
    %v2279 = vsel %vm293, %v2275, 0.0
    %2280 = vadd.xlane.f32.xlu0 %v2279
    %v2281 = vpop.xlane.xlu0 %2280
    %v2282 = vrcp.pop %v2278
    %v2283 = vmul.f32 %v2273, %v2282
    %v2284 = vrcp.pop %v2281
    %v2285 = vmul.f32 %v2275, %v2284
    %2286 = vrot.lane.b32.xlu0 %v2102, 64
    %v2287 = vpop.permute.xlu0 %2286
    %v2290 = vsel %vm293, %v2283, 0
    %2292 = vmatprep.subr.mxu0 0.0
    %2293 = vmatpush1.msra.mxu0 0.0
    %2294 = vmatprep.subr.mxu0 0.0
    %2295 = vmatpush1.msra.mxu0 0.0
    %2296 = vmatprep.subr.mxu0 0.0
    %2297 = vmatpush1.msra.mxu0 0.0
    %2298 = vmatprep.subr.mxu0 0.0
    %2299 = vmatpush1.msra.mxu0 0.0
    %2300 = vmatprep.subr.mxu0 0.0
    %2301 = vmatpush1.msra.mxu0 0.0
    %2302 = vmatprep.subr.mxu0 0.0
    %2303 = vmatpush1.msra.mxu0 0.0
    %2304 = vmatprep.subr.mxu0 0.0
    %2305 = vmatpush1.msra.mxu0 0.0
    %2306 = vmatprep.subr.mxu0 0.0
    %2307 = vmatpush1.msra.mxu0 0.0
    %2308 = vmatprep.subr.mxu0 0.0
    %2309 = vmatpush1.msra.mxu0 0.0
    %2310 = vmatprep.subr.mxu0 0.0
    %2311 = vmatpush1.msra.mxu0 0.0
    %2312 = vmatprep.subr.mxu0 0.0
    %2313 = vmatpush1.msra.mxu0 0.0
    %2314 = vmatprep.subr.mxu0 0.0
    %2315 = vmatpush1.msra.mxu0 0.0
    %2316 = vmatprep.subr.mxu0 0.0
    %2317 = vmatpush1.msra.mxu0 0.0
    %2318 = vmatprep.subr.mxu0 0.0
    %2319 = vmatpush1.msra.mxu0 0.0
    %2320 = vmatprep.subr.mxu0 0.0
    %2321 = vmatpush1.msra.mxu0 0.0
    %2322 = vmatprep.subr.mxu0 0.0
    %2323 = vmatpush1.msra.mxu0 %v2287
    %2324 = vmatprep.subr.mxu0 0.0
    %2325 = vmatpush2.msra.mxu0 0.0
    %2326 = vmatprep.subr.mxu0 0.0
    %2327 = vmatpush2.msra.mxu0 0.0
    %2328 = vmatprep.subr.mxu0 0.0
    %2329 = vmatpush2.msra.mxu0 0.0
    %2330 = vmatprep.subr.mxu0 0.0
    %2331 = vmatpush2.msra.mxu0 0.0
    %2332 = vmatprep.subr.mxu0 0.0
    %2333 = vmatpush2.msra.mxu0 0.0
    %2334 = vmatprep.subr.mxu0 0.0
    %2335 = vmatpush2.msra.mxu0 0.0
    %2336 = vmatprep.subr.mxu0 0.0
    %2337 = vmatpush2.msra.mxu0 0.0
    %2338 = vmatprep.subr.mxu0 0.0
    %2339 = vmatpush2.msra.mxu0 0.0
    %2340 = vmatprep.subr.mxu0 0.0
    %2341 = vmatpush2.msra.mxu0 0.0
    %2342 = vmatprep.subr.mxu0 0.0
    %2343 = vmatpush2.msra.mxu0 0.0
    %2344 = vmatprep.subr.mxu0 0.0
    %2345 = vmatpush2.msra.mxu0 0.0
    %2346 = vmatprep.subr.mxu0 0.0
    %2347 = vmatpush2.msra.mxu0 0.0
    %2348 = vmatprep.subr.mxu0 0.0
    %2349 = vmatpush2.msra.mxu0 0.0
    %2350 = vmatprep.subr.mxu0 0.0
    %2351 = vmatpush2.msra.mxu0 0.0
    %2352 = vmatprep.subr.mxu0 0.0
    %2353 = vmatpush2.msra.mxu0 0.0
    %2354 = vmatprep.subr.mxu0 0.0
    %2355 = vmatpush2.msra.mxu0 0.0
    %2356 = vmatprep.mubr.f32.mxu0 0.0
    %2357 = vmatmul.mubr.f32.gmra.mxu0 %v2290
    %v2358 = vpop.f32.mrf.mxu0
    %v2359 = vadd.f32 0.0, %v2358
    %v2360 = vpop.f32.mrf.mxu0
    %2361 = vdwg.mxu0
    %2362 = vrot.lane.b32.xlu0 %v2107, 64
    %v2363 = vpop.permute.xlu0 %2362
    %v2366 = vsel %vm293, %v2285, 0
    %2368 = vmatprep.subr.mxu0 0.0
    %2369 = vmatpush1.msra.mxu0 0.0
    %2370 = vmatprep.subr.mxu0 0.0
    %2371 = vmatpush1.msra.mxu0 0.0
    %2372 = vmatprep.subr.mxu0 0.0
    %2373 = vmatpush1.msra.mxu0 0.0
    %2374 = vmatprep.subr.mxu0 0.0
    %2375 = vmatpush1.msra.mxu0 0.0
    %2376 = vmatprep.subr.mxu0 0.0
    %2377 = vmatpush1.msra.mxu0 0.0
    %2378 = vmatprep.subr.mxu0 0.0
    %2379 = vmatpush1.msra.mxu0 0.0
    %2380 = vmatprep.subr.mxu0 0.0
    %2381 = vmatpush1.msra.mxu0 0.0
    %2382 = vmatprep.subr.mxu0 0.0
    %2383 = vmatpush1.msra.mxu0 0.0
    %2384 = vmatprep.subr.mxu0 0.0
    %2385 = vmatpush1.msra.mxu0 0.0
    %2386 = vmatprep.subr.mxu0 0.0
    %2387 = vmatpush1.msra.mxu0 0.0
    %2388 = vmatprep.subr.mxu0 0.0
    %2389 = vmatpush1.msra.mxu0 0.0
    %2390 = vmatprep.subr.mxu0 0.0
    %2391 = vmatpush1.msra.mxu0 0.0
    %2392 = vmatprep.subr.mxu0 0.0
    %2393 = vmatpush1.msra.mxu0 0.0
    %2394 = vmatprep.subr.mxu0 0.0
    %2395 = vmatpush1.msra.mxu0 0.0
    %2396 = vmatprep.subr.mxu0 0.0
    %2397 = vmatpush1.msra.mxu0 0.0
    %2398 = vmatprep.subr.mxu0 0.0
    %2399 = vmatpush1.msra.mxu0 %v2363
    %2400 = vmatprep.subr.mxu0 0.0
    %2401 = vmatpush2.msra.mxu0 0.0
    %2402 = vmatprep.subr.mxu0 0.0
    %2403 = vmatpush2.msra.mxu0 0.0
    %2404 = vmatprep.subr.mxu0 0.0
    %2405 = vmatpush2.msra.mxu0 0.0
    %2406 = vmatprep.subr.mxu0 0.0
    %2407 = vmatpush2.msra.mxu0 0.0
    %2408 = vmatprep.subr.mxu0 0.0
    %2409 = vmatpush2.msra.mxu0 0.0
    %2410 = vmatprep.subr.mxu0 0.0
    %2411 = vmatpush2.msra.mxu0 0.0
    %2412 = vmatprep.subr.mxu0 0.0
    %2413 = vmatpush2.msra.mxu0 0.0
    %2414 = vmatprep.subr.mxu0 0.0
    %2415 = vmatpush2.msra.mxu0 0.0
    %2416 = vmatprep.subr.mxu0 0.0
    %2417 = vmatpush2.msra.mxu0 0.0
    %2418 = vmatprep.subr.mxu0 0.0
    %2419 = vmatpush2.msra.mxu0 0.0
    %2420 = vmatprep.subr.mxu0 0.0
    %2421 = vmatpush2.msra.mxu0 0.0
    %2422 = vmatprep.subr.mxu0 0.0
    %2423 = vmatpush2.msra.mxu0 0.0
    %2424 = vmatprep.subr.mxu0 0.0
    %2425 = vmatpush2.msra.mxu0 0.0
    %2426 = vmatprep.subr.mxu0 0.0
    %2427 = vmatpush2.msra.mxu0 0.0
    %2428 = vmatprep.subr.mxu0 0.0
    %2429 = vmatpush2.msra.mxu0 0.0
    %2430 = vmatprep.subr.mxu0 0.0
    %2431 = vmatpush2.msra.mxu0 0.0
    %2432 = vmatprep.mubr.f32.mxu0 0.0
    %2433 = vmatmul.mubr.f32.gmra.mxu0 %v2366
    %v2434 = vpop.f32.mrf.mxu0
    %v2435 = vadd.f32 0.0, %v2434
    %v2436 = vpop.f32.mrf.mxu0
    %2437 = vdwg.mxu0
    %2438 = vrot.lane.b32.xlu0 %v2102, 120
    %v2439 = vpop.permute.xlu0 %2438
    %2440 = vrot.lane.b32.xlu0 %v2102, 88
    %v2441 = vpop.permute.xlu0 %2440
    %v2442 = vsel %vm293, %v2439, 0
    %v2444 = vsel %vm293, %v2441, 0
    %2446 = vmatprep.subr.mxu0 0.0
    %2447 = vmatpush1.xpose.msra.mxu0 0.0
    %2448 = vmatprep.subr.mxu0 0.0
    %2449 = vmatpush1.xpose.msra.mxu0 0.0
    %2450 = vmatprep.subr.mxu0 0.0
    %2451 = vmatpush1.xpose.msra.mxu0 0.0
    %2452 = vmatprep.subr.mxu0 0.0
    %2453 = vmatpush1.xpose.msra.mxu0 0.0
    %2454 = vmatprep.subr.mxu0 0.0
    %2455 = vmatpush1.xpose.msra.mxu0 0.0
    %2456 = vmatprep.subr.mxu0 0.0
    %2457 = vmatpush1.xpose.msra.mxu0 0.0
    %2458 = vmatprep.subr.mxu0 0.0
    %2459 = vmatpush1.xpose.msra.mxu0 0.0
    %2460 = vmatprep.subr.mxu0 0.0
    %2461 = vmatpush1.xpose.msra.mxu0 0.0
    %2462 = vmatprep.subr.mxu0 0.0
    %2463 = vmatpush1.xpose.msra.mxu0 0.0
    %2464 = vmatprep.subr.mxu0 0.0
    %2465 = vmatpush1.xpose.msra.mxu0 0.0
    %2466 = vmatprep.subr.mxu0 0.0
    %2467 = vmatpush1.xpose.msra.mxu0 0.0
    %2468 = vmatprep.subr.mxu0 0.0
    %2469 = vmatpush1.xpose.msra.mxu0 0.0
    %2470 = vmatprep.subr.mxu0 0.0
    %2471 = vmatpush1.xpose.msra.mxu0 0.0
    %2472 = vmatprep.subr.mxu0 0.0
    %2473 = vmatpush1.xpose.msra.mxu0 0.0
    %2474 = vmatprep.subr.mxu0 0.0
    %2475 = vmatpush1.xpose.msra.mxu0 0.0
    %2476 = vmatprep.subr.mxu0 0.0
    %2477 = vmatpush1.xpose.msra.mxu0 %v2444
    %2478 = vmatprep.subr.mxu0 0.0
    %2479 = vmatpush2.xpose.msra.mxu0 0.0
    %2480 = vmatprep.subr.mxu0 0.0
    %2481 = vmatpush2.xpose.msra.mxu0 0.0
    %2482 = vmatprep.subr.mxu0 0.0
    %2483 = vmatpush2.xpose.msra.mxu0 0.0
    %2484 = vmatprep.subr.mxu0 0.0
    %2485 = vmatpush2.xpose.msra.mxu0 0.0
    %2486 = vmatprep.subr.mxu0 0.0
    %2487 = vmatpush2.xpose.msra.mxu0 0.0
    %2488 = vmatprep.subr.mxu0 0.0
    %2489 = vmatpush2.xpose.msra.mxu0 0.0
    %2490 = vmatprep.subr.mxu0 0.0
    %2491 = vmatpush2.xpose.msra.mxu0 0.0
    %2492 = vmatprep.subr.mxu0 0.0
    %2493 = vmatpush2.xpose.msra.mxu0 0.0
    %2494 = vmatprep.subr.mxu0 0.0
    %2495 = vmatpush2.xpose.msra.mxu0 0.0
    %2496 = vmatprep.subr.mxu0 0.0
    %2497 = vmatpush2.xpose.msra.mxu0 0.0
    %2498 = vmatprep.subr.mxu0 0.0
    %2499 = vmatpush2.xpose.msra.mxu0 0.0
    %2500 = vmatprep.subr.mxu0 0.0
    %2501 = vmatpush2.xpose.msra.mxu0 0.0
    %2502 = vmatprep.subr.mxu0 0.0
    %2503 = vmatpush2.xpose.msra.mxu0 0.0
    %2504 = vmatprep.subr.mxu0 0.0
    %2505 = vmatpush2.xpose.msra.mxu0 0.0
    %2506 = vmatprep.subr.mxu0 0.0
    %2507 = vmatpush2.xpose.msra.mxu0 0.0
    %2508 = vmatprep.subr.mxu0 0.0
    %2509 = vmatpush2.xpose.msra.mxu0 0.0
    %2510 = vmatprep.mubr.f32.mxu0 0.0
    %2511 = vmatmul.mubr.f32.gmra.mxu0 %v2442
    %v2512 = vpop.f32.mrf.mxu0
    %v2513 = vadd.f32 %v283, %v2512
    %v2514 = vpop.f32.mrf.mxu0
    %2515 = vdwg.mxu0
    %2516 = vrot.lane.b32.xlu0 %v2107, 120
    %v2517 = vpop.permute.xlu0 %2516
    %2518 = vrot.lane.b32.xlu0 %v2107, 88
    %v2519 = vpop.permute.xlu0 %2518
    %v2520 = vsel %vm293, %v2517, 0
    %v2522 = vsel %vm293, %v2519, 0
    %2524 = vmatprep.subr.mxu0 0.0
    %2525 = vmatpush1.xpose.msra.mxu0 0.0
    %2526 = vmatprep.subr.mxu0 0.0
    %2527 = vmatpush1.xpose.msra.mxu0 0.0
    %2528 = vmatprep.subr.mxu0 0.0
    %2529 = vmatpush1.xpose.msra.mxu0 0.0
    %2530 = vmatprep.subr.mxu0 0.0
    %2531 = vmatpush1.xpose.msra.mxu0 0.0
    %2532 = vmatprep.subr.mxu0 0.0
    %2533 = vmatpush1.xpose.msra.mxu0 0.0
    %2534 = vmatprep.subr.mxu0 0.0
    %2535 = vmatpush1.xpose.msra.mxu0 0.0
    %2536 = vmatprep.subr.mxu0 0.0
    %2537 = vmatpush1.xpose.msra.mxu0 0.0
    %2538 = vmatprep.subr.mxu0 0.0
    %2539 = vmatpush1.xpose.msra.mxu0 0.0
    %2540 = vmatprep.subr.mxu0 0.0
    %2541 = vmatpush1.xpose.msra.mxu0 0.0
    %2542 = vmatprep.subr.mxu0 0.0
    %2543 = vmatpush1.xpose.msra.mxu0 0.0
    %2544 = vmatprep.subr.mxu0 0.0
    %2545 = vmatpush1.xpose.msra.mxu0 0.0
    %2546 = vmatprep.subr.mxu0 0.0
    %2547 = vmatpush1.xpose.msra.mxu0 0.0
    %2548 = vmatprep.subr.mxu0 0.0
    %2549 = vmatpush1.xpose.msra.mxu0 0.0
    %2550 = vmatprep.subr.mxu0 0.0
    %2551 = vmatpush1.xpose.msra.mxu0 0.0
    %2552 = vmatprep.subr.mxu0 0.0
    %2553 = vmatpush1.xpose.msra.mxu0 0.0
    %2554 = vmatprep.subr.mxu0 0.0
    %2555 = vmatpush1.xpose.msra.mxu0 %v2522
    %2556 = vmatprep.subr.mxu0 0.0
    %2557 = vmatpush2.xpose.msra.mxu0 0.0
    %2558 = vmatprep.subr.mxu0 0.0
    %2559 = vmatpush2.xpose.msra.mxu0 0.0
    %2560 = vmatprep.subr.mxu0 0.0
    %2561 = vmatpush2.xpose.msra.mxu0 0.0
    %2562 = vmatprep.subr.mxu0 0.0
    %2563 = vmatpush2.xpose.msra.mxu0 0.0
    %2564 = vmatprep.subr.mxu0 0.0
    %2565 = vmatpush2.xpose.msra.mxu0 0.0
    %2566 = vmatprep.subr.mxu0 0.0
    %2567 = vmatpush2.xpose.msra.mxu0 0.0
    %2568 = vmatprep.subr.mxu0 0.0
    %2569 = vmatpush2.xpose.msra.mxu0 0.0
    %2570 = vmatprep.subr.mxu0 0.0
    %2571 = vmatpush2.xpose.msra.mxu0 0.0
    %2572 = vmatprep.subr.mxu0 0.0
    %2573 = vmatpush2.xpose.msra.mxu0 0.0
    %2574 = vmatprep.subr.mxu0 0.0
    %2575 = vmatpush2.xpose.msra.mxu0 0.0
    %2576 = vmatprep.subr.mxu0 0.0
    %2577 = vmatpush2.xpose.msra.mxu0 0.0
    %2578 = vmatprep.subr.mxu0 0.0
    %2579 = vmatpush2.xpose.msra.mxu0 0.0
    %2580 = vmatprep.subr.mxu0 0.0
    %2581 = vmatpush2.xpose.msra.mxu0 0.0
    %2582 = vmatprep.subr.mxu0 0.0
    %2583 = vmatpush2.xpose.msra.mxu0 0.0
    %2584 = vmatprep.subr.mxu0 0.0
    %2585 = vmatpush2.xpose.msra.mxu0 0.0
    %2586 = vmatprep.subr.mxu0 0.0
    %2587 = vmatpush2.xpose.msra.mxu0 0.0
    %2588 = vmatprep.mubr.f32.mxu0 0.0
    %2589 = vmatmul.mubr.f32.gmra.mxu0 %v2520
    %v2590 = vpop.f32.mrf.mxu0
    %v2591 = vadd.f32 %v287, %v2590
    %v2592 = vpop.f32.mrf.mxu0
    %2593 = vdwg.mxu0
    %v2594 = vsel %vm293, %v2513, -inf
    %2595 = vmax.xlane.f32.xlu0 %v2594
    %v2596 = vpop.xlane.xlu0 %2595
    %v2597 = vsel %vm293, %v2591, -inf
    %2598 = vmax.xlane.f32.xlu0 %v2597
    %v2599 = vpop.xlane.xlu0 %2598
    %v2600 = vsub.f32 %v2513, %v2596
    %v2601 = vsub.f32 %v2591, %v2599
    %v2602 = vmul.f32 %v2600, 1.442695
    %v2603 = vpow.pop %v2602
    %v2604 = vmul.f32 %v2601, 1.442695
    %v2605 = vpow.pop %v2604
    %v2606 = vsel %vm293, %v2603, 0.0
    %2607 = vadd.xlane.f32.xlu0 %v2606
    %v2608 = vpop.xlane.xlu0 %2607
    %v2609 = vsel %vm293, %v2605, 0.0
    %2610 = vadd.xlane.f32.xlu0 %v2609
    %v2611 = vpop.xlane.xlu0 %2610
    %v2612 = vrcp.pop %v2608
    %v2613 = vmul.f32 %v2603, %v2612
    %v2614 = vrcp.pop %v2611
    %v2615 = vmul.f32 %v2605, %v2614
    %2616 = vrot.lane.b32.xlu0 %v2102, 56
    %v2617 = vpop.permute.xlu0 %2616
    %v2620 = vsel %vm293, %v2613, 0
    %2622 = vmatprep.subr.mxu0 0.0
    %2623 = vmatpush1.msra.mxu0 0.0
    %2624 = vmatprep.subr.mxu0 0.0
    %2625 = vmatpush1.msra.mxu0 0.0
    %2626 = vmatprep.subr.mxu0 0.0
    %2627 = vmatpush1.msra.mxu0 0.0
    %2628 = vmatprep.subr.mxu0 0.0
    %2629 = vmatpush1.msra.mxu0 0.0
    %2630 = vmatprep.subr.mxu0 0.0
    %2631 = vmatpush1.msra.mxu0 0.0
    %2632 = vmatprep.subr.mxu0 0.0
    %2633 = vmatpush1.msra.mxu0 0.0
    %2634 = vmatprep.subr.mxu0 0.0
    %2635 = vmatpush1.msra.mxu0 0.0
    %2636 = vmatprep.subr.mxu0 0.0
    %2637 = vmatpush1.msra.mxu0 0.0
    %2638 = vmatprep.subr.mxu0 0.0
    %2639 = vmatpush1.msra.mxu0 0.0
    %2640 = vmatprep.subr.mxu0 0.0
    %2641 = vmatpush1.msra.mxu0 0.0
    %2642 = vmatprep.subr.mxu0 0.0
    %2643 = vmatpush1.msra.mxu0 0.0
    %2644 = vmatprep.subr.mxu0 0.0
    %2645 = vmatpush1.msra.mxu0 0.0
    %2646 = vmatprep.subr.mxu0 0.0
    %2647 = vmatpush1.msra.mxu0 0.0
    %2648 = vmatprep.subr.mxu0 0.0
    %2649 = vmatpush1.msra.mxu0 0.0
    %2650 = vmatprep.subr.mxu0 0.0
    %2651 = vmatpush1.msra.mxu0 0.0
    %2652 = vmatprep.subr.mxu0 0.0
    %2653 = vmatpush1.msra.mxu0 %v2617
    %2654 = vmatprep.subr.mxu0 0.0
    %2655 = vmatpush2.msra.mxu0 0.0
    %2656 = vmatprep.subr.mxu0 0.0
    %2657 = vmatpush2.msra.mxu0 0.0
    %2658 = vmatprep.subr.mxu0 0.0
    %2659 = vmatpush2.msra.mxu0 0.0
    %2660 = vmatprep.subr.mxu0 0.0
    %2661 = vmatpush2.msra.mxu0 0.0
    %2662 = vmatprep.subr.mxu0 0.0
    %2663 = vmatpush2.msra.mxu0 0.0
    %2664 = vmatprep.subr.mxu0 0.0
    %2665 = vmatpush2.msra.mxu0 0.0
    %2666 = vmatprep.subr.mxu0 0.0
    %2667 = vmatpush2.msra.mxu0 0.0
    %2668 = vmatprep.subr.mxu0 0.0
    %2669 = vmatpush2.msra.mxu0 0.0
    %2670 = vmatprep.subr.mxu0 0.0
    %2671 = vmatpush2.msra.mxu0 0.0
    %2672 = vmatprep.subr.mxu0 0.0
    %2673 = vmatpush2.msra.mxu0 0.0
    %2674 = vmatprep.subr.mxu0 0.0
    %2675 = vmatpush2.msra.mxu0 0.0
    %2676 = vmatprep.subr.mxu0 0.0
    %2677 = vmatpush2.msra.mxu0 0.0
    %2678 = vmatprep.subr.mxu0 0.0
    %2679 = vmatpush2.msra.mxu0 0.0
    %2680 = vmatprep.subr.mxu0 0.0
    %2681 = vmatpush2.msra.mxu0 0.0
    %2682 = vmatprep.subr.mxu0 0.0
    %2683 = vmatpush2.msra.mxu0 0.0
    %2684 = vmatprep.subr.mxu0 0.0
    %2685 = vmatpush2.msra.mxu0 0.0
    %2686 = vmatprep.mubr.f32.mxu0 0.0
    %2687 = vmatmul.mubr.f32.gmra.mxu0 %v2620
    %v2688 = vpop.f32.mrf.mxu0
    %v2689 = vadd.f32 0.0, %v2688
    %v2690 = vpop.f32.mrf.mxu0
    %2691 = vdwg.mxu0
    %2692 = vrot.lane.b32.xlu0 %v2107, 56
    %v2693 = vpop.permute.xlu0 %2692
    %v2696 = vsel %vm293, %v2615, 0
    %2698 = vmatprep.subr.mxu0 0.0
    %2699 = vmatpush1.msra.mxu0 0.0
    %2700 = vmatprep.subr.mxu0 0.0
    %2701 = vmatpush1.msra.mxu0 0.0
    %2702 = vmatprep.subr.mxu0 0.0
    %2703 = vmatpush1.msra.mxu0 0.0
    %2704 = vmatprep.subr.mxu0 0.0
    %2705 = vmatpush1.msra.mxu0 0.0
    %2706 = vmatprep.subr.mxu0 0.0
    %2707 = vmatpush1.msra.mxu0 0.0
    %2708 = vmatprep.subr.mxu0 0.0
    %2709 = vmatpush1.msra.mxu0 0.0
    %2710 = vmatprep.subr.mxu0 0.0
    %2711 = vmatpush1.msra.mxu0 0.0
    %2712 = vmatprep.subr.mxu0 0.0
    %2713 = vmatpush1.msra.mxu0 0.0
    %2714 = vmatprep.subr.mxu0 0.0
    %2715 = vmatpush1.msra.mxu0 0.0
    %2716 = vmatprep.subr.mxu0 0.0
    %2717 = vmatpush1.msra.mxu0 0.0
    %2718 = vmatprep.subr.mxu0 0.0
    %2719 = vmatpush1.msra.mxu0 0.0
    %2720 = vmatprep.subr.mxu0 0.0
    %2721 = vmatpush1.msra.mxu0 0.0
    %2722 = vmatprep.subr.mxu0 0.0
    %2723 = vmatpush1.msra.mxu0 0.0
    %2724 = vmatprep.subr.mxu0 0.0
    %2725 = vmatpush1.msra.mxu0 0.0
    %2726 = vmatprep.subr.mxu0 0.0
    %2727 = vmatpush1.msra.mxu0 0.0
    %2728 = vmatprep.subr.mxu0 0.0
    %2729 = vmatpush1.msra.mxu0 %v2693
    %2730 = vmatprep.subr.mxu0 0.0
    %2731 = vmatpush2.msra.mxu0 0.0
    %2732 = vmatprep.subr.mxu0 0.0
    %2733 = vmatpush2.msra.mxu0 0.0
    %2734 = vmatprep.subr.mxu0 0.0
    %2735 = vmatpush2.msra.mxu0 0.0
    %2736 = vmatprep.subr.mxu0 0.0
    %2737 = vmatpush2.msra.mxu0 0.0
    %2738 = vmatprep.subr.mxu0 0.0
    %2739 = vmatpush2.msra.mxu0 0.0
    %2740 = vmatprep.subr.mxu0 0.0
    %2741 = vmatpush2.msra.mxu0 0.0
    %2742 = vmatprep.subr.mxu0 0.0
    %2743 = vmatpush2.msra.mxu0 0.0
    %2744 = vmatprep.subr.mxu0 0.0
    %2745 = vmatpush2.msra.mxu0 0.0
    %2746 = vmatprep.subr.mxu0 0.0
    %2747 = vmatpush2.msra.mxu0 0.0
    %2748 = vmatprep.subr.mxu0 0.0
    %2749 = vmatpush2.msra.mxu0 0.0
    %2750 = vmatprep.subr.mxu0 0.0
    %2751 = vmatpush2.msra.mxu0 0.0
    %2752 = vmatprep.subr.mxu0 0.0
    %2753 = vmatpush2.msra.mxu0 0.0
    %2754 = vmatprep.subr.mxu0 0.0
    %2755 = vmatpush2.msra.mxu0 0.0
    %2756 = vmatprep.subr.mxu0 0.0
    %2757 = vmatpush2.msra.mxu0 0.0
    %2758 = vmatprep.subr.mxu0 0.0
    %2759 = vmatpush2.msra.mxu0 0.0
    %2760 = vmatprep.subr.mxu0 0.0
    %2761 = vmatpush2.msra.mxu0 0.0
    %2762 = vmatprep.mubr.f32.mxu0 0.0
    %2763 = vmatmul.mubr.f32.gmra.mxu0 %v2696
    %v2764 = vpop.f32.mrf.mxu0
    %v2765 = vadd.f32 0.0, %v2764
    %v2766 = vpop.f32.mrf.mxu0
    %2767 = vdwg.mxu0
    %2768 = vrot.lane.b32.xlu0 %v2102, 112
    %v2769 = vpop.permute.xlu0 %2768
    %2770 = vrot.lane.b32.xlu0 %v2102, 80
    %v2771 = vpop.permute.xlu0 %2770
    %v2772 = vsel %vm293, %v2769, 0
    %v2774 = vsel %vm293, %v2771, 0
    %2776 = vmatprep.subr.mxu0 0.0
    %2777 = vmatpush1.xpose.msra.mxu0 0.0
    %2778 = vmatprep.subr.mxu0 0.0
    %2779 = vmatpush1.xpose.msra.mxu0 0.0
    %2780 = vmatprep.subr.mxu0 0.0
    %2781 = vmatpush1.xpose.msra.mxu0 0.0
    %2782 = vmatprep.subr.mxu0 0.0
    %2783 = vmatpush1.xpose.msra.mxu0 0.0
    %2784 = vmatprep.subr.mxu0 0.0
    %2785 = vmatpush1.xpose.msra.mxu0 0.0
    %2786 = vmatprep.subr.mxu0 0.0
    %2787 = vmatpush1.xpose.msra.mxu0 0.0
    %2788 = vmatprep.subr.mxu0 0.0
    %2789 = vmatpush1.xpose.msra.mxu0 0.0
    %2790 = vmatprep.subr.mxu0 0.0
    %2791 = vmatpush1.xpose.msra.mxu0 0.0
    %2792 = vmatprep.subr.mxu0 0.0
    %2793 = vmatpush1.xpose.msra.mxu0 0.0
    %2794 = vmatprep.subr.mxu0 0.0
    %2795 = vmatpush1.xpose.msra.mxu0 0.0
    %2796 = vmatprep.subr.mxu0 0.0
    %2797 = vmatpush1.xpose.msra.mxu0 0.0
    %2798 = vmatprep.subr.mxu0 0.0
    %2799 = vmatpush1.xpose.msra.mxu0 0.0
    %2800 = vmatprep.subr.mxu0 0.0
    %2801 = vmatpush1.xpose.msra.mxu0 0.0
    %2802 = vmatprep.subr.mxu0 0.0
    %2803 = vmatpush1.xpose.msra.mxu0 0.0
    %2804 = vmatprep.subr.mxu0 0.0
    %2805 = vmatpush1.xpose.msra.mxu0 0.0
    %2806 = vmatprep.subr.mxu0 0.0
    %2807 = vmatpush1.xpose.msra.mxu0 %v2774
    %2808 = vmatprep.subr.mxu0 0.0
    %2809 = vmatpush2.xpose.msra.mxu0 0.0
    %2810 = vmatprep.subr.mxu0 0.0
    %2811 = vmatpush2.xpose.msra.mxu0 0.0
    %2812 = vmatprep.subr.mxu0 0.0
    %2813 = vmatpush2.xpose.msra.mxu0 0.0
    %2814 = vmatprep.subr.mxu0 0.0
    %2815 = vmatpush2.xpose.msra.mxu0 0.0
    %2816 = vmatprep.subr.mxu0 0.0
    %2817 = vmatpush2.xpose.msra.mxu0 0.0
    %2818 = vmatprep.subr.mxu0 0.0
    %2819 = vmatpush2.xpose.msra.mxu0 0.0
    %2820 = vmatprep.subr.mxu0 0.0
    %2821 = vmatpush2.xpose.msra.mxu0 0.0
    %2822 = vmatprep.subr.mxu0 0.0
    %2823 = vmatpush2.xpose.msra.mxu0 0.0
    %2824 = vmatprep.subr.mxu0 0.0
    %2825 = vmatpush2.xpose.msra.mxu0 0.0
    %2826 = vmatprep.subr.mxu0 0.0
    %2827 = vmatpush2.xpose.msra.mxu0 0.0
    %2828 = vmatprep.subr.mxu0 0.0
    %2829 = vmatpush2.xpose.msra.mxu0 0.0
    %2830 = vmatprep.subr.mxu0 0.0
    %2831 = vmatpush2.xpose.msra.mxu0 0.0
    %2832 = vmatprep.subr.mxu0 0.0
    %2833 = vmatpush2.xpose.msra.mxu0 0.0
    %2834 = vmatprep.subr.mxu0 0.0
    %2835 = vmatpush2.xpose.msra.mxu0 0.0
    %2836 = vmatprep.subr.mxu0 0.0
    %2837 = vmatpush2.xpose.msra.mxu0 0.0
    %2838 = vmatprep.subr.mxu0 0.0
    %2839 = vmatpush2.xpose.msra.mxu0 0.0
    %2840 = vmatprep.mubr.f32.mxu0 0.0
    %2841 = vmatmul.mubr.f32.gmra.mxu0 %v2772
    %v2842 = vpop.f32.mrf.mxu0
    %v2843 = vadd.f32 %v283, %v2842
    %v2844 = vpop.f32.mrf.mxu0
    %2845 = vdwg.mxu0
    %2846 = vrot.lane.b32.xlu0 %v2107, 112
    %v2847 = vpop.permute.xlu0 %2846
    %2848 = vrot.lane.b32.xlu0 %v2107, 80
    %v2849 = vpop.permute.xlu0 %2848
    %v2850 = vsel %vm293, %v2847, 0
    %v2852 = vsel %vm293, %v2849, 0
    %2854 = vmatprep.subr.mxu0 0.0
    %2855 = vmatpush1.xpose.msra.mxu0 0.0
    %2856 = vmatprep.subr.mxu0 0.0
    %2857 = vmatpush1.xpose.msra.mxu0 0.0
    %2858 = vmatprep.subr.mxu0 0.0
    %2859 = vmatpush1.xpose.msra.mxu0 0.0
    %2860 = vmatprep.subr.mxu0 0.0
    %2861 = vmatpush1.xpose.msra.mxu0 0.0
    %2862 = vmatprep.subr.mxu0 0.0
    %2863 = vmatpush1.xpose.msra.mxu0 0.0
    %2864 = vmatprep.subr.mxu0 0.0
    %2865 = vmatpush1.xpose.msra.mxu0 0.0
    %2866 = vmatprep.subr.mxu0 0.0
    %2867 = vmatpush1.xpose.msra.mxu0 0.0
    %2868 = vmatprep.subr.mxu0 0.0
    %2869 = vmatpush1.xpose.msra.mxu0 0.0
    %2870 = vmatprep.subr.mxu0 0.0
    %2871 = vmatpush1.xpose.msra.mxu0 0.0
    %2872 = vmatprep.subr.mxu0 0.0
    %2873 = vmatpush1.xpose.msra.mxu0 0.0
    %2874 = vmatprep.subr.mxu0 0.0
    %2875 = vmatpush1.xpose.msra.mxu0 0.0
    %2876 = vmatprep.subr.mxu0 0.0
    %2877 = vmatpush1.xpose.msra.mxu0 0.0
    %2878 = vmatprep.subr.mxu0 0.0
    %2879 = vmatpush1.xpose.msra.mxu0 0.0
    %2880 = vmatprep.subr.mxu0 0.0
    %2881 = vmatpush1.xpose.msra.mxu0 0.0
    %2882 = vmatprep.subr.mxu0 0.0
    %2883 = vmatpush1.xpose.msra.mxu0 0.0
    %2884 = vmatprep.subr.mxu0 0.0
    %2885 = vmatpush1.xpose.msra.mxu0 %v2852
    %2886 = vmatprep.subr.mxu0 0.0
    %2887 = vmatpush2.xpose.msra.mxu0 0.0
    %2888 = vmatprep.subr.mxu0 0.0
    %2889 = vmatpush2.xpose.msra.mxu0 0.0
    %2890 = vmatprep.subr.mxu0 0.0
    %2891 = vmatpush2.xpose.msra.mxu0 0.0
    %2892 = vmatprep.subr.mxu0 0.0
    %2893 = vmatpush2.xpose.msra.mxu0 0.0
    %2894 = vmatprep.subr.mxu0 0.0
    %2895 = vmatpush2.xpose.msra.mxu0 0.0
    %2896 = vmatprep.subr.mxu0 0.0
    %2897 = vmatpush2.xpose.msra.mxu0 0.0
    %2898 = vmatprep.subr.mxu0 0.0
    %2899 = vmatpush2.xpose.msra.mxu0 0.0
    %2900 = vmatprep.subr.mxu0 0.0
    %2901 = vmatpush2.xpose.msra.mxu0 0.0
    %2902 = vmatprep.subr.mxu0 0.0
    %2903 = vmatpush2.xpose.msra.mxu0 0.0
    %2904 = vmatprep.subr.mxu0 0.0
    %2905 = vmatpush2.xpose.msra.mxu0 0.0
    %2906 = vmatprep.subr.mxu0 0.0
    %2907 = vmatpush2.xpose.msra.mxu0 0.0
    %2908 = vmatprep.subr.mxu0 0.0
    %2909 = vmatpush2.xpose.msra.mxu0 0.0
    %2910 = vmatprep.subr.mxu0 0.0
    %2911 = vmatpush2.xpose.msra.mxu0 0.0
    %2912 = vmatprep.subr.mxu0 0.0
    %2913 = vmatpush2.xpose.msra.mxu0 0.0
    %2914 = vmatprep.subr.mxu0 0.0
    %2915 = vmatpush2.xpose.msra.mxu0 0.0
    %2916 = vmatprep.subr.mxu0 0.0
    %2917 = vmatpush2.xpose.msra.mxu0 0.0
    %2918 = vmatprep.mubr.f32.mxu0 0.0
    %2919 = vmatmul.mubr.f32.gmra.mxu0 %v2850
    %v2920 = vpop.f32.mrf.mxu0
    %v2921 = vadd.f32 %v287, %v2920
    %v2922 = vpop.f32.mrf.mxu0
    %2923 = vdwg.mxu0
    %v2924 = vsel %vm293, %v2843, -inf
    %2925 = vmax.xlane.f32.xlu0 %v2924
    %v2926 = vpop.xlane.xlu0 %2925
    %v2927 = vsel %vm293, %v2921, -inf
    %2928 = vmax.xlane.f32.xlu0 %v2927
    %v2929 = vpop.xlane.xlu0 %2928
    %v2930 = vsub.f32 %v2843, %v2926
    %v2931 = vsub.f32 %v2921, %v2929
    %v2932 = vmul.f32 %v2930, 1.442695
    %v2933 = vpow.pop %v2932
    %v2934 = vmul.f32 %v2931, 1.442695
    %v2935 = vpow.pop %v2934
    %v2936 = vsel %vm293, %v2933, 0.0
    %2937 = vadd.xlane.f32.xlu0 %v2936
    %v2938 = vpop.xlane.xlu0 %2937
    %v2939 = vsel %vm293, %v2935, 0.0
    %2940 = vadd.xlane.f32.xlu0 %v2939
    %v2941 = vpop.xlane.xlu0 %2940
    %v2942 = vrcp.pop %v2938
    %v2943 = vmul.f32 %v2933, %v2942
    %v2944 = vrcp.pop %v2941
    %v2945 = vmul.f32 %v2935, %v2944
    %2946 = vrot.lane.b32.xlu0 %v2102, 48
    %v2947 = vpop.permute.xlu0 %2946
    %v2950 = vsel %vm293, %v2943, 0
    %2952 = vmatprep.subr.mxu0 0.0
    %2953 = vmatpush1.msra.mxu0 0.0
    %2954 = vmatprep.subr.mxu0 0.0
    %2955 = vmatpush1.msra.mxu0 0.0
    %2956 = vmatprep.subr.mxu0 0.0
    %2957 = vmatpush1.msra.mxu0 0.0
    %2958 = vmatprep.subr.mxu0 0.0
    %2959 = vmatpush1.msra.mxu0 0.0
    %2960 = vmatprep.subr.mxu0 0.0
    %2961 = vmatpush1.msra.mxu0 0.0
    %2962 = vmatprep.subr.mxu0 0.0
    %2963 = vmatpush1.msra.mxu0 0.0
    %2964 = vmatprep.subr.mxu0 0.0
    %2965 = vmatpush1.msra.mxu0 0.0
    %2966 = vmatprep.subr.mxu0 0.0
    %2967 = vmatpush1.msra.mxu0 0.0
    %2968 = vmatprep.subr.mxu0 0.0
    %2969 = vmatpush1.msra.mxu0 0.0
    %2970 = vmatprep.subr.mxu0 0.0
    %2971 = vmatpush1.msra.mxu0 0.0
    %2972 = vmatprep.subr.mxu0 0.0
    %2973 = vmatpush1.msra.mxu0 0.0
    %2974 = vmatprep.subr.mxu0 0.0
    %2975 = vmatpush1.msra.mxu0 0.0
    %2976 = vmatprep.subr.mxu0 0.0
    %2977 = vmatpush1.msra.mxu0 0.0
    %2978 = vmatprep.subr.mxu0 0.0
    %2979 = vmatpush1.msra.mxu0 0.0
    %2980 = vmatprep.subr.mxu0 0.0
    %2981 = vmatpush1.msra.mxu0 0.0
    %2982 = vmatprep.subr.mxu0 0.0
    %2983 = vmatpush1.msra.mxu0 %v2947
    %2984 = vmatprep.subr.mxu0 0.0
    %2985 = vmatpush2.msra.mxu0 0.0
    %2986 = vmatprep.subr.mxu0 0.0
    %2987 = vmatpush2.msra.mxu0 0.0
    %2988 = vmatprep.subr.mxu0 0.0
    %2989 = vmatpush2.msra.mxu0 0.0
    %2990 = vmatprep.subr.mxu0 0.0
    %2991 = vmatpush2.msra.mxu0 0.0
    %2992 = vmatprep.subr.mxu0 0.0
    %2993 = vmatpush2.msra.mxu0 0.0
    %2994 = vmatprep.subr.mxu0 0.0
    %2995 = vmatpush2.msra.mxu0 0.0
    %2996 = vmatprep.subr.mxu0 0.0
    %2997 = vmatpush2.msra.mxu0 0.0
    %2998 = vmatprep.subr.mxu0 0.0
    %2999 = vmatpush2.msra.mxu0 0.0
    %3000 = vmatprep.subr.mxu0 0.0
    %3001 = vmatpush2.msra.mxu0 0.0
    %3002 = vmatprep.subr.mxu0 0.0
    %3003 = vmatpush2.msra.mxu0 0.0
    %3004 = vmatprep.subr.mxu0 0.0
    %3005 = vmatpush2.msra.mxu0 0.0
    %3006 = vmatprep.subr.mxu0 0.0
    %3007 = vmatpush2.msra.mxu0 0.0
    %3008 = vmatprep.subr.mxu0 0.0
    %3009 = vmatpush2.msra.mxu0 0.0
    %3010 = vmatprep.subr.mxu0 0.0
    %3011 = vmatpush2.msra.mxu0 0.0
    %3012 = vmatprep.subr.mxu0 0.0
    %3013 = vmatpush2.msra.mxu0 0.0
    %3014 = vmatprep.subr.mxu0 0.0
    %3015 = vmatpush2.msra.mxu0 0.0
    %3016 = vmatprep.mubr.f32.mxu0 0.0
    %3017 = vmatmul.mubr.f32.gmra.mxu0 %v2950
    %v3018 = vpop.f32.mrf.mxu0
    %v3019 = vadd.f32 0.0, %v3018
    %v3020 = vpop.f32.mrf.mxu0
    %3021 = vdwg.mxu0
    %3022 = vrot.lane.b32.xlu0 %v2107, 48
    %v3023 = vpop.permute.xlu0 %3022
    %v3026 = vsel %vm293, %v2945, 0
    %3028 = vmatprep.subr.mxu0 0.0
    %3029 = vmatpush1.msra.mxu0 0.0
    %3030 = vmatprep.subr.mxu0 0.0
    %3031 = vmatpush1.msra.mxu0 0.0
    %3032 = vmatprep.subr.mxu0 0.0
    %3033 = vmatpush1.msra.mxu0 0.0
    %3034 = vmatprep.subr.mxu0 0.0
    %3035 = vmatpush1.msra.mxu0 0.0
    %3036 = vmatprep.subr.mxu0 0.0
    %3037 = vmatpush1.msra.mxu0 0.0
    %3038 = vmatprep.subr.mxu0 0.0
    %3039 = vmatpush1.msra.mxu0 0.0
    %3040 = vmatprep.subr.mxu0 0.0
    %3041 = vmatpush1.msra.mxu0 0.0
    %3042 = vmatprep.subr.mxu0 0.0
    %3043 = vmatpush1.msra.mxu0 0.0
    %3044 = vmatprep.subr.mxu0 0.0
    %3045 = vmatpush1.msra.mxu0 0.0
    %3046 = vmatprep.subr.mxu0 0.0
    %3047 = vmatpush1.msra.mxu0 0.0
    %3048 = vmatprep.subr.mxu0 0.0
    %3049 = vmatpush1.msra.mxu0 0.0
    %3050 = vmatprep.subr.mxu0 0.0
    %3051 = vmatpush1.msra.mxu0 0.0
    %3052 = vmatprep.subr.mxu0 0.0
    %3053 = vmatpush1.msra.mxu0 0.0
    %3054 = vmatprep.subr.mxu0 0.0
    %3055 = vmatpush1.msra.mxu0 0.0
    %3056 = vmatprep.subr.mxu0 0.0
    %3057 = vmatpush1.msra.mxu0 0.0
    %3058 = vmatprep.subr.mxu0 0.0
    %3059 = vmatpush1.msra.mxu0 %v3023
    %3060 = vmatprep.subr.mxu0 0.0
    %3061 = vmatpush2.msra.mxu0 0.0
    %3062 = vmatprep.subr.mxu0 0.0
    %3063 = vmatpush2.msra.mxu0 0.0
    %3064 = vmatprep.subr.mxu0 0.0
    %3065 = vmatpush2.msra.mxu0 0.0
    %3066 = vmatprep.subr.mxu0 0.0
    %3067 = vmatpush2.msra.mxu0 0.0
    %3068 = vmatprep.subr.mxu0 0.0
    %3069 = vmatpush2.msra.mxu0 0.0
    %3070 = vmatprep.subr.mxu0 0.0
    %3071 = vmatpush2.msra.mxu0 0.0
    %3072 = vmatprep.subr.mxu0 0.0
    %3073 = vmatpush2.msra.mxu0 0.0
    %3074 = vmatprep.subr.mxu0 0.0
    %3075 = vmatpush2.msra.mxu0 0.0
    %3076 = vmatprep.subr.mxu0 0.0
    %3077 = vmatpush2.msra.mxu0 0.0
    %3078 = vmatprep.subr.mxu0 0.0
    %3079 = vmatpush2.msra.mxu0 0.0
    %3080 = vmatprep.subr.mxu0 0.0
    %3081 = vmatpush2.msra.mxu0 0.0
    %3082 = vmatprep.subr.mxu0 0.0
    %3083 = vmatpush2.msra.mxu0 0.0
    %3084 = vmatprep.subr.mxu0 0.0
    %3085 = vmatpush2.msra.mxu0 0.0
    %3086 = vmatprep.subr.mxu0 0.0
    %3087 = vmatpush2.msra.mxu0 0.0
    %3088 = vmatprep.subr.mxu0 0.0
    %3089 = vmatpush2.msra.mxu0 0.0
    %3090 = vmatprep.subr.mxu0 0.0
    %3091 = vmatpush2.msra.mxu0 0.0
    %3092 = vmatprep.mubr.f32.mxu0 0.0
    %3093 = vmatmul.mubr.f32.gmra.mxu0 %v3026
    %v3094 = vpop.f32.mrf.mxu0
    %v3095 = vadd.f32 0.0, %v3094
    %v3096 = vpop.f32.mrf.mxu0
    %3097 = vdwg.mxu0
    %3098 = vrot.lane.b32.xlu0 %v2102, 104
    %v3099 = vpop.permute.xlu0 %3098
    %3100 = vrot.lane.b32.xlu0 %v2102, 72
    %v3101 = vpop.permute.xlu0 %3100
    %v3102 = vsel %vm293, %v3099, 0
    %v3104 = vsel %vm293, %v3101, 0
    %3106 = vmatprep.subr.mxu0 0.0
    %3107 = vmatpush1.xpose.msra.mxu0 0.0
    %3108 = vmatprep.subr.mxu0 0.0
    %3109 = vmatpush1.xpose.msra.mxu0 0.0
    %3110 = vmatprep.subr.mxu0 0.0
    %3111 = vmatpush1.xpose.msra.mxu0 0.0
    %3112 = vmatprep.subr.mxu0 0.0
    %3113 = vmatpush1.xpose.msra.mxu0 0.0
    %3114 = vmatprep.subr.mxu0 0.0
    %3115 = vmatpush1.xpose.msra.mxu0 0.0
    %3116 = vmatprep.subr.mxu0 0.0
    %3117 = vmatpush1.xpose.msra.mxu0 0.0
    %3118 = vmatprep.subr.mxu0 0.0
    %3119 = vmatpush1.xpose.msra.mxu0 0.0
    %3120 = vmatprep.subr.mxu0 0.0
    %3121 = vmatpush1.xpose.msra.mxu0 0.0
    %3122 = vmatprep.subr.mxu0 0.0
    %3123 = vmatpush1.xpose.msra.mxu0 0.0
    %3124 = vmatprep.subr.mxu0 0.0
    %3125 = vmatpush1.xpose.msra.mxu0 0.0
    %3126 = vmatprep.subr.mxu0 0.0
    %3127 = vmatpush1.xpose.msra.mxu0 0.0
    %3128 = vmatprep.subr.mxu0 0.0
    %3129 = vmatpush1.xpose.msra.mxu0 0.0
    %3130 = vmatprep.subr.mxu0 0.0
    %3131 = vmatpush1.xpose.msra.mxu0 0.0
    %3132 = vmatprep.subr.mxu0 0.0
    %3133 = vmatpush1.xpose.msra.mxu0 0.0
    %3134 = vmatprep.subr.mxu0 0.0
    %3135 = vmatpush1.xpose.msra.mxu0 0.0
    %3136 = vmatprep.subr.mxu0 0.0
    %3137 = vmatpush1.xpose.msra.mxu0 %v3104
    %3138 = vmatprep.subr.mxu0 0.0
    %3139 = vmatpush2.xpose.msra.mxu0 0.0
    %3140 = vmatprep.subr.mxu0 0.0
    %3141 = vmatpush2.xpose.msra.mxu0 0.0
    %3142 = vmatprep.subr.mxu0 0.0
    %3143 = vmatpush2.xpose.msra.mxu0 0.0
    %3144 = vmatprep.subr.mxu0 0.0
    %3145 = vmatpush2.xpose.msra.mxu0 0.0
    %3146 = vmatprep.subr.mxu0 0.0
    %3147 = vmatpush2.xpose.msra.mxu0 0.0
    %3148 = vmatprep.subr.mxu0 0.0
    %3149 = vmatpush2.xpose.msra.mxu0 0.0
    %3150 = vmatprep.subr.mxu0 0.0
    %3151 = vmatpush2.xpose.msra.mxu0 0.0
    %3152 = vmatprep.subr.mxu0 0.0
    %3153 = vmatpush2.xpose.msra.mxu0 0.0
    %3154 = vmatprep.subr.mxu0 0.0
    %3155 = vmatpush2.xpose.msra.mxu0 0.0
    %3156 = vmatprep.subr.mxu0 0.0
    %3157 = vmatpush2.xpose.msra.mxu0 0.0
    %3158 = vmatprep.subr.mxu0 0.0
    %3159 = vmatpush2.xpose.msra.mxu0 0.0
    %3160 = vmatprep.subr.mxu0 0.0
    %3161 = vmatpush2.xpose.msra.mxu0 0.0
    %3162 = vmatprep.subr.mxu0 0.0
    %3163 = vmatpush2.xpose.msra.mxu0 0.0
    %3164 = vmatprep.subr.mxu0 0.0
    %3165 = vmatpush2.xpose.msra.mxu0 0.0
    %3166 = vmatprep.subr.mxu0 0.0
    %3167 = vmatpush2.xpose.msra.mxu0 0.0
    %3168 = vmatprep.subr.mxu0 0.0
    %3169 = vmatpush2.xpose.msra.mxu0 0.0
    %3170 = vmatprep.mubr.f32.mxu0 0.0
    %3171 = vmatmul.mubr.f32.gmra.mxu0 %v3102
    %v3172 = vpop.f32.mrf.mxu0
    %v3173 = vadd.f32 %v283, %v3172
    %v3174 = vpop.f32.mrf.mxu0
    %3175 = vdwg.mxu0
    %3176 = vrot.lane.b32.xlu0 %v2107, 104
    %v3177 = vpop.permute.xlu0 %3176
    %3178 = vrot.lane.b32.xlu0 %v2107, 72
    %v3179 = vpop.permute.xlu0 %3178
    %v3180 = vsel %vm293, %v3177, 0
    %v3182 = vsel %vm293, %v3179, 0
    %3184 = vmatprep.subr.mxu0 0.0
    %3185 = vmatpush1.xpose.msra.mxu0 0.0
    %3186 = vmatprep.subr.mxu0 0.0
    %3187 = vmatpush1.xpose.msra.mxu0 0.0
    %3188 = vmatprep.subr.mxu0 0.0
    %3189 = vmatpush1.xpose.msra.mxu0 0.0
    %3190 = vmatprep.subr.mxu0 0.0
    %3191 = vmatpush1.xpose.msra.mxu0 0.0
    %3192 = vmatprep.subr.mxu0 0.0
    %3193 = vmatpush1.xpose.msra.mxu0 0.0
    %3194 = vmatprep.subr.mxu0 0.0
    %3195 = vmatpush1.xpose.msra.mxu0 0.0
    %3196 = vmatprep.subr.mxu0 0.0
    %3197 = vmatpush1.xpose.msra.mxu0 0.0
    %3198 = vmatprep.subr.mxu0 0.0
    %3199 = vmatpush1.xpose.msra.mxu0 0.0
    %3200 = vmatprep.subr.mxu0 0.0
    %3201 = vmatpush1.xpose.msra.mxu0 0.0
    %3202 = vmatprep.subr.mxu0 0.0
    %3203 = vmatpush1.xpose.msra.mxu0 0.0
    %3204 = vmatprep.subr.mxu0 0.0
    %3205 = vmatpush1.xpose.msra.mxu0 0.0
    %3206 = vmatprep.subr.mxu0 0.0
    %3207 = vmatpush1.xpose.msra.mxu0 0.0
    %3208 = vmatprep.subr.mxu0 0.0
    %3209 = vmatpush1.xpose.msra.mxu0 0.0
    %3210 = vmatprep.subr.mxu0 0.0
    %3211 = vmatpush1.xpose.msra.mxu0 0.0
    %3212 = vmatprep.subr.mxu0 0.0
    %3213 = vmatpush1.xpose.msra.mxu0 0.0
    %3214 = vmatprep.subr.mxu0 0.0
    %3215 = vmatpush1.xpose.msra.mxu0 %v3182
    %3216 = vmatprep.subr.mxu0 0.0
    %3217 = vmatpush2.xpose.msra.mxu0 0.0
    %3218 = vmatprep.subr.mxu0 0.0
    %3219 = vmatpush2.xpose.msra.mxu0 0.0
    %3220 = vmatprep.subr.mxu0 0.0
    %3221 = vmatpush2.xpose.msra.mxu0 0.0
    %3222 = vmatprep.subr.mxu0 0.0
    %3223 = vmatpush2.xpose.msra.mxu0 0.0
    %3224 = vmatprep.subr.mxu0 0.0
    %3225 = vmatpush2.xpose.msra.mxu0 0.0
    %3226 = vmatprep.subr.mxu0 0.0
    %3227 = vmatpush2.xpose.msra.mxu0 0.0
    %3228 = vmatprep.subr.mxu0 0.0
    %3229 = vmatpush2.xpose.msra.mxu0 0.0
    %3230 = vmatprep.subr.mxu0 0.0
    %3231 = vmatpush2.xpose.msra.mxu0 0.0
    %3232 = vmatprep.subr.mxu0 0.0
    %3233 = vmatpush2.xpose.msra.mxu0 0.0
    %3234 = vmatprep.subr.mxu0 0.0
    %3235 = vmatpush2.xpose.msra.mxu0 0.0
    %3236 = vmatprep.subr.mxu0 0.0
    %3237 = vmatpush2.xpose.msra.mxu0 0.0
    %3238 = vmatprep.subr.mxu0 0.0
    %3239 = vmatpush2.xpose.msra.mxu0 0.0
    %3240 = vmatprep.subr.mxu0 0.0
    %3241 = vmatpush2.xpose.msra.mxu0 0.0
    %3242 = vmatprep.subr.mxu0 0.0
    %3243 = vmatpush2.xpose.msra.mxu0 0.0
    %3244 = vmatprep.subr.mxu0 0.0
    %3245 = vmatpush2.xpose.msra.mxu0 0.0
    %3246 = vmatprep.subr.mxu0 0.0
    %3247 = vmatpush2.xpose.msra.mxu0 0.0
    %3248 = vmatprep.mubr.f32.mxu0 0.0
    %3249 = vmatmul.mubr.f32.gmra.mxu0 %v3180
    %v3250 = vpop.f32.mrf.mxu0
    %v3251 = vadd.f32 %v287, %v3250
    %v3252 = vpop.f32.mrf.mxu0
    %3253 = vdwg.mxu0
    %v3254 = vsel %vm293, %v3173, -inf
    %3255 = vmax.xlane.f32.xlu0 %v3254
    %v3256 = vpop.xlane.xlu0 %3255
    %v3257 = vsel %vm293, %v3251, -inf
    %3258 = vmax.xlane.f32.xlu0 %v3257
    %v3259 = vpop.xlane.xlu0 %3258
    %v3260 = vsub.f32 %v3173, %v3256
    %v3261 = vsub.f32 %v3251, %v3259
    %v3262 = vmul.f32 %v3260, 1.442695
    %v3263 = vpow.pop %v3262
    %v3264 = vmul.f32 %v3261, 1.442695
    %v3265 = vpow.pop %v3264
    %v3266 = vsel %vm293, %v3263, 0.0
    %3267 = vadd.xlane.f32.xlu0 %v3266
    %v3268 = vpop.xlane.xlu0 %3267
    %v3269 = vsel %vm293, %v3265, 0.0
    %3270 = vadd.xlane.f32.xlu0 %v3269
    %v3271 = vpop.xlane.xlu0 %3270
    %v3272 = vrcp.pop %v3268
    %v3273 = vmul.f32 %v3263, %v3272
    %v3274 = vrcp.pop %v3271
    %v3275 = vmul.f32 %v3265, %v3274
    %3276 = vrot.lane.b32.xlu0 %v2102, 40
    %v3277 = vpop.permute.xlu0 %3276
    %v3280 = vsel %vm293, %v3273, 0
    %3282 = vmatprep.subr.mxu0 0.0
    %3283 = vmatpush1.msra.mxu0 0.0
    %3284 = vmatprep.subr.mxu0 0.0
    %3285 = vmatpush1.msra.mxu0 0.0
    %3286 = vmatprep.subr.mxu0 0.0
    %3287 = vmatpush1.msra.mxu0 0.0
    %3288 = vmatprep.subr.mxu0 0.0
    %3289 = vmatpush1.msra.mxu0 0.0
    %3290 = vmatprep.subr.mxu0 0.0
    %3291 = vmatpush1.msra.mxu0 0.0
    %3292 = vmatprep.subr.mxu0 0.0
    %3293 = vmatpush1.msra.mxu0 0.0
    %3294 = vmatprep.subr.mxu0 0.0
    %3295 = vmatpush1.msra.mxu0 0.0
    %3296 = vmatprep.subr.mxu0 0.0
    %3297 = vmatpush1.msra.mxu0 0.0
    %3298 = vmatprep.subr.mxu0 0.0
    %3299 = vmatpush1.msra.mxu0 0.0
    %3300 = vmatprep.subr.mxu0 0.0
    %3301 = vmatpush1.msra.mxu0 0.0
    %3302 = vmatprep.subr.mxu0 0.0
    %3303 = vmatpush1.msra.mxu0 0.0
    %3304 = vmatprep.subr.mxu0 0.0
    %3305 = vmatpush1.msra.mxu0 0.0
    %3306 = vmatprep.subr.mxu0 0.0
    %3307 = vmatpush1.msra.mxu0 0.0
    %3308 = vmatprep.subr.mxu0 0.0
    %3309 = vmatpush1.msra.mxu0 0.0
    %3310 = vmatprep.subr.mxu0 0.0
    %3311 = vmatpush1.msra.mxu0 0.0
    %3312 = vmatprep.subr.mxu0 0.0
    %3313 = vmatpush1.msra.mxu0 %v3277
    %3314 = vmatprep.subr.mxu0 0.0
    %3315 = vmatpush2.msra.mxu0 0.0
    %3316 = vmatprep.subr.mxu0 0.0
    %3317 = vmatpush2.msra.mxu0 0.0
    %3318 = vmatprep.subr.mxu0 0.0
    %3319 = vmatpush2.msra.mxu0 0.0
    %3320 = vmatprep.subr.mxu0 0.0
    %3321 = vmatpush2.msra.mxu0 0.0
    %3322 = vmatprep.subr.mxu0 0.0
    %3323 = vmatpush2.msra.mxu0 0.0
    %3324 = vmatprep.subr.mxu0 0.0
    %3325 = vmatpush2.msra.mxu0 0.0
    %3326 = vmatprep.subr.mxu0 0.0
    %3327 = vmatpush2.msra.mxu0 0.0
    %3328 = vmatprep.subr.mxu0 0.0
    %3329 = vmatpush2.msra.mxu0 0.0
    %3330 = vmatprep.subr.mxu0 0.0
    %3331 = vmatpush2.msra.mxu0 0.0
    %3332 = vmatprep.subr.mxu0 0.0
    %3333 = vmatpush2.msra.mxu0 0.0
    %3334 = vmatprep.subr.mxu0 0.0
    %3335 = vmatpush2.msra.mxu0 0.0
    %3336 = vmatprep.subr.mxu0 0.0
    %3337 = vmatpush2.msra.mxu0 0.0
    %3338 = vmatprep.subr.mxu0 0.0
    %3339 = vmatpush2.msra.mxu0 0.0
    %3340 = vmatprep.subr.mxu0 0.0
    %3341 = vmatpush2.msra.mxu0 0.0
    %3342 = vmatprep.subr.mxu0 0.0
    %3343 = vmatpush2.msra.mxu0 0.0
    %3344 = vmatprep.subr.mxu0 0.0
    %3345 = vmatpush2.msra.mxu0 0.0
    %3346 = vmatprep.mubr.f32.mxu0 0.0
    %3347 = vmatmul.mubr.f32.gmra.mxu0 %v3280
    %v3348 = vpop.f32.mrf.mxu0
    %v3349 = vadd.f32 0.0, %v3348
    %v3350 = vpop.f32.mrf.mxu0
    %3351 = vdwg.mxu0
    %3352 = vrot.lane.b32.xlu0 %v2107, 40
    %v3353 = vpop.permute.xlu0 %3352
    %v3356 = vsel %vm293, %v3275, 0
    %3358 = vmatprep.subr.mxu0 0.0
    %3359 = vmatpush1.msra.mxu0 0.0
    %3360 = vmatprep.subr.mxu0 0.0
    %3361 = vmatpush1.msra.mxu0 0.0
    %3362 = vmatprep.subr.mxu0 0.0
    %3363 = vmatpush1.msra.mxu0 0.0
    %3364 = vmatprep.subr.mxu0 0.0
    %3365 = vmatpush1.msra.mxu0 0.0
    %3366 = vmatprep.subr.mxu0 0.0
    %3367 = vmatpush1.msra.mxu0 0.0
    %3368 = vmatprep.subr.mxu0 0.0
    %3369 = vmatpush1.msra.mxu0 0.0
    %3370 = vmatprep.subr.mxu0 0.0
    %3371 = vmatpush1.msra.mxu0 0.0
    %3372 = vmatprep.subr.mxu0 0.0
    %3373 = vmatpush1.msra.mxu0 0.0
    %3374 = vmatprep.subr.mxu0 0.0
    %3375 = vmatpush1.msra.mxu0 0.0
    %3376 = vmatprep.subr.mxu0 0.0
    %3377 = vmatpush1.msra.mxu0 0.0
    %3378 = vmatprep.subr.mxu0 0.0
    %3379 = vmatpush1.msra.mxu0 0.0
    %3380 = vmatprep.subr.mxu0 0.0
    %3381 = vmatpush1.msra.mxu0 0.0
    %3382 = vmatprep.subr.mxu0 0.0
    %3383 = vmatpush1.msra.mxu0 0.0
    %3384 = vmatprep.subr.mxu0 0.0
    %3385 = vmatpush1.msra.mxu0 0.0
    %3386 = vmatprep.subr.mxu0 0.0
    %3387 = vmatpush1.msra.mxu0 0.0
    %3388 = vmatprep.subr.mxu0 0.0
    %3389 = vmatpush1.msra.mxu0 %v3353
    %3390 = vmatprep.subr.mxu0 0.0
    %3391 = vmatpush2.msra.mxu0 0.0
    %3392 = vmatprep.subr.mxu0 0.0
    %3393 = vmatpush2.msra.mxu0 0.0
    %3394 = vmatprep.subr.mxu0 0.0
    %3395 = vmatpush2.msra.mxu0 0.0
    %3396 = vmatprep.subr.mxu0 0.0
    %3397 = vmatpush2.msra.mxu0 0.0
    %3398 = vmatprep.subr.mxu0 0.0
    %3399 = vmatpush2.msra.mxu0 0.0
    %3400 = vmatprep.subr.mxu0 0.0
    %3401 = vmatpush2.msra.mxu0 0.0
    %3402 = vmatprep.subr.mxu0 0.0
    %3403 = vmatpush2.msra.mxu0 0.0
    %3404 = vmatprep.subr.mxu0 0.0
    %3405 = vmatpush2.msra.mxu0 0.0
    %3406 = vmatprep.subr.mxu0 0.0
    %3407 = vmatpush2.msra.mxu0 0.0
    %3408 = vmatprep.subr.mxu0 0.0
    %3409 = vmatpush2.msra.mxu0 0.0
    %3410 = vmatprep.subr.mxu0 0.0
    %3411 = vmatpush2.msra.mxu0 0.0
    %3412 = vmatprep.subr.mxu0 0.0
    %3413 = vmatpush2.msra.mxu0 0.0
    %3414 = vmatprep.subr.mxu0 0.0
    %3415 = vmatpush2.msra.mxu0 0.0
    %3416 = vmatprep.subr.mxu0 0.0
    %3417 = vmatpush2.msra.mxu0 0.0
    %3418 = vmatprep.subr.mxu0 0.0
    %3419 = vmatpush2.msra.mxu0 0.0
    %3420 = vmatprep.subr.mxu0 0.0
    %3421 = vmatpush2.msra.mxu0 0.0
    %3422 = vmatprep.mubr.f32.mxu0 0.0
    %3423 = vmatmul.mubr.f32.gmra.mxu0 %v3356
    %v3424 = vpop.f32.mrf.mxu0
    %v3425 = vadd.f32 0.0, %v3424
    %v3426 = vpop.f32.mrf.mxu0
    %3427 = vdwg.mxu0
    %3430 = vrot.lane.b32.xlu0 %v2689, 8
    %v3431 = vpop.permute.xlu0 %3430
    %3432 = vrot.lane.b32.xlu0 %v2765, 8
    %v3433 = vpop.permute.xlu0 %3432
    %3438 = vrot.lane.b32.xlu0 %v3019, 16
    %v3439 = vpop.permute.xlu0 %3438
    %3440 = vrot.lane.b32.xlu0 %v3095, 16
    %v3441 = vpop.permute.xlu0 %3440
    %3446 = vrot.lane.b32.xlu0 %v3349, 24
    %v3447 = vpop.permute.xlu0 %3446
    %3448 = vrot.lane.b32.xlu0 %v3425, 24
    %v3449 = vpop.permute.xlu0 %3448
    %v3452 = vsel %vm293, %v2359, %v3431
    %v3453 = vsel %vm293, %v2435, %v3433
    %v3454 = vsel %vm1635, %v3452, %v3439
    %v3455 = vsel %vm1635, %v3453, %v3441
    %v3456 = vsel %vm1638, %v3454, %v3447
    %v3457 = vsel %vm1638, %v3455, %v3449
    %s3458 = scalar_lea.vmem %s5, 32
    %v3459 = vld [vmem:[%s3458] sm:$0xff]
    %v3460 = vld [vmem:[%s3458 + $0x8] sm:$0xff]
    %v3461 = vld [vmem:[%s3458 + $0x10] sm:$0xff]
    %v3462 = vld [vmem:[%s3458 + $0x18] sm:$0xff]
    %v3463 = vld [vmem:[%s9 + $0x9] sm:$0x1]
    %v3464 = vlaneseq
    %v3465 = vshrl.u32 %v3464, 7
    %v3466 = vsub.s32 0, %v3465
    %v3467 = vrot.slane %v3463, %v3466
    %v3469 = vsel %vm146, %v3456, 0
    %v3472 = vsel %vm146, %v3457, 0
    %3474 = vmatprep.subr.mxu0 0.0
    %3475 = vmatpush1.msra.mxu0 0.0
    %3476 = vmatprep.subr.mxu0 0.0
    %3477 = vmatpush1.msra.mxu0 0.0
    %3478 = vmatprep.subr.mxu0 0.0
    %3479 = vmatpush1.msra.mxu0 0.0
    %3480 = vmatprep.subr.mxu0 0.0
    %3481 = vmatpush1.msra.mxu0 0.0
    %3482 = vmatprep.subr.mxu0 0.0
    %3483 = vmatpush1.msra.mxu0 0.0
    %3484 = vmatprep.subr.mxu0 0.0
    %3485 = vmatpush1.msra.mxu0 0.0
    %3486 = vmatprep.subr.mxu0 0.0
    %3487 = vmatpush1.msra.mxu0 0.0
    %3488 = vmatprep.subr.mxu0 0.0
    %3489 = vmatpush1.msra.mxu0 0.0
    %3490 = vmatprep.subr.mxu0 0.0
    %3491 = vmatpush1.msra.mxu0 0.0
    %3492 = vmatprep.subr.mxu0 0.0
    %3493 = vmatpush1.msra.mxu0 0.0
    %3494 = vmatprep.subr.mxu0 0.0
    %3495 = vmatpush1.msra.mxu0 0.0
    %3496 = vmatprep.subr.mxu0 0.0
    %3497 = vmatpush1.msra.mxu0 0.0
    %3498 = vmatprep.subr.mxu0 0.0
    %3499 = vmatpush1.msra.mxu0 %v3462
    %3500 = vmatprep.subr.mxu0 0.0
    %3501 = vmatpush1.msra.mxu0 %v3461
    %3502 = vmatprep.subr.mxu0 0.0
    %3503 = vmatpush1.msra.mxu0 %v3460
    %3504 = vmatprep.subr.mxu0 0.0
    %3505 = vmatpush1.msra.mxu0 %v3459
    %3506 = vmatprep.subr.mxu0 0.0
    %3507 = vmatpush2.msra.mxu0 0.0
    %3508 = vmatprep.subr.mxu0 0.0
    %3509 = vmatpush2.msra.mxu0 0.0
    %3510 = vmatprep.subr.mxu0 0.0
    %3511 = vmatpush2.msra.mxu0 0.0
    %3512 = vmatprep.subr.mxu0 0.0
    %3513 = vmatpush2.msra.mxu0 0.0
    %3514 = vmatprep.subr.mxu0 0.0
    %3515 = vmatpush2.msra.mxu0 0.0
    %3516 = vmatprep.subr.mxu0 0.0
    %3517 = vmatpush2.msra.mxu0 0.0
    %3518 = vmatprep.subr.mxu0 0.0
    %3519 = vmatpush2.msra.mxu0 0.0
    %3520 = vmatprep.subr.mxu0 0.0
    %3521 = vmatpush2.msra.mxu0 0.0
    %3522 = vmatprep.subr.mxu0 0.0
    %3523 = vmatpush2.msra.mxu0 0.0
    %3524 = vmatprep.subr.mxu0 0.0
    %3525 = vmatpush2.msra.mxu0 0.0
    %3526 = vmatprep.subr.mxu0 0.0
    %3527 = vmatpush2.msra.mxu0 0.0
    %3528 = vmatprep.subr.mxu0 0.0
    %3529 = vmatpush2.msra.mxu0 0.0
    %3530 = vmatprep.subr.mxu0 0.0
    %3531 = vmatpush2.msra.mxu0 0.0
    %3532 = vmatprep.subr.mxu0 0.0
    %3533 = vmatpush2.msra.mxu0 0.0
    %3534 = vmatprep.subr.mxu0 0.0
    %3535 = vmatpush2.msra.mxu0 0.0
    %3536 = vmatprep.subr.mxu0 0.0
    %3537 = vmatpush2.msra.mxu0 0.0
    %3538 = vmatprep.mubr.f32.mxu0 0.0
    %3539 = vmatmul.mubr.f32.gmra.mxu0 %v3469
    %v3540 = vpop.f32.mrf.mxu0
    %v3541 = vadd.f32 %v3467, %v3540
    %v3542 = vpop.f32.mrf.mxu0
    %3543 = vmatprep.mubr.f32.mxu0 0.0
    %3544 = vmatmul.mubr.f32.gmra.mxu0 %v3472
    %v3545 = vpop.f32.mrf.mxu0
    %v3546 = vadd.f32 %v3467, %v3545
    %v3547 = vpop.f32.mrf.mxu0
    %3548 = vdwg.mxu0
    %v3549 = vadd.f32 %v2017, %v3541
    %v3550 = vadd.f32 %v2018, %v3546
    %v3551 = vld [vmem:[%s9 + $0xa] sm:$0x1]
    %v3552 = vld [vmem:[%s9 + $0xb] sm:$0x1]
    %v3553 = vsel %vm146, %v3549, 0.0
    %3554 = vadd.xlane.f32.xlu0 %v3553
    %v3555 = vpop.xlane.xlu0 %3554
    %v3556 = vsel %vm146, %v3550, 0.0
    %3557 = vadd.xlane.f32.xlu0 %v3556
    %v3558 = vpop.xlane.xlu0 %3557
    %v3559 = vmul.f32 %v3555, %v153
    %v3560 = vmul.f32 %v3558, %v153
    %v3561 = vsub.f32 %v3549, %v3559
    %v3562 = vsub.f32 %v3550, %v3560
    %v3563 = vmul.f32 %v3561, %v3561
    %v3564 = vmul.f32 %v3562, %v3562
    %v3565 = vsel %vm146, %v3563, 0.0
    %3566 = vadd.xlane.f32.xlu0 %v3565
    %v3567 = vpop.xlane.xlu0 %3566
    %v3568 = vsel %vm146, %v3564, 0.0
    %3569 = vadd.xlane.f32.xlu0 %v3568
    %v3570 = vpop.xlane.xlu0 %3569
    %v3571 = vmul.f32 %v3567, %v153
    %v3572 = vmul.f32 %v3570, %v153
    %v3573 = vadd.f32 %v3571, 1e-12
    %v3574 = vadd.f32 %v3572, 1e-12
    %v3575 = vrsqrt.pop %v3573
    %v3576 = vrsqrt.pop %v3574
    %v3577 = vmul.f32 %v3561, %v3575
    %v3578 = vmul.f32 %v3562, %v3576
    %v3579 = vlaneseq
    %v3580 = vshrl.u32 %v3579, 7
    %v3581 = vsub.s32 0, %v3580
    %v3582 = vrot.slane %v3551, %v3581
    %v3583 = vmul.f32 %v3577, %v3582
    %v3584 = vmul.f32 %v3578, %v3582
    %v3585 = vlaneseq
    %v3586 = vshrl.u32 %v3585, 7
    %v3587 = vsub.s32 0, %v3586
    %v3588 = vrot.slane %v3552, %v3587
    %v3589 = vadd.f32 %v3583, %v3588
    %v3590 = vadd.f32 %v3584, %v3588
    %s3591 = scalar_lea.vmem %s6, 32
    %v3592 = vld [vmem:[%s3591] sm:$0xff]
    %v3593 = vld [vmem:[%s3591 + $0x8] sm:$0xff]
    %v3594 = vld [vmem:[%s3591 + $0x10] sm:$0xff]
    %v3595 = vld [vmem:[%s3591 + $0x18] sm:$0xff]
    %v3596 = vld [vmem:[%s9 + $0xc] sm:$0x1]
    %v3597 = vlaneseq
    %v3598 = vshrl.u32 %v3597, 7
    %v3599 = vsub.s32 0, %v3598
    %v3600 = vrot.slane %v3596, %v3599
    %v3602 = vsel %vm146, %v3589, 0
    %v3605 = vsel %vm146, %v3590, 0
    %3607 = vmatprep.subr.mxu0 0.0
    %3608 = vmatpush1.msra.mxu0 0.0
    %3609 = vmatprep.subr.mxu0 0.0
    %3610 = vmatpush1.msra.mxu0 0.0
    %3611 = vmatprep.subr.mxu0 0.0
    %3612 = vmatpush1.msra.mxu0 0.0
    %3613 = vmatprep.subr.mxu0 0.0
    %3614 = vmatpush1.msra.mxu0 0.0
    %3615 = vmatprep.subr.mxu0 0.0
    %3616 = vmatpush1.msra.mxu0 0.0
    %3617 = vmatprep.subr.mxu0 0.0
    %3618 = vmatpush1.msra.mxu0 0.0
    %3619 = vmatprep.subr.mxu0 0.0
    %3620 = vmatpush1.msra.mxu0 0.0
    %3621 = vmatprep.subr.mxu0 0.0
    %3622 = vmatpush1.msra.mxu0 0.0
    %3623 = vmatprep.subr.mxu0 0.0
    %3624 = vmatpush1.msra.mxu0 0.0
    %3625 = vmatprep.subr.mxu0 0.0
    %3626 = vmatpush1.msra.mxu0 0.0
    %3627 = vmatprep.subr.mxu0 0.0
    %3628 = vmatpush1.msra.mxu0 0.0
    %3629 = vmatprep.subr.mxu0 0.0
    %3630 = vmatpush1.msra.mxu0 0.0
    %3631 = vmatprep.subr.mxu0 0.0
    %3632 = vmatpush1.msra.mxu0 %v3595
    %3633 = vmatprep.subr.mxu0 0.0
    %3634 = vmatpush1.msra.mxu0 %v3594
    %3635 = vmatprep.subr.mxu0 0.0
    %3636 = vmatpush1.msra.mxu0 %v3593
    %3637 = vmatprep.subr.mxu0 0.0
    %3638 = vmatpush1.msra.mxu0 %v3592
    %3639 = vmatprep.subr.mxu0 0.0
    %3640 = vmatpush2.msra.mxu0 0.0
    %3641 = vmatprep.subr.mxu0 0.0
    %3642 = vmatpush2.msra.mxu0 0.0
    %3643 = vmatprep.subr.mxu0 0.0
    %3644 = vmatpush2.msra.mxu0 0.0
    %3645 = vmatprep.subr.mxu0 0.0
    %3646 = vmatpush2.msra.mxu0 0.0
    %3647 = vmatprep.subr.mxu0 0.0
    %3648 = vmatpush2.msra.mxu0 0.0
    %3649 = vmatprep.subr.mxu0 0.0
    %3650 = vmatpush2.msra.mxu0 0.0
    %3651 = vmatprep.subr.mxu0 0.0
    %3652 = vmatpush2.msra.mxu0 0.0
    %3653 = vmatprep.subr.mxu0 0.0
    %3654 = vmatpush2.msra.mxu0 0.0
    %3655 = vmatprep.subr.mxu0 0.0
    %3656 = vmatpush2.msra.mxu0 0.0
    %3657 = vmatprep.subr.mxu0 0.0
    %3658 = vmatpush2.msra.mxu0 0.0
    %3659 = vmatprep.subr.mxu0 0.0
    %3660 = vmatpush2.msra.mxu0 0.0
    %3661 = vmatprep.subr.mxu0 0.0
    %3662 = vmatpush2.msra.mxu0 0.0
    %3663 = vmatprep.subr.mxu0 0.0
    %3664 = vmatpush2.msra.mxu0 0.0
    %3665 = vmatprep.subr.mxu0 0.0
    %3666 = vmatpush2.msra.mxu0 0.0
    %3667 = vmatprep.subr.mxu0 0.0
    %3668 = vmatpush2.msra.mxu0 0.0
    %3669 = vmatprep.subr.mxu0 0.0
    %3670 = vmatpush2.msra.mxu0 0.0
    %3671 = vmatprep.mubr.f32.mxu0 0.0
    %3672 = vmatmul.mubr.f32.gmra.mxu0 %v3602
    %v3673 = vpop.f32.mrf.mxu0
    %v3674 = vadd.f32 %v3600, %v3673
    %v3675 = vpop.f32.mrf.mxu0
    %3676 = vmatprep.mubr.f32.mxu0 0.0
    %3677 = vmatmul.mubr.f32.gmra.mxu0 %v3605
    %v3678 = vpop.f32.mrf.mxu0
    %v3679 = vadd.f32 %v3600, %v3678
    %v3680 = vpop.f32.mrf.mxu0
    %3681 = vdwg.mxu0
    %v3682 = vmul.f32 %v3674, 0.5
    %v3683 = vmul.f32 %v3679, 0.5
    %v3684 = vmul.f32 %v3674, 0.044715
    %v3685 = vmul.f32 %v3679, 0.044715
    %v3686 = vmul.f32 %v3684, %v3674
    %v3687 = vmul.f32 %v3685, %v3679
    %v3688 = vmul.f32 %v3686, %v3674
    %v3689 = vmul.f32 %v3687, %v3679
    %v3690 = vadd.f32 %v3674, %v3688
    %v3691 = vadd.f32 %v3679, %v3689
    %v3692 = vmul.f32 %v3690, 0.7978846
    %v3693 = vmul.f32 %v3691, 0.7978846
    %v3694 = vtanh.pop %v3692
    %v3695 = vtanh.pop %v3693
    %v3696 = vadd.f32 %v3694, 1.0
    %v3697 = vadd.f32 %v3695, 1.0
    %v3698 = vmul.f32 %v3682, %v3696
    %v3699 = vmul.f32 %v3683, %v3697
    %s3700 = scalar_lea.vmem %s7, 128
    %v3701 = vld [vmem:[%s3700] sm:$0xff]
    %v3702 = vld [vmem:[%s3700 + $0x8] sm:$0xff]
    %v3703 = vld [vmem:[%s3700 + $0x10] sm:$0xff]
    %v3704 = vld [vmem:[%s3700 + $0x18] sm:$0xff]
    %v3705 = vld [vmem:[%s3700 + $0x20] sm:$0xff]
    %v3706 = vld [vmem:[%s3700 + $0x28] sm:$0xff]
    %v3707 = vld [vmem:[%s3700 + $0x30] sm:$0xff]
    %v3708 = vld [vmem:[%s3700 + $0x38] sm:$0xff]
    %v3709 = vld [vmem:[%s3700 + $0x40] sm:$0xff]
    %v3710 = vld [vmem:[%s3700 + $0x48] sm:$0xff]
    %v3711 = vld [vmem:[%s3700 + $0x50] sm:$0xff]
    %v3712 = vld [vmem:[%s3700 + $0x58] sm:$0xff]
    %v3713 = vld [vmem:[%s3700 + $0x60] sm:$0xff]
    %v3714 = vld [vmem:[%s3700 + $0x68] sm:$0xff]
    %v3715 = vld [vmem:[%s3700 + $0x70] sm:$0xff]
    %v3716 = vld [vmem:[%s3700 + $0x78] sm:$0xff]
    %v3717 = vld [vmem:[%s9 + $0xd] sm:$0x1]
    %v3718 = vlaneseq
    %v3719 = vshrl.u32 %v3718, 7
    %v3720 = vsub.s32 0, %v3719
    %v3721 = vrot.slane %v3717, %v3720
    %3722 = vmatprep.subr.mxu0 0.0
    %3723 = vmatpush1.msra.mxu0 %v3716
    %3724 = vmatprep.subr.mxu0 0.0
    %3725 = vmatpush1.msra.mxu0 %v3715
    %3726 = vmatprep.subr.mxu0 0.0
    %3727 = vmatpush1.msra.mxu0 %v3714
    %3728 = vmatprep.subr.mxu0 0.0
    %3729 = vmatpush1.msra.mxu0 %v3713
    %3730 = vmatprep.subr.mxu0 0.0
    %3731 = vmatpush1.msra.mxu0 %v3712
    %3732 = vmatprep.subr.mxu0 0.0
    %3733 = vmatpush1.msra.mxu0 %v3711
    %3734 = vmatprep.subr.mxu0 0.0
    %3735 = vmatpush1.msra.mxu0 %v3710
    %3736 = vmatprep.subr.mxu0 0.0
    %3737 = vmatpush1.msra.mxu0 %v3709
    %3738 = vmatprep.subr.mxu0 0.0
    %3739 = vmatpush1.msra.mxu0 %v3708
    %3740 = vmatprep.subr.mxu0 0.0
    %3741 = vmatpush1.msra.mxu0 %v3707
    %3742 = vmatprep.subr.mxu0 0.0
    %3743 = vmatpush1.msra.mxu0 %v3706
    %3744 = vmatprep.subr.mxu0 0.0
    %3745 = vmatpush1.msra.mxu0 %v3705
    %3746 = vmatprep.subr.mxu0 0.0
    %3747 = vmatpush1.msra.mxu0 %v3704
    %3748 = vmatprep.subr.mxu0 0.0
    %3749 = vmatpush1.msra.mxu0 %v3703
    %3750 = vmatprep.subr.mxu0 0.0
    %3751 = vmatpush1.msra.mxu0 %v3702
    %3752 = vmatprep.subr.mxu0 0.0
    %3753 = vmatpush1.msra.mxu0 %v3701
    %3754 = vmatprep.subr.mxu0 0.0
    %3755 = vmatpush2.msra.mxu0 0.0
    %3756 = vmatprep.subr.mxu0 0.0
    %3757 = vmatpush2.msra.mxu0 0.0
    %3758 = vmatprep.subr.mxu0 0.0
    %3759 = vmatpush2.msra.mxu0 0.0
    %3760 = vmatprep.subr.mxu0 0.0
    %3761 = vmatpush2.msra.mxu0 0.0
    %3762 = vmatprep.subr.mxu0 0.0
    %3763 = vmatpush2.msra.mxu0 0.0
    %3764 = vmatprep.subr.mxu0 0.0
    %3765 = vmatpush2.msra.mxu0 0.0
    %3766 = vmatprep.subr.mxu0 0.0
    %3767 = vmatpush2.msra.mxu0 0.0
    %3768 = vmatprep.subr.mxu0 0.0
    %3769 = vmatpush2.msra.mxu0 0.0
    %3770 = vmatprep.subr.mxu0 0.0
    %3771 = vmatpush2.msra.mxu0 0.0
    %3772 = vmatprep.subr.mxu0 0.0
    %3773 = vmatpush2.msra.mxu0 0.0
    %3774 = vmatprep.subr.mxu0 0.0
    %3775 = vmatpush2.msra.mxu0 0.0
    %3776 = vmatprep.subr.mxu0 0.0
    %3777 = vmatpush2.msra.mxu0 0.0
    %3778 = vmatprep.subr.mxu0 0.0
    %3779 = vmatpush2.msra.mxu0 0.0
    %3780 = vmatprep.subr.mxu0 0.0
    %3781 = vmatpush2.msra.mxu0 0.0
    %3782 = vmatprep.subr.mxu0 0.0
    %3783 = vmatpush2.msra.mxu0 0.0
    %3784 = vmatprep.subr.mxu0 0.0
    %3785 = vmatpush2.msra.mxu0 0.0
    %3786 = vmatprep.mubr.f32.mxu0 0.0
    %3787 = vmatmul.mubr.f32.gmra.mxu0 %v3698
    %v3788 = vpop.f32.mrf.mxu0
    %v3789 = vadd.f32 %v3721, %v3788
    %v3790 = vpop.f32.mrf.mxu0
    %3791 = vmatprep.mubr.f32.mxu0 0.0
    %3792 = vmatmul.mubr.f32.gmra.mxu0 %v3699
    %v3793 = vpop.f32.mrf.mxu0
    %v3794 = vadd.f32 %v3721, %v3793
    %v3795 = vpop.f32.mrf.mxu0
    %3796 = vdwg.mxu0
    %v3797 = vadd.f32 %v3589, %v3789
    %v3798 = vadd.f32 %v3590, %v3794
    %v3799 = vld [vmem:[%s9 + $0xe] sm:$0x1]
    %v3800 = vld [vmem:[%s9 + $0xf] sm:$0x1]
    %v3801 = vsel %vm146, %v3797, 0.0
    %3802 = vadd.xlane.f32.xlu0 %v3801
    %v3803 = vpop.xlane.xlu0 %3802
    %v3804 = vsel %vm146, %v3798, 0.0
    %3805 = vadd.xlane.f32.xlu0 %v3804
    %v3806 = vpop.xlane.xlu0 %3805
    %v3807 = vmul.f32 %v3803, %v153
    %v3808 = vmul.f32 %v3806, %v153
    %v3809 = vsub.f32 %v3797, %v3807
    %v3810 = vsub.f32 %v3798, %v3808
    %v3811 = vmul.f32 %v3809, %v3809
    %v3812 = vmul.f32 %v3810, %v3810
    %v3813 = vsel %vm146, %v3811, 0.0
    %3814 = vadd.xlane.f32.xlu0 %v3813
    %v3815 = vpop.xlane.xlu0 %3814
    %v3816 = vsel %vm146, %v3812, 0.0
    %3817 = vadd.xlane.f32.xlu0 %v3816
    %v3818 = vpop.xlane.xlu0 %3817
    %v3819 = vmul.f32 %v3815, %v153
    %v3820 = vmul.f32 %v3818, %v153
    %v3821 = vadd.f32 %v3819, 1e-12
    %v3822 = vadd.f32 %v3820, 1e-12
    %v3823 = vrsqrt.pop %v3821
    %v3824 = vrsqrt.pop %v3822
    %v3825 = vmul.f32 %v3809, %v3823
    %v3826 = vmul.f32 %v3810, %v3824
    %v3827 = vlaneseq
    %v3828 = vshrl.u32 %v3827, 7
    %v3829 = vsub.s32 0, %v3828
    %v3830 = vrot.slane %v3799, %v3829
    %v3831 = vmul.f32 %v3825, %v3830
    %v3832 = vmul.f32 %v3826, %v3830
    %v3833 = vlaneseq
    %v3834 = vshrl.u32 %v3833, 7
    %v3835 = vsub.s32 0, %v3834
    %v3836 = vrot.slane %v3800, %v3835
    %v3837 = vadd.f32 %v3831, %v3836
    %v3838 = vadd.f32 %v3832, %v3836
    %v3840 = vrot.slane %v3838, 7
    %vm3842 = vcmask 1040384
    %v3843 = vsel %vm3842, %v3837, %v3840
    %v3844 = vld [vmem:[%s8] sm:$0xff]
    %v3845 = vld [vmem:[%s8 + $0x8] sm:$0xff]
    %v3846 = vld [vmem:[%s8 + $0x10] sm:$0xff]
    %v3847 = vld [vmem:[%s8 + $0x18] sm:$0xff]
    %v3848 = vld [vmem:[%s9 + $0x12] sm:$0x1]
    %v3849 = vlaneseq
    %v3850 = vshrl.u32 %v3849, 7
    %v3851 = vsub.s32 0, %v3850
    %v3852 = vrot.slane %v3848, %v3851
    %v3854 = vsel %vm146, %v3843, 0
    %3856 = vmatprep.subr.mxu0 0.0
    %3857 = vmatpush1.msra.mxu0 0.0
    %3858 = vmatprep.subr.mxu0 0.0
    %3859 = vmatpush1.msra.mxu0 0.0
    %3860 = vmatprep.subr.mxu0 0.0
    %3861 = vmatpush1.msra.mxu0 0.0
    %3862 = vmatprep.subr.mxu0 0.0
    %3863 = vmatpush1.msra.mxu0 0.0
    %3864 = vmatprep.subr.mxu0 0.0
    %3865 = vmatpush1.msra.mxu0 0.0
    %3866 = vmatprep.subr.mxu0 0.0
    %3867 = vmatpush1.msra.mxu0 0.0
    %3868 = vmatprep.subr.mxu0 0.0
    %3869 = vmatpush1.msra.mxu0 0.0
    %3870 = vmatprep.subr.mxu0 0.0
    %3871 = vmatpush1.msra.mxu0 0.0
    %3872 = vmatprep.subr.mxu0 0.0
    %3873 = vmatpush1.msra.mxu0 0.0
    %3874 = vmatprep.subr.mxu0 0.0
    %3875 = vmatpush1.msra.mxu0 0.0
    %3876 = vmatprep.subr.mxu0 0.0
    %3877 = vmatpush1.msra.mxu0 0.0
    %3878 = vmatprep.subr.mxu0 0.0
    %3879 = vmatpush1.msra.mxu0 0.0
    %3880 = vmatprep.subr.mxu0 0.0
    %3881 = vmatpush1.msra.mxu0 %v3847
    %3882 = vmatprep.subr.mxu0 0.0
    %3883 = vmatpush1.msra.mxu0 %v3846
    %3884 = vmatprep.subr.mxu0 0.0
    %3885 = vmatpush1.msra.mxu0 %v3845
    %3886 = vmatprep.subr.mxu0 0.0
    %3887 = vmatpush1.msra.mxu0 %v3844
    %3888 = vmatprep.subr.mxu0 0.0
    %3889 = vmatpush2.msra.mxu0 0.0
    %3890 = vmatprep.subr.mxu0 0.0
    %3891 = vmatpush2.msra.mxu0 0.0
    %3892 = vmatprep.subr.mxu0 0.0
    %3893 = vmatpush2.msra.mxu0 0.0
    %3894 = vmatprep.subr.mxu0 0.0
    %3895 = vmatpush2.msra.mxu0 0.0
    %3896 = vmatprep.subr.mxu0 0.0
    %3897 = vmatpush2.msra.mxu0 0.0
    %3898 = vmatprep.subr.mxu0 0.0
    %3899 = vmatpush2.msra.mxu0 0.0
    %3900 = vmatprep.subr.mxu0 0.0
    %3901 = vmatpush2.msra.mxu0 0.0
    %3902 = vmatprep.subr.mxu0 0.0
    %3903 = vmatpush2.msra.mxu0 0.0
    %3904 = vmatprep.subr.mxu0 0.0
    %3905 = vmatpush2.msra.mxu0 0.0
    %3906 = vmatprep.subr.mxu0 0.0
    %3907 = vmatpush2.msra.mxu0 0.0
    %3908 = vmatprep.subr.mxu0 0.0
    %3909 = vmatpush2.msra.mxu0 0.0
    %3910 = vmatprep.subr.mxu0 0.0
    %3911 = vmatpush2.msra.mxu0 0.0
    %3912 = vmatprep.subr.mxu0 0.0
    %3913 = vmatpush2.msra.mxu0 0.0
    %3914 = vmatprep.subr.mxu0 0.0
    %3915 = vmatpush2.msra.mxu0 0.0
    %3916 = vmatprep.subr.mxu0 0.0
    %3917 = vmatpush2.msra.mxu0 0.0
    %3918 = vmatprep.subr.mxu0 0.0
    %3919 = vmatpush2.msra.mxu0 0.0
    %3920 = vmatprep.mubr.f32.mxu0 0.0
    %3921 = vmatmul.mubr.f32.gmra.mxu0 %v3854
    %v3922 = vpop.f32.mrf.mxu0
    %v3923 = vadd.f32 %v3852, %v3922
    %v3924 = vpop.f32.mrf.mxu0
    %3925 = vdwg.mxu0
    %3926 = vst [vmem:[#allocation2] sm:$0x3] %v3923
    // Predicated region
    $region42: #{bert_difficulty_classifier.1} parent=1 // pred_check
      _
    $region43: #{bert_difficulty_classifier.1} parent=1 // pred_check_branch
      %3928 = sbr.rel (0) target = $region45
    $region44: #{bert_difficulty_classifier.1} parent=1 // pred_region
      %s3930 = ssub.s32 32, 32
      %3931 = vsyncadd [#allocation3], %s3930
      %s3933 = sshll.u32 [#allocation2], 4
      %s3934 = int_to_ptr.vmem [resolvable:$true] %s3933
      %3936 = dma.vmem_to_hbm [thread:$0]  %s3934, 32, %s10, [#allocation3]
    $region45: #{bert_difficulty_classifier.1} parent=1 // pred_fallthru
      _
    // Predicated region
    $region46: #{bert_difficulty_classifier.1} parent=1 // pred_check
      _
    $region47: #{bert_difficulty_classifier.1} parent=1 // pred_check_branch
      %3938 = sbr.rel (0) target = $region49
    $region48: #{bert_difficulty_classifier.1} parent=1 // pred_region
      %3939 = dma.done [#allocation3], 32
    $region49: #{bert_difficulty_classifier.1} parent=1 // pred_fallthru
      _
    %3940 = vsyncpa [#allocation3], 1

</llo_original>
